<compile_context>
chip_gen: v7x
topology: tpu7x:2x2x1
jax: 0.10.0
libtpu: 0.0.40
codegen_flags: <defaults>
</compile_context>

<pallas_src>
import jax
import jax.numpy as jnp
from jax.experimental import pallas as pl
from jax.experimental.pallas import tpu as pltpu

D_PAD = 128  # lane-dense padded feature width for every layer


def _sage3_kernel(a_ref, x_ref, ws_ref, wn_ref, b_ref, m_ref,
                  o_ref, h0_ref, h1_ref):
    """One (layer, row-block) grid step of the fused 3-layer SAGE forward."""
    l = pl.program_id(0)               # layer index   (outer, sequential)
    i = pl.program_id(1)               # row-block idx (inner, sequential)
    tm = o_ref.shape[0]
    row0 = pl.multiple_of(i * tm, tm)

    a_blk = a_ref[...]                 # (tm, N) bf16 row-normalized adjacency rows
    w_self = ws_ref[...]               # (D, D)  bf16 this layer's self weight
    w_neigh = wn_ref[...]              # (D, D)  bf16 this layer's neighbor weight
    bias = b_ref[...]                  # (1, D)  f32

    def layer_out(src_ref):
        """rows @ W_self + (A_rows @ H) @ W_neigh + b — all-bf16 MXU, f32 accumulate."""
        neigh = jnp.dot(a_blk, src_ref[...],                      # (tm, D) f32
                        preferred_element_type=jnp.float32)
        self_p = jnp.dot(src_ref[pl.ds(row0, tm), :], w_self,
                         preferred_element_type=jnp.float32)
        neigh_p = jnp.dot(neigh.astype(jnp.bfloat16), w_neigh,
                          preferred_element_type=jnp.float32)
        return self_p + neigh_p + bias                            # (tm, D) f32

    def relu_dropout(z):
        # ReLU + Dropout(0.5) in f32 on the accumulator (v5e has no bf16 VPU path).
        # Mask is pre-scaled by 1/keep, values {0, 2.0} (exact in bf16).
        return jnp.maximum(z, jnp.float32(0.0)) * m_ref[...].astype(jnp.float32)

    @pl.when(l == 0)
    def _():
        h = relu_dropout(layer_out(x_ref))
        h0_ref[pl.ds(row0, tm), :] = h.astype(jnp.bfloat16)
        o_ref[...] = h.astype(o_ref.dtype)   # deterministic placeholder; overwritten at l=2

    @pl.when(l == 1)
    def _():
        h = relu_dropout(layer_out(h0_ref))
        h1_ref[pl.ds(row0, tm), :] = h.astype(jnp.bfloat16)
        o_ref[...] = h.astype(o_ref.dtype)

    @pl.when(l == 2)
    def _():
        o_ref[...] = layer_out(h1_ref).astype(o_ref.dtype)


def sage_forward(a_bf16, x_bf16, ws_stack, wn_stack, b_stack, mask_stack, *, tm=None):
    """Fused, row-tiled 3-layer SAGE forward.

    a_bf16     : (N, N)      bf16 row-normalized adjacency ('mean' aggregation)
    x_bf16     : (N, D_PAD)  bf16 node features, zero-padded to 128 lanes
    ws_stack   : (3, D, D)   bf16 per-layer self weights  (zero-padded)
    wn_stack   : (3, D, D)   bf16 per-layer neighbor weights
    b_stack    : (3, 1, D)   f32  per-layer biases
    mask_stack : (3, N, D)   bf16 dropout masks, pre-scaled by 1/keep (layer-2 slice unused)
    Returns (N, D_PAD) f32; real outputs live in [:, :out_size].
    """
    n, d = x_bf16.shape
    assert a_bf16.shape == (n, n)
    if tm is None:
        # >=256-row tiles fill the v6e/v7x 256x256 MXU; also fine for v5e's 4x128x128.
        tm = 256 if n % 256 == 0 else n
    tm = min(tm, n)
    assert n % tm == 0, (n, tm)
    nb = n // tm

    return pl.pallas_call(
        _sage3_kernel,
        out_shape=jax.ShapeDtypeStruct((n, d), jnp.float32),
        grid_spec=pltpu.PrefetchScalarGridSpec(
            num_scalar_prefetch=0,
            grid=(3, nb),                                            # layers outer, rows inner
            in_specs=[
                pl.BlockSpec((tm, n), lambda l, i: (i, 0)),          # A row block (bf16)
                pl.BlockSpec((n, d), lambda l, i: (0, 0)),           # X, full-resident (bf16)
                pl.BlockSpec((None, d, d), lambda l, i: (l, 0, 0)),  # W_self[layer]  (bf16)
                pl.BlockSpec((None, d, d), lambda l, i: (l, 0, 0)),  # W_neigh[layer] (bf16)
                pl.BlockSpec((None, 1, d), lambda l, i: (l, 0, 0)),  # bias[layer]    (f32)
                pl.BlockSpec((None, tm, d), lambda l, i: (l, i, 0)), # dropout mask   (bf16)
            ],
            out_specs=pl.BlockSpec((tm, d), lambda l, i: (i, 0)),
            scratch_shapes=[
                pltpu.VMEM((n, d), jnp.bfloat16),                    # H after layer 0
                pltpu.VMEM((n, d), jnp.bfloat16),                    # H after layer 1
            ],
        ),
        compiler_params=pltpu.CompilerParams(
            # Both axes carry true dependences through the VMEM-resident H scratch
            # (layer l+1 reads H rows written by *all* row blocks of layer l).
            dimension_semantics=("arbitrary", "arbitrary"),
            vmem_limit_bytes=48 * 1024 * 1024,   # explicit scoped-VMEM budget (<= v7x 64 MiB)
        ),
    )(a_bf16, x_bf16, ws_stack, wn_stack, b_stack, mask_stack)


def init_sage_params(key, in_size, hid_size, out_size):
    dims = [(in_size, hid_size), (hid_size, hid_size), (hid_size, out_size)]
    params = []
    for d_in, d_out in dims:
        key, k1, k2 = jax.random.split(key, 3)
        scale = 1.0 / jnp.sqrt(jnp.float32(d_in))
        w_self = jax.random.normal(k1, (d_in, d_out), jnp.float32) * scale
        w_neigh = jax.random.normal(k2, (d_in, d_out), jnp.float32) * scale
        bias = jnp.zeros((d_out,), jnp.float32)
        params.append((w_self, w_neigh, bias))
    return params


def pack_params(params, d_pad=D_PAD):
    """Zero-pad each layer's (W_self, W_neigh, bias) to 128 lanes; weights -> bf16."""
    ws_l, wn_l, b_l = [], [], []
    for w_self, w_neigh, bias in params:
        d_in, d_out = w_self.shape
        ws = jnp.zeros((d_pad, d_pad), jnp.float32).at[:d_in, :d_out].set(w_self)
        wn = jnp.zeros((d_pad, d_pad), jnp.float32).at[:d_in, :d_out].set(w_neigh)
        bp = jnp.zeros((1, d_pad), jnp.float32).at[0, :d_out].set(bias)
        ws_l.append(ws)
        wn_l.append(wn)
        b_l.append(bp)
    return (jnp.stack(ws_l).astype(jnp.bfloat16),
            jnp.stack(wn_l).astype(jnp.bfloat16),
            jnp.stack(b_l))                                   # bias stays f32


def sage_reference(a_bf16, x_bf16, ws_stack, wn_stack, b_stack, mask_stack):
    """Pure-JAX reference with matching bf16 rounding (for validation only)."""
    h = x_bf16
    for l in range(3):
        neigh = jnp.dot(a_bf16, h, preferred_element_type=jnp.float32)
        out = (jnp.dot(h, ws_stack[l], preferred_element_type=jnp.float32)
               + jnp.dot(neigh.astype(jnp.bfloat16), wn_stack[l],
                         preferred_element_type=jnp.float32)
               + b_stack[l])
        if l != 2:
            out = jnp.maximum(out, 0.0) * mask_stack[l].astype(jnp.float32)
            h = out.astype(jnp.bfloat16)
        else:
            h = out
    return h


if __name__ == "__main__":
    N = 512            # graph nodes (multiple of the 256-row MXU tile)
    IN_SIZE = 16
    HID_SIZE = 32
    OUT_SIZE = 8
    DROPOUT_P = 0.5

    key = jax.random.PRNGKey(0)
    k_feat, k_adj, k_param, k_drop = jax.random.split(key, 4)

    # Node features, zero-padded to 128 lanes, shipped bf16 (halves input DMA).
    x = jax.random.normal(k_feat, (N, IN_SIZE), jnp.float32)
    x_pad = jnp.zeros((N, D_PAD), jnp.float32).at[:, :IN_SIZE].set(x).astype(jnp.bfloat16)

    # Deterministic random graph -> dense row-normalized adjacency ('mean' aggregation),
    # stored bf16 for the aggregation matmul (f32 accumulation in-kernel).
    adj = (jax.random.uniform(k_adj, (N, N)) < 0.2).astype(jnp.float32)
    deg = jnp.sum(adj, axis=-1, keepdims=True)
    a_norm = (adj / jnp.maximum(deg, 1.0)).astype(jnp.bfloat16)

    params = init_sage_params(k_param, IN_SIZE, HID_SIZE, OUT_SIZE)
    ws_stack, wn_stack, b_stack = pack_params(params)

    # Dropout(0.5) masks for layers 0 and 1 (training-mode semantics), pre-scaled by
    # 1/keep so the kernel only multiplies; values {0, 2.0} are exact in bf16.
    # Layer-2 slice is all-ones padding (the kernel never applies it).
    keep = 1.0 - DROPOUT_P
    dk0, dk1 = jax.random.split(k_drop, 2)
    m0 = jax.random.bernoulli(dk0, keep, (N, D_PAD)).astype(jnp.float32) / keep
    m1 = jax.random.bernoulli(dk1, keep, (N, D_PAD)).astype(jnp.float32) / keep
    m2 = jnp.ones((N, D_PAD), jnp.float32)
    mask_stack = jnp.stack([m0, m1, m2]).astype(jnp.bfloat16)

    out_pad = sage_forward(a_norm, x_pad, ws_stack, wn_stack, b_stack, mask_stack)
    out_pad = jax.block_until_ready(out_pad)
    out = out_pad[:, :OUT_SIZE]

    assert out.shape == (N, OUT_SIZE), out.shape
    assert out.dtype == jnp.float32
    assert bool(jnp.all(jnp.isfinite(out)))

    # Validate against a rounding-matched pure-JAX reference (loose tol: bf16 inputs).
    ref = sage_reference(a_norm, x_pad, ws_stack, wn_stack, b_stack, mask_stack)
    assert bool(jnp.allclose(out_pad, ref, rtol=5e-2, atol=5e-2)), "mismatch vs reference"
    # Padding lanes must remain exactly zero through all three layers.
    assert bool(jnp.all(out_pad[:, OUT_SIZE:] == 0.0))

    print("KERNEL_OK")
</pallas_src>

<mosaic_0001>
module attributes {stable_mosaic.version = 11 : i64} {
  func.func @_sage3_kernel(%arg0: i32, %arg1: i32, %arg2: memref<256x512xbf16, #tpu.memory_space<vmem>>, %arg3: memref<512x128xbf16, #tpu.memory_space<vmem>>, %arg4: memref<1x128x128xbf16, #tpu.memory_space<vmem>>, %arg5: memref<1x128x128xbf16, #tpu.memory_space<vmem>>, %arg6: memref<1x1x128xf32, #tpu.memory_space<vmem>>, %arg7: memref<1x256x128xbf16, #tpu.memory_space<vmem>>, %arg8: memref<256x128xf32, #tpu.memory_space<vmem>>, %arg9: memref<512x128xbf16, #tpu.memory_space<vmem>>, %arg10: memref<512x128xbf16, #tpu.memory_space<vmem>>) attributes {dimension_semantics = [#tpu.dimension_semantics<arbitrary>, #tpu.dimension_semantics<arbitrary>], iteration_bounds = array<i64: 3, 2>, scalar_prefetch = 0 : i64, scratch_operands = 2 : i64, tpu.core_type = #tpu.core_type<tc>, window_params = [{transform_indices = @transform_0, window_bounds = array<i64: 256, 512>}, {pipeline_mode = #tpu.pipeline_mode<synchronous>, transform_indices = @transform_1, window_bounds = array<i64: 512, 128>}, {transform_indices = @transform_2, window_bounds = array<i64: 1, 128, 128>}, {transform_indices = @transform_3, window_bounds = array<i64: 1, 128, 128>}, {transform_indices = @transform_4, window_bounds = array<i64: 1, 1, 128>}, {transform_indices = @transform_5, window_bounds = array<i64: 1, 256, 128>}, {transform_indices = @transform_6, window_bounds = array<i64: 256, 128>}]} {
    %c256_i32 = arith.constant 256 : i32
    %0 = arith.muli %arg1, %c256_i32 : i32
    %1 = tpu.assume_multiple %0, 256 : i32
    %c0 = arith.constant 0 : index
    %c0_0 = arith.constant 0 : index
    %2 = vector.load %arg2[%c0, %c0_0] : memref<256x512xbf16, #tpu.memory_space<vmem>>, vector<256x512xbf16>
    %c0_1 = arith.constant 0 : index
    %c0_2 = arith.constant 0 : index
    %c0_3 = arith.constant 0 : index
    %3 = vector.load %arg4[%c0_1, %c0_2, %c0_3] : memref<1x128x128xbf16, #tpu.memory_space<vmem>>, vector<1x128x128xbf16>
    %4 = vector.shape_cast %3 : vector<1x128x128xbf16> to vector<128x128xbf16>
    %c0_4 = arith.constant 0 : index
    %c0_5 = arith.constant 0 : index
    %c0_6 = arith.constant 0 : index
    %5 = vector.load %arg5[%c0_4, %c0_5, %c0_6] : memref<1x128x128xbf16, #tpu.memory_space<vmem>>, vector<1x128x128xbf16>
    %6 = vector.shape_cast %5 : vector<1x128x128xbf16> to vector<128x128xbf16>
    %c0_7 = arith.constant 0 : index
    %c0_8 = arith.constant 0 : index
    %c0_9 = arith.constant 0 : index
    %7 = vector.load %arg6[%c0_7, %c0_8, %c0_9] : memref<1x1x128xf32, #tpu.memory_space<vmem>>, vector<1x1x128xf32>
    %8 = vector.shape_cast %7 : vector<1x1x128xf32> to vector<1x128xf32>
    %c0_i32 = arith.constant 0 : i32
    %9 = arith.cmpi eq, %arg0, %c0_i32 : i32
    %10 = arith.extui %9 : i1 to i32
    %c0_i32_10 = arith.constant 0 : i32
    %11 = arith.cmpi ne, %10, %c0_i32_10 : i32
    scf.if %11 {
      %c0_13 = arith.constant 0 : index
      %c0_14 = arith.constant 0 : index
      %18 = vector.load %arg3[%c0_13, %c0_14] : memref<512x128xbf16, #tpu.memory_space<vmem>>, vector<512x128xbf16>
      %cst = arith.constant dense<0.000000e+00> : vector<256x128xf32>
      %19 = tpu.matmul %2, %18, %cst {dimension_numbers = #tpu.dot_dimension_numbers<[1], [0], [0], [1], [0, 0, 1, 1], [], []>} : vector<256x512xbf16>, vector<512x128xbf16>, vector<256x128xf32> -> vector<256x128xf32>
      %20 = arith.index_cast %1 : i32 to index
      %c0_15 = arith.constant 0 : index
      %21 = vector.load %arg3[%20, %c0_15] : memref<512x128xbf16, #tpu.memory_space<vmem>>, vector<256x128xbf16>
      %cst_16 = arith.constant dense<0.000000e+00> : vector<256x128xf32>
      %22 = tpu.matmul %21, %4, %cst_16 {dimension_numbers = #tpu.dot_dimension_numbers<[1], [0], [0], [1], [0, 0, 1, 1], [], []>} : vector<256x128xbf16>, vector<128x128xbf16>, vector<256x128xf32> -> vector<256x128xf32>
      %23 = arith.truncf %19 : vector<256x128xf32> to vector<256x128xbf16>
      %cst_17 = arith.constant dense<0.000000e+00> : vector<256x128xf32>
      %24 = tpu.matmul %23, %6, %cst_17 {dimension_numbers = #tpu.dot_dimension_numbers<[1], [0], [0], [1], [0, 0, 1, 1], [], []>} : vector<256x128xbf16>, vector<128x128xbf16>, vector<256x128xf32> -> vector<256x128xf32>
      %25 = arith.addf %22, %24 : vector<256x128xf32>
      %26 = vector.broadcast %8 : vector<1x128xf32> to vector<256x128xf32>
      %27 = arith.addf %25, %26 : vector<256x128xf32>
      %cst_18 = arith.constant 0.000000e+00 : f32
      %28 = vector.broadcast %cst_18 : f32 to vector<256x128xf32>
      %29 = arith.maximumf %27, %28 : vector<256x128xf32>
      %c0_19 = arith.constant 0 : index
      %c0_20 = arith.constant 0 : index
      %c0_21 = arith.constant 0 : index
      %30 = vector.load %arg7[%c0_19, %c0_20, %c0_21] : memref<1x256x128xbf16, #tpu.memory_space<vmem>>, vector<1x256x128xbf16>
      %31 = vector.shape_cast %30 : vector<1x256x128xbf16> to vector<256x128xbf16>
      %32 = arith.extf %31 : vector<256x128xbf16> to vector<256x128xf32>
      %33 = arith.mulf %29, %32 : vector<256x128xf32>
      %34 = arith.truncf %33 : vector<256x128xf32> to vector<256x128xbf16>
      %35 = arith.index_cast %1 : i32 to index
      %c0_22 = arith.constant 0 : index
      %36 = vector.load %arg9[%35, %c0_22] : memref<512x128xbf16, #tpu.memory_space<vmem>>, vector<256x128xbf16>
      tpu.vector_store %arg9[%35, %c0_22], %34 {strides = array<i32>} : memref<512x128xbf16, #tpu.memory_space<vmem>>, vector<256x128xbf16>,
      %c0_23 = arith.constant 0 : index
      %c0_24 = arith.constant 0 : index
      %37 = vector.load %arg8[%c0_23, %c0_24] : memref<256x128xf32, #tpu.memory_space<vmem>>, vector<256x128xf32>
      tpu.vector_store %arg8[%c0_23, %c0_24], %33 {strides = array<i32>} : memref<256x128xf32, #tpu.memory_space<vmem>>, vector<256x128xf32>,
    } else {
    }
    %c1_i32 = arith.constant 1 : i32
    %12 = arith.cmpi eq, %arg0, %c1_i32 : i32
    %13 = arith.extui %12 : i1 to i32
    %c0_i32_11 = arith.constant 0 : i32
    %14 = arith.cmpi ne, %13, %c0_i32_11 : i32
    scf.if %14 {
      %c0_13 = arith.constant 0 : index
      %c0_14 = arith.constant 0 : index
      %18 = vector.load %arg9[%c0_13, %c0_14] : memref<512x128xbf16, #tpu.memory_space<vmem>>, vector<512x128xbf16>
      %cst = arith.constant dense<0.000000e+00> : vector<256x128xf32>
      %19 = tpu.matmul %2, %18, %cst {dimension_numbers = #tpu.dot_dimension_numbers<[1], [0], [0], [1], [0, 0, 1, 1], [], []>} : vector<256x512xbf16>, vector<512x128xbf16>, vector<256x128xf32> -> vector<256x128xf32>
      %20 = arith.index_cast %1 : i32 to index
      %c0_15 = arith.constant 0 : index
      %21 = vector.load %arg9[%20, %c0_15] : memref<512x128xbf16, #tpu.memory_space<vmem>>, vector<256x128xbf16>
      %cst_16 = arith.constant dense<0.000000e+00> : vector<256x128xf32>
      %22 = tpu.matmul %21, %4, %cst_16 {dimension_numbers = #tpu.dot_dimension_numbers<[1], [0], [0], [1], [0, 0, 1, 1], [], []>} : vector<256x128xbf16>, vector<128x128xbf16>, vector<256x128xf32> -> vector<256x128xf32>
      %23 = arith.truncf %19 : vector<256x128xf32> to vector<256x128xbf16>
      %cst_17 = arith.constant dense<0.000000e+00> : vector<256x128xf32>
      %24 = tpu.matmul %23, %6, %cst_17 {dimension_numbers = #tpu.dot_dimension_numbers<[1], [0], [0], [1], [0, 0, 1, 1], [], []>} : vector<256x128xbf16>, vector<128x128xbf16>, vector<256x128xf32> -> vector<256x128xf32>
      %25 = arith.addf %22, %24 : vector<256x128xf32>
      %26 = vector.broadcast %8 : vector<1x128xf32> to vector<256x128xf32>
      %27 = arith.addf %25, %26 : vector<256x128xf32>
      %cst_18 = arith.constant 0.000000e+00 : f32
      %28 = vector.broadcast %cst_18 : f32 to vector<256x128xf32>
      %29 = arith.maximumf %27, %28 : vector<256x128xf32>
      %c0_19 = arith.constant 0 : index
      %c0_20 = arith.constant 0 : index
      %c0_21 = arith.constant 0 : index
      %30 = vector.load %arg7[%c0_19, %c0_20, %c0_21] : memref<1x256x128xbf16, #tpu.memory_space<vmem>>, vector<1x256x128xbf16>
      %31 = vector.shape_cast %30 : vector<1x256x128xbf16> to vector<256x128xbf16>
      %32 = arith.extf %31 : vector<256x128xbf16> to vector<256x128xf32>
      %33 = arith.mulf %29, %32 : vector<256x128xf32>
      %34 = arith.truncf %33 : vector<256x128xf32> to vector<256x128xbf16>
      %35 = arith.index_cast %1 : i32 to index
      %c0_22 = arith.constant 0 : index
      %36 = vector.load %arg10[%35, %c0_22] : memref<512x128xbf16, #tpu.memory_space<vmem>>, vector<256x128xbf16>
      tpu.vector_store %arg10[%35, %c0_22], %34 {strides = array<i32>} : memref<512x128xbf16, #tpu.memory_space<vmem>>, vector<256x128xbf16>,
      %c0_23 = arith.constant 0 : index
      %c0_24 = arith.constant 0 : index
      %37 = vector.load %arg8[%c0_23, %c0_24] : memref<256x128xf32, #tpu.memory_space<vmem>>, vector<256x128xf32>
      tpu.vector_store %arg8[%c0_23, %c0_24], %33 {strides = array<i32>} : memref<256x128xf32, #tpu.memory_space<vmem>>, vector<256x128xf32>,
    } else {
    }
    %c2_i32 = arith.constant 2 : i32
    %15 = arith.cmpi eq, %arg0, %c2_i32 : i32
    %16 = arith.extui %15 : i1 to i32
    %c0_i32_12 = arith.constant 0 : i32
    %17 = arith.cmpi ne, %16, %c0_i32_12 : i32
    scf.if %17 {
      %c0_13 = arith.constant 0 : index
      %c0_14 = arith.constant 0 : index
      %18 = vector.load %arg10[%c0_13, %c0_14] : memref<512x128xbf16, #tpu.memory_space<vmem>>, vector<512x128xbf16>
      %cst = arith.constant dense<0.000000e+00> : vector<256x128xf32>
      %19 = tpu.matmul %2, %18, %cst {dimension_numbers = #tpu.dot_dimension_numbers<[1], [0], [0], [1], [0, 0, 1, 1], [], []>} : vector<256x512xbf16>, vector<512x128xbf16>, vector<256x128xf32> -> vector<256x128xf32>
      %20 = arith.index_cast %1 : i32 to index
      %c0_15 = arith.constant 0 : index
      %21 = vector.load %arg10[%20, %c0_15] : memref<512x128xbf16, #tpu.memory_space<vmem>>, vector<256x128xbf16>
      %cst_16 = arith.constant dense<0.000000e+00> : vector<256x128xf32>
      %22 = tpu.matmul %21, %4, %cst_16 {dimension_numbers = #tpu.dot_dimension_numbers<[1], [0], [0], [1], [0, 0, 1, 1], [], []>} : vector<256x128xbf16>, vector<128x128xbf16>, vector<256x128xf32> -> vector<256x128xf32>
      %23 = arith.truncf %19 : vector<256x128xf32> to vector<256x128xbf16>
      %cst_17 = arith.constant dense<0.000000e+00> : vector<256x128xf32>
      %24 = tpu.matmul %23, %6, %cst_17 {dimension_numbers = #tpu.dot_dimension_numbers<[1], [0], [0], [1], [0, 0, 1, 1], [], []>} : vector<256x128xbf16>, vector<128x128xbf16>, vector<256x128xf32> -> vector<256x128xf32>
      %25 = arith.addf %22, %24 : vector<256x128xf32>
      %26 = vector.broadcast %8 : vector<1x128xf32> to vector<256x128xf32>
      %27 = arith.addf %25, %26 : vector<256x128xf32>
      %c0_18 = arith.constant 0 : index
      %c0_19 = arith.constant 0 : index
      %28 = vector.load %arg8[%c0_18, %c0_19] : memref<256x128xf32, #tpu.memory_space<vmem>>, vector<256x128xf32>
      tpu.vector_store %arg8[%c0_18, %c0_19], %27 {strides = array<i32>} : memref<256x128xf32, #tpu.memory_space<vmem>>, vector<256x128xf32>,
    } else {
    }
    return
  }
  func.func @transform_0(%arg0: i32, %arg1: i32) -> (i32, i32) {
    %c0_i32 = arith.constant 0 : i32
    %c0_i32_0 = arith.constant 0 : i32
    return %arg1, %c0_i32 : i32, i32
  }
  func.func @transform_1(%arg0: i32, %arg1: i32) -> (i32, i32) {
    %c0_i32 = arith.constant 0 : i32
    %c0_i32_0 = arith.constant 0 : i32
    %c0_i32_1 = arith.constant 0 : i32
    return %c0_i32, %c0_i32_0 : i32, i32
  }
  func.func @transform_2(%arg0: i32, %arg1: i32) -> (i32, i32, i32) {
    %c0_i32 = arith.constant 0 : i32
    %c0_i32_0 = arith.constant 0 : i32
    %c0_i32_1 = arith.constant 0 : i32
    return %arg0, %c0_i32, %c0_i32_0 : i32, i32, i32
  }
  func.func @transform_3(%arg0: i32, %arg1: i32) -> (i32, i32, i32) {
    %c0_i32 = arith.constant 0 : i32
    %c0_i32_0 = arith.constant 0 : i32
    %c0_i32_1 = arith.constant 0 : i32
    return %arg0, %c0_i32, %c0_i32_0 : i32, i32, i32
  }
  func.func @transform_4(%arg0: i32, %arg1: i32) -> (i32, i32, i32) {
    %c0_i32 = arith.constant 0 : i32
    %c0_i32_0 = arith.constant 0 : i32
    %c0_i32_1 = arith.constant 0 : i32
    return %arg0, %c0_i32, %c0_i32_0 : i32, i32, i32
  }
  func.func @transform_5(%arg0: i32, %arg1: i32) -> (i32, i32, i32) {
    %c0_i32 = arith.constant 0 : i32
    %c0_i32_0 = arith.constant 0 : i32
    return %arg0, %arg1, %c0_i32 : i32, i32, i32
  }
  func.func @transform_6(%arg0: i32, %arg1: i32) -> (i32, i32) {
    %c0_i32 = arith.constant 0 : i32
    %c0_i32_0 = arith.constant 0 : i32
    return %arg1, %c0_i32 : i32, i32
  }
}

</mosaic_0001>

<llo_original>
// kernel: tpu_custom_call.1
$region0: #{tpu_custom_call.1}
  #allocation0 [shape = 'u32[]', space=smem, size = 0x4, offset = 0x4, fixed_abs, tag = 'smem constant byte address 0x4 - core index']
  #allocation1 [shape = 'u32[144,128]{1,0:T(1,128)}', space=vmem, size = 0x12000, scoped, tag = 'internal scratch']
  #allocation2 [shape = 'bf16[512,128]{1,0:T(16,128)(2,1)}', space=vmem, size = 0x20000, scoped, tag = 'scratch operand']
  #allocation3 [shape = 'bf16[512,128]{1,0:T(16,128)(2,1)}', space=vmem, size = 0x20000, scoped, tag = 'scratch operand']
  %s0 = inlined_call_operand.hbm [shape: bf16[512,512], index: 0, kind: input, shape index: {}]
  %s1 = inlined_call_operand.hbm [shape: bf16[512,128], index: 1, kind: input, shape index: {}]
  %s2 = inlined_call_operand.hbm [shape: bf16[3,128,128], index: 2, kind: input, shape index: {}]
  %s3 = inlined_call_operand.hbm [shape: bf16[3,128,128], index: 3, kind: input, shape index: {}]
  %s4 = inlined_call_operand.vmem [shape: f32[3,1,128], index: 4, kind: input, shape index: {}]
  %s5 = inlined_call_operand.hbm [shape: bf16[3,512,128], index: 5, kind: input, shape index: {}]
  %s6 = inlined_call_operand.hbm [shape: f32[512,128], index: 6, kind: output, shape index: {}]
  %s7 = sld [smem:[#allocation0]]
  $region89: #{tpu_custom_call.1} parent=0
    _
  %s9 = ssub.s32 1, %s7
  %s10 = scalar_select 0, %s9, %s7
  $region1: #{tpu_custom_call.1} parent=0
    #allocation4 [shape = 'u8[524288]{0}', space=vmem, size = 0x80000, scoped, tag = 'input window, operand 0']
    #allocation5 [shape = 's32[2]{0}', space=sflag, size = 0x8, scoped, tag = 'scoped memory for tpu_custom_call.1']
    #allocation6 [shape = 's32[2]{0}', space=sflag, size = 0x8, scoped, tag = 'scoped memory for tpu_custom_call.1']
    #allocation7 [shape = 'u8[131072]{0}', space=vmem, size = 0x20000, scoped, tag = 'input window, operand 1, single buffered']
    #allocation8 [shape = 's32[1]{0}', space=sflag, size = 0x4, scoped, tag = 'scoped memory for tpu_custom_call.1']
    #allocation9 [shape = 'u8[65536]{0}', space=vmem, size = 0x10000, scoped, tag = 'input window, operand 2']
    #allocation10 [shape = 'u8[65536]{0}', space=vmem, size = 0x10000, scoped, tag = 'input window, operand 3']
    #allocation11 [shape = 'u8[131072]{0}', space=vmem, size = 0x20000, scoped, tag = 'input window, operand 5']
    #allocation12 [shape = 'u8[262144]{0}', space=vmem, size = 0x40000, scoped, tag = 'output window, operand 0']
    %11 = vsyncpa [#allocation5], 0
    %s12 = scalar_lea.sflag [#allocation5], 1
    %13 = vsyncpa %s12, 0
    %14 = vsyncpa [#allocation8], 0
    %15 = vsyncpa [#allocation6], 0
    %s16 = scalar_lea.sflag [#allocation6], 1
    %17 = vsyncpa %s16, 0
    loop: start=0, step=1, limit=8
    $region2: #{tpu_custom_call.1} parent=1 // loop_pre_header
      _
    $region3: #{tpu_custom_call.1} parent=1 // loop_header
      %s19 = sphi 0, %s23
      %p20 = scmp.ge.s32.totalorder %s19, 8
      %s26 = sphi 0, %s38
      %s27 = sphi 0, %s34
      %s28 = sphi 0, %s26
      %s29 = sphi 0, %s27
      %s30 = sphi 0, %s28
      %s31 = sphi 0, %s29
      %s41 = sphi 0, %s43
      %s44 = sphi 0, %s41
      %s45 = sphi 0, %s44
      %s61 = sphi 0, %s45
      %s65 = sphi 0, %s65
      %s67 = sphi 0, %s65
      %s68 = sphi 0, %s67
      %s82 = sphi 0, %s68
      %s88 = sphi 0, %s90
      %s91 = sphi 0, %s88
      %s92 = sphi 0, %s91
      %s108 = sphi 0, %s92
      %s114 = sphi 0, %s116
      %s117 = sphi 0, %s114
      %s118 = sphi 0, %s117
      %s134 = sphi 0, %s118
      %s140 = sphi 0, %s142
      %s143 = sphi 0, %s140
      %s144 = sphi 0, %s143
      %s160 = sphi 0, %s144
      %s168 = sphi 0, %s170
      %s171 = sphi 0, %s168
      %s172 = sphi 0, %s171
      %s188 = sphi 0, %s172
      %s194 = sphi 0, %s196
      %s197 = sphi 0, %s194
      %s198 = sphi 0, %s197
      %s214 = sphi 0, %s198
    $region4: #{tpu_custom_call.1} parent=1 // loop_header_branch
      %22 = sbr.rel (%p20) target = $region8
    $region5: #{tpu_custom_call.1} parent=1 // loop_body
      %s24 = ssub.s32 %s19, 1
      %s25 = ssub.s32 %s19, 2
      %s32 = sadd.s32 1, %s27
      %p33 = scmp.ge.s32.totalorder %s32, 2
      %s34 = scalar_select %p33, 0, %s32
      %s35 = sadd.s32 1, %s26
      %s36 = scalar_select %p33, %s35, %s26
      %p37 = scmp.ge.s32.totalorder %s36, 3
      %s38 = scalar_select %p37, 0, %s36
      %s39 = ssub.s32 %s27, %s34
      %p40 = scmp.eq.s32.totalorder %s39, 0
      %s42 = sadd.s32 %s41, 1
      %s43 = scalar_select %p40, %s41, %s42
      %p46 = pneg %p40
      %p47 = scmp.eq.s32.totalorder %s19, 5
      %p48 = por %p46, %p47
      %p49 = scmp.ne.s32.totalorder %s41, %s44
      %p50 = scmp.eq.s32.totalorder %s19, 0
      %p51 = por %p49, %p50
      %p52 = scmp.ne.s32.totalorder %s41, %s44
      %p53 = scmp.eq.s32.totalorder %s24, 5
      %p54 = por %p52, %p53
      %p55 = scmp.ne.s32.totalorder %s44, %s45
      %p56 = scmp.eq.s32.totalorder %s24, 0
      %p57 = por %p55, %p56
      %p58 = scmp.ne.s32.totalorder %s44, %s45
      %p59 = scmp.eq.s32.totalorder %s25, 5
      %p60 = por %p58, %p59
      %p62 = scmp.ne.s32.totalorder %s45, %s61
      %p63 = scmp.eq.s32.totalorder %s25, 0
      %p64 = por %p62, %p63
      %s66 = sadd.s32 %s65, 1
      %p69 = scmp.eq.s32.totalorder %s19, 5
      %p70 = scmp.ne.s32.totalorder %s65, %s67
      %p71 = scmp.eq.s32.totalorder %s19, 0
      %p72 = por %p70, %p71
      %p73 = scmp.ne.s32.totalorder %s65, %s67
      %p74 = scmp.eq.s32.totalorder %s24, 5
      %p75 = por %p73, %p74
      %p76 = scmp.ne.s32.totalorder %s67, %s68
      %p77 = scmp.eq.s32.totalorder %s24, 0
      %p78 = por %p76, %p77
      %p79 = scmp.ne.s32.totalorder %s67, %s68
      %p80 = scmp.eq.s32.totalorder %s25, 5
      %p81 = por %p79, %p80
      %p83 = scmp.ne.s32.totalorder %s68, %s82
      %p84 = scmp.eq.s32.totalorder %s25, 0
      %p85 = por %p83, %p84
      %s86 = ssub.s32 %s26, %s38
      %p87 = scmp.eq.s32.totalorder %s86, 0
      %s89 = sadd.s32 %s88, 1
      %s90 = scalar_select %p87, %s88, %s89
      %p93 = pneg %p87
      %p94 = scmp.eq.s32.totalorder %s19, 5
      %p95 = por %p93, %p94
      %p96 = scmp.ne.s32.totalorder %s88, %s91
      %p97 = scmp.eq.s32.totalorder %s19, 0
      %p98 = por %p96, %p97
      %p99 = scmp.ne.s32.totalorder %s88, %s91
      %p100 = scmp.eq.s32.totalorder %s24, 5
      %p101 = por %p99, %p100
      %p102 = scmp.ne.s32.totalorder %s91, %s92
      %p103 = scmp.eq.s32.totalorder %s24, 0
      %p104 = por %p102, %p103
      %p105 = scmp.ne.s32.totalorder %s91, %s92
      %p106 = scmp.eq.s32.totalorder %s25, 5
      %p107 = por %p105, %p106
      %p109 = scmp.ne.s32.totalorder %s92, %s108
      %p110 = scmp.eq.s32.totalorder %s25, 0
      %p111 = por %p109, %p110
      %s112 = ssub.s32 %s26, %s38
      %p113 = scmp.eq.s32.totalorder %s112, 0
      %s115 = sadd.s32 %s114, 1
      %s116 = scalar_select %p113, %s114, %s115
      %p119 = pneg %p113
      %p120 = scmp.eq.s32.totalorder %s19, 5
      %p121 = por %p119, %p120
      %p122 = scmp.ne.s32.totalorder %s114, %s117
      %p123 = scmp.eq.s32.totalorder %s19, 0
      %p124 = por %p122, %p123
      %p125 = scmp.ne.s32.totalorder %s114, %s117
      %p126 = scmp.eq.s32.totalorder %s24, 5
      %p127 = por %p125, %p126
      %p128 = scmp.ne.s32.totalorder %s117, %s118
      %p129 = scmp.eq.s32.totalorder %s24, 0
      %p130 = por %p128, %p129
      %p131 = scmp.ne.s32.totalorder %s117, %s118
      %p132 = scmp.eq.s32.totalorder %s25, 5
      %p133 = por %p131, %p132
      %p135 = scmp.ne.s32.totalorder %s118, %s134
      %p136 = scmp.eq.s32.totalorder %s25, 0
      %p137 = por %p135, %p136
      %s138 = ssub.s32 %s26, %s38
      %p139 = scmp.eq.s32.totalorder %s138, 0
      %s141 = sadd.s32 %s140, 1
      %s142 = scalar_select %p139, %s140, %s141
      %p145 = pneg %p139
      %p146 = scmp.eq.s32.totalorder %s19, 5
      %p147 = por %p145, %p146
      %p148 = scmp.ne.s32.totalorder %s140, %s143
      %p149 = scmp.eq.s32.totalorder %s19, 0
      %p150 = por %p148, %p149
      %p151 = scmp.ne.s32.totalorder %s140, %s143
      %p152 = scmp.eq.s32.totalorder %s24, 5
      %p153 = por %p151, %p152
      %p154 = scmp.ne.s32.totalorder %s143, %s144
      %p155 = scmp.eq.s32.totalorder %s24, 0
      %p156 = por %p154, %p155
      %p157 = scmp.ne.s32.totalorder %s143, %s144
      %p158 = scmp.eq.s32.totalorder %s25, 5
      %p159 = por %p157, %p158
      %p161 = scmp.ne.s32.totalorder %s144, %s160
      %p162 = scmp.eq.s32.totalorder %s25, 0
      %p163 = por %p161, %p162
      %s164 = ssub.s32 %s26, %s38
      %s165 = ssub.s32 %s27, %s34
      %s166 = sor.u32 %s164, %s165
      %p167 = scmp.eq.s32.totalorder %s166, 0
      %s169 = sadd.s32 %s168, 1
      %s170 = scalar_select %p167, %s168, %s169
      %p173 = pneg %p167
      %p174 = scmp.eq.s32.totalorder %s19, 5
      %p175 = por %p173, %p174
      %p176 = scmp.ne.s32.totalorder %s168, %s171
      %p177 = scmp.eq.s32.totalorder %s19, 0
      %p178 = por %p176, %p177
      %p179 = scmp.ne.s32.totalorder %s168, %s171
      %p180 = scmp.eq.s32.totalorder %s24, 5
      %p181 = por %p179, %p180
      %p182 = scmp.ne.s32.totalorder %s171, %s172
      %p183 = scmp.eq.s32.totalorder %s24, 0
      %p184 = por %p182, %p183
      %p185 = scmp.ne.s32.totalorder %s171, %s172
      %p186 = scmp.eq.s32.totalorder %s25, 5
      %p187 = por %p185, %p186
      %p189 = scmp.ne.s32.totalorder %s172, %s188
      %p190 = scmp.eq.s32.totalorder %s25, 0
      %p191 = por %p189, %p190
      %s192 = ssub.s32 %s27, %s34
      %p193 = scmp.eq.s32.totalorder %s192, 0
      %s195 = sadd.s32 %s194, 1
      %s196 = scalar_select %p193, %s194, %s195
      %p199 = pneg %p193
      %p200 = scmp.eq.s32.totalorder %s19, 5
      %p201 = por %p199, %p200
      %p202 = scmp.ne.s32.totalorder %s194, %s197
      %p203 = scmp.eq.s32.totalorder %s19, 0
      %p204 = por %p202, %p203
      %p205 = scmp.ne.s32.totalorder %s194, %s197
      %p206 = scmp.eq.s32.totalorder %s24, 5
      %p207 = por %p205, %p206
      %p208 = scmp.ne.s32.totalorder %s197, %s198
      %p209 = scmp.eq.s32.totalorder %s24, 0
      %p210 = por %p208, %p209
      %p211 = scmp.ne.s32.totalorder %s197, %s198
      %p212 = scmp.eq.s32.totalorder %s25, 5
      %p213 = por %p211, %p212
      %p215 = scmp.ne.s32.totalorder %s198, %s214
      %p216 = scmp.eq.s32.totalorder %s25, 0
      %p217 = por %p215, %p216
      %p218 = scmp.le.s32.totalorder 1, %s19
      %p219 = scmp.lt.s32.totalorder %s19, 7
      %p220 = pnand %p218, %p219
      %p221 = pneg %p220
      // Predicated region
      $region9: #{tpu_custom_call.1} parent=5 // pred_check
        _
      $region10: #{tpu_custom_call.1} parent=5 // pred_check_branch
        %223 = sbr.rel (%p220) target = $region12
      $region11: #{tpu_custom_call.1} parent=5 // pred_region
        %s224 = ssub.s32 %s19, 1
        // Predicated region
        $region13: #{tpu_custom_call.1} parent=11 // pred_check
          %p225 = pneg %p78
        $region14: #{tpu_custom_call.1} parent=11 // pred_check_branch
          %227 = sbr.rel (%p225) target = $region16
        $region15: #{tpu_custom_call.1} parent=11 // pred_region
          %s229 = ssub.s32 4096, 4096
          %230 = vsyncadd [#allocation8], %s229
          %s231 = sshll.u32 [#allocation7], 4
          %s232 = int_to_ptr.vmem [resolvable:$true] %s231
          %237 = dma.hbm_to_vmem [thread:$0]  %s1, 4096, %s232, [#allocation8], 64, 64, 4
        $region16: #{tpu_custom_call.1} parent=11 // pred_fallthru
          _
      $region12: #{tpu_custom_call.1} parent=5 // pred_fallthru
        _
      %p238 = scmp.lt.s32.totalorder %s19, 6
      // Predicated region
      $region17: #{tpu_custom_call.1} parent=5 // pred_check
        %p239 = pneg %p238
      $region18: #{tpu_custom_call.1} parent=5 // pred_check_branch
        %241 = sbr.rel (%p239) target = $region20
      $region19: #{tpu_custom_call.1} parent=5 // pred_region
        // Predicated region
        $region21: #{tpu_custom_call.1} parent=19 // pred_check
          %p242 = pneg %p51
        $region22: #{tpu_custom_call.1} parent=19 // pred_check_branch
          %244 = sbr.rel (%p242) target = $region24
        $region23: #{tpu_custom_call.1} parent=19 // pred_region
          %s245 = sand.u32 %s19, 1
          %s246 = scalar_lea.sflag [#allocation5], %s245
          %s247 = sand.u32 %s41, 1
          %s248 = smul.addr %s247, 512
          %s249 = scalar_lea.vmem [#allocation4], %s248
          %s250 = smul.u32 32, %s27
          %s252 = ssub.s32 8192, 8192
          %253 = vsyncadd %s246, %s252
          %s254 = smul.addr %s250, 4
          %s255 = smul.addr %s254, 64
          %s256 = scalar_lea.hbm %s0, %s255
          %s257 = sshll.u32 %s249, 4
          %s258 = int_to_ptr.vmem [resolvable:$true] %s257
          %263 = dma.hbm_to_vmem [thread:$0]  %s256, 8192, %s258, %s246, 256, 256, 16
        $region24: #{tpu_custom_call.1} parent=19 // pred_fallthru
          _
        // Predicated region
        $region25: #{tpu_custom_call.1} parent=19 // pred_check
          %p264 = pneg %p98
        $region26: #{tpu_custom_call.1} parent=19 // pred_check_branch
          %266 = sbr.rel (%p264) target = $region28
        $region27: #{tpu_custom_call.1} parent=19 // pred_region
          %s267 = sand.u32 %s19, 1
          %s268 = scalar_lea.sflag [#allocation5], %s267
          %s269 = sand.u32 %s88, 1
          %s270 = smul.addr %s269, 64
          %s271 = scalar_lea.vmem [#allocation9], %s270
          %s273 = ssub.s32 1024, 1024
          %274 = vsyncadd %s268, %s273
          %s275 = smul.addr %s26, 16
          %s276 = smul.addr %s275, 64
          %s277 = scalar_lea.hbm %s2, %s276
          %s278 = sshll.u32 %s271, 4
          %s279 = int_to_ptr.vmem [resolvable:$true] %s278
          %284 = dma.hbm_to_vmem [thread:$0]  %s277, 1024, %s279, %s268, 64, 64, 4
        $region28: #{tpu_custom_call.1} parent=19 // pred_fallthru
          _
        // Predicated region
        $region29: #{tpu_custom_call.1} parent=19 // pred_check
          %p285 = pneg %p124
        $region30: #{tpu_custom_call.1} parent=19 // pred_check_branch
          %287 = sbr.rel (%p285) target = $region32
        $region31: #{tpu_custom_call.1} parent=19 // pred_region
          %s288 = sand.u32 %s19, 1
          %s289 = scalar_lea.sflag [#allocation5], %s288
          %s290 = sand.u32 %s114, 1
          %s291 = smul.addr %s290, 64
          %s292 = scalar_lea.vmem [#allocation10], %s291
          %s294 = ssub.s32 1024, 1024
          %295 = vsyncadd %s289, %s294
          %s296 = smul.addr %s26, 16
          %s297 = smul.addr %s296, 64
          %s298 = scalar_lea.hbm %s3, %s297
          %s299 = sshll.u32 %s292, 4
          %s300 = int_to_ptr.vmem [resolvable:$true] %s299
          %305 = dma.hbm_to_vmem [thread:$0]  %s298, 1024, %s300, %s289, 64, 64, 4
        $region32: #{tpu_custom_call.1} parent=19 // pred_fallthru
          _
        // Predicated region
        $region33: #{tpu_custom_call.1} parent=19 // pred_check
          %p306 = pneg %p150
        $region34: #{tpu_custom_call.1} parent=19 // pred_check_branch
          %308 = sbr.rel (%p306) target = $region36
        $region35: #{tpu_custom_call.1} parent=19 // pred_region
          %p309 = scmp.lt.s32.totalorder %s26, 2
          %s310 = scalar_select %p309, %s26, 2
          %s311 = scalar_lea.vmem %s4, %s310
        $region36: #{tpu_custom_call.1} parent=19 // pred_fallthru
          _
        // Predicated region
        $region37: #{tpu_custom_call.1} parent=19 // pred_check
          %p312 = pneg %p178
        $region38: #{tpu_custom_call.1} parent=19 // pred_check_branch
          %314 = sbr.rel (%p312) target = $region40
        $region39: #{tpu_custom_call.1} parent=19 // pred_region
          %s315 = sand.u32 %s19, 1
          %s316 = scalar_lea.sflag [#allocation5], %s315
          %s317 = sand.u32 %s168, 1
          %s318 = smul.addr %s317, 128
          %s319 = scalar_lea.vmem [#allocation11], %s318
          %s320 = smul.u32 32, %s27
          %s322 = ssub.s32 2048, 2048
          %323 = vsyncadd %s316, %s322
          %s324 = smul.addr %s26, 64
          %s325 = sadd.s32 %s320, %s324
          %s326 = smul.addr %s325, 64
          %s327 = scalar_lea.hbm %s5, %s326
          %s328 = sshll.u32 %s319, 4
          %s329 = int_to_ptr.vmem [resolvable:$true] %s328
          %334 = dma.hbm_to_vmem [thread:$0]  %s327, 2048, %s329, %s316, 64, 64, 4
        $region40: #{tpu_custom_call.1} parent=19 // pred_fallthru
          _
      $region20: #{tpu_custom_call.1} parent=5 // pred_fallthru
        _
      %p335 = scmp.le.s32.totalorder 1, %s19
      %p336 = scmp.lt.s32.totalorder %s19, 7
      %p337 = pnand %p335, %p336
      %p338 = pneg %p337
      // Predicated region
      $region41: #{tpu_custom_call.1} parent=5 // pred_check
        _
      $region42: #{tpu_custom_call.1} parent=5 // pred_check_branch
        %340 = sbr.rel (%p337) target = $region44
      $region43: #{tpu_custom_call.1} parent=5 // pred_region
        %s341 = ssub.s32 %s19, 1
        %s342 = sand.u32 %s24, 1
        %s343 = scalar_lea.sflag [#allocation5], %s342
        %s344 = sand.u32 %s44, 1
        %s345 = smul.addr %s344, 512
        %s346 = scalar_lea.vmem [#allocation4], %s345
        // Predicated region
        $region45: #{tpu_custom_call.1} parent=43 // pred_check
          %p347 = pneg %p57
        $region46: #{tpu_custom_call.1} parent=43 // pred_check_branch
          %349 = sbr.rel (%p347) target = $region48
        $region47: #{tpu_custom_call.1} parent=43 // pred_region
          %350 = dma.done %s343, 8192
        $region48: #{tpu_custom_call.1} parent=43 // pred_fallthru
          _
        // Predicated region
        $region49: #{tpu_custom_call.1} parent=43 // pred_check
          %p351 = pneg %p78
        $region50: #{tpu_custom_call.1} parent=43 // pred_check_branch
          %353 = sbr.rel (%p351) target = $region52
        $region51: #{tpu_custom_call.1} parent=43 // pred_region
          %354 = dma.done [#allocation8], 4096
        $region52: #{tpu_custom_call.1} parent=43 // pred_fallthru
          _
        %s355 = sand.u32 %s24, 1
        %s356 = scalar_lea.sflag [#allocation5], %s355
        %s357 = sand.u32 %s91, 1
        %s358 = smul.addr %s357, 64
        %s359 = scalar_lea.vmem [#allocation9], %s358
        // Predicated region
        $region53: #{tpu_custom_call.1} parent=43 // pred_check
          %p360 = pneg %p104
        $region54: #{tpu_custom_call.1} parent=43 // pred_check_branch
          %362 = sbr.rel (%p360) target = $region56
        $region55: #{tpu_custom_call.1} parent=43 // pred_region
          %363 = dma.done %s356, 1024
        $region56: #{tpu_custom_call.1} parent=43 // pred_fallthru
          _
        %s364 = sand.u32 %s24, 1
        %s365 = scalar_lea.sflag [#allocation5], %s364
        %s366 = sand.u32 %s117, 1
        %s367 = smul.addr %s366, 64
        %s368 = scalar_lea.vmem [#allocation10], %s367
        // Predicated region
        $region57: #{tpu_custom_call.1} parent=43 // pred_check
          %p369 = pneg %p130
        $region58: #{tpu_custom_call.1} parent=43 // pred_check_branch
          %371 = sbr.rel (%p369) target = $region60
        $region59: #{tpu_custom_call.1} parent=43 // pred_region
          %372 = dma.done %s365, 1024
        $region60: #{tpu_custom_call.1} parent=43 // pred_fallthru
          _
        %s373 = sand.u32 %s24, 1
        %s374 = scalar_lea.sflag [#allocation5], %s373
        %s375 = sand.u32 %s171, 1
        %s376 = smul.addr %s375, 128
        %s377 = scalar_lea.vmem [#allocation11], %s376
        // Predicated region
        $region61: #{tpu_custom_call.1} parent=43 // pred_check
          %p378 = pneg %p184
        $region62: #{tpu_custom_call.1} parent=43 // pred_check_branch
          %380 = sbr.rel (%p378) target = $region64
        $region63: #{tpu_custom_call.1} parent=43 // pred_region
          %381 = dma.done %s374, 2048
        $region64: #{tpu_custom_call.1} parent=43 // pred_fallthru
          _
        %s382 = sand.u32 %s24, 1
        %s383 = scalar_lea.sflag [#allocation5], %s382
        %s384 = sand.u32 %s44, 1
        %s385 = smul.addr %s384, 512
        %s386 = scalar_lea.vmem [#allocation4], %s385
        %p387 = pneg %p57
        %p388 = pneg %p54
        %p389 = pneg %p78
        %p390 = pneg %p75
        %s391 = sand.u32 %s24, 1
        %s392 = scalar_lea.sflag [#allocation5], %s391
        %s393 = sand.u32 %s91, 1
        %s394 = smul.addr %s393, 64
        %s395 = scalar_lea.vmem [#allocation9], %s394
        %p396 = pneg %p104
        %p397 = pneg %p101
        %s398 = sand.u32 %s24, 1
        %s399 = scalar_lea.sflag [#allocation5], %s398
        %s400 = sand.u32 %s117, 1
        %s401 = smul.addr %s400, 64
        %s402 = scalar_lea.vmem [#allocation10], %s401
        %p403 = pneg %p130
        %p404 = pneg %p127
        %p405 = scmp.lt.s32.totalorder %s28, 2
        %s406 = scalar_select %p405, %s28, 2
        %s407 = scalar_lea.vmem %s4, %s406
        %p408 = pneg %p156
        %p409 = pneg %p153
        %s410 = sand.u32 %s24, 1
        %s411 = scalar_lea.sflag [#allocation5], %s410
        %s412 = sand.u32 %s171, 1
        %s413 = smul.addr %s412, 128
        %s414 = scalar_lea.vmem [#allocation11], %s413
        %p415 = pneg %p184
        %p416 = pneg %p181
        %p417 = pneg %p210
        %p418 = pneg %p207
        %s419 = sand.u32 %s197, 1
        %s420 = scalar_lea.sflag [#allocation6], %s419
        %s421 = sand.u32 %s197, 1
        %s422 = smul.addr %s421, 256
        %s423 = scalar_lea.vmem [#allocation12], %s422
        %s424 = smul.u32 32, %s29
        %p425 = scmp.lt.s32.totalorder %s28, 2
        %s426 = scalar_select %p425, %s28, 2
        %s427 = scalar_lea.vmem %s4, %s426
        %s428 = smul.u32 32, %s29
        %s429 = smul.u32 32, %s29
        %s431 = smul.u32 %s29, 256
        %v432 = vld [vmem:[%s346] sm:$0xff]
        %v433 = vld [vmem:[%s346 + $0x8] sm:$0xff]
        %v434 = vld [vmem:[%s346 + $0x10] sm:$0xff]
        %v435 = vld [vmem:[%s346 + $0x18] sm:$0xff]
        %v436 = vld [vmem:[%s346 + $0x20] sm:$0xff]
        %v437 = vld [vmem:[%s346 + $0x28] sm:$0xff]
        %v438 = vld [vmem:[%s346 + $0x30] sm:$0xff]
        %v439 = vld [vmem:[%s346 + $0x38] sm:$0xff]
        %v440 = vld [vmem:[%s346 + $0x40] sm:$0xff]
        %v441 = vld [vmem:[%s346 + $0x48] sm:$0xff]
        %v442 = vld [vmem:[%s346 + $0x50] sm:$0xff]
        %v443 = vld [vmem:[%s346 + $0x58] sm:$0xff]
        %v444 = vld [vmem:[%s346 + $0x60] sm:$0xff]
        %v445 = vld [vmem:[%s346 + $0x68] sm:$0xff]
        %v446 = vld [vmem:[%s346 + $0x70] sm:$0xff]
        %v447 = vld [vmem:[%s346 + $0x78] sm:$0xff]
        %v448 = vld [vmem:[%s346 + $0x80] sm:$0xff]
        %v449 = vld [vmem:[%s346 + $0x88] sm:$0xff]
        %v450 = vld [vmem:[%s346 + $0x90] sm:$0xff]
        %v451 = vld [vmem:[%s346 + $0x98] sm:$0xff]
        %v452 = vld [vmem:[%s346 + $0xa0] sm:$0xff]
        %v453 = vld [vmem:[%s346 + $0xa8] sm:$0xff]
        %v454 = vld [vmem:[%s346 + $0xb0] sm:$0xff]
        %v455 = vld [vmem:[%s346 + $0xb8] sm:$0xff]
        %v456 = vld [vmem:[%s346 + $0xc0] sm:$0xff]
        %v457 = vld [vmem:[%s346 + $0xc8] sm:$0xff]
        %v458 = vld [vmem:[%s346 + $0xd0] sm:$0xff]
        %v459 = vld [vmem:[%s346 + $0xd8] sm:$0xff]
        %v460 = vld [vmem:[%s346 + $0xe0] sm:$0xff]
        %v461 = vld [vmem:[%s346 + $0xe8] sm:$0xff]
        %v462 = vld [vmem:[%s346 + $0xf0] sm:$0xff]
        %v463 = vld [vmem:[%s346 + $0xf8] sm:$0xff]
        %v464 = vld [vmem:[%s346 + $0x100] sm:$0xff]
        %v465 = vld [vmem:[%s346 + $0x108] sm:$0xff]
        %v466 = vld [vmem:[%s346 + $0x110] sm:$0xff]
        %v467 = vld [vmem:[%s346 + $0x118] sm:$0xff]
        %v468 = vld [vmem:[%s346 + $0x120] sm:$0xff]
        %v469 = vld [vmem:[%s346 + $0x128] sm:$0xff]
        %v470 = vld [vmem:[%s346 + $0x130] sm:$0xff]
        %v471 = vld [vmem:[%s346 + $0x138] sm:$0xff]
        %v472 = vld [vmem:[%s346 + $0x140] sm:$0xff]
        %v473 = vld [vmem:[%s346 + $0x148] sm:$0xff]
        %v474 = vld [vmem:[%s346 + $0x150] sm:$0xff]
        %v475 = vld [vmem:[%s346 + $0x158] sm:$0xff]
        %v476 = vld [vmem:[%s346 + $0x160] sm:$0xff]
        %v477 = vld [vmem:[%s346 + $0x168] sm:$0xff]
        %v478 = vld [vmem:[%s346 + $0x170] sm:$0xff]
        %v479 = vld [vmem:[%s346 + $0x178] sm:$0xff]
        %v480 = vld [vmem:[%s346 + $0x180] sm:$0xff]
        %v481 = vld [vmem:[%s346 + $0x188] sm:$0xff]
        %v482 = vld [vmem:[%s346 + $0x190] sm:$0xff]
        %v483 = vld [vmem:[%s346 + $0x198] sm:$0xff]
        %v484 = vld [vmem:[%s346 + $0x1a0] sm:$0xff]
        %v485 = vld [vmem:[%s346 + $0x1a8] sm:$0xff]
        %v486 = vld [vmem:[%s346 + $0x1b0] sm:$0xff]
        %v487 = vld [vmem:[%s346 + $0x1b8] sm:$0xff]
        %v488 = vld [vmem:[%s346 + $0x1c0] sm:$0xff]
        %v489 = vld [vmem:[%s346 + $0x1c8] sm:$0xff]
        %v490 = vld [vmem:[%s346 + $0x1d0] sm:$0xff]
        %v491 = vld [vmem:[%s346 + $0x1d8] sm:$0xff]
        %v492 = vld [vmem:[%s346 + $0x1e0] sm:$0xff]
        %v493 = vld [vmem:[%s346 + $0x1e8] sm:$0xff]
        %v494 = vld [vmem:[%s346 + $0x1f0] sm:$0xff]
        %v495 = vld [vmem:[%s346 + $0x1f8] sm:$0xff]
        %v496 = vld [vmem:[%s359] sm:$0xf]
        %v497 = vld [vmem:[%s359 + $0x4] sm:$0xf]
        %v498 = vld [vmem:[%s359 + $0x8] sm:$0xf]
        %v499 = vld [vmem:[%s359 + $0xc] sm:$0xf]
        %v500 = vld [vmem:[%s359 + $0x10] sm:$0xf]
        %v501 = vld [vmem:[%s359 + $0x14] sm:$0xf]
        %v502 = vld [vmem:[%s359 + $0x18] sm:$0xf]
        %v503 = vld [vmem:[%s359 + $0x1c] sm:$0xf]
        %v504 = vld [vmem:[%s359 + $0x20] sm:$0xf]
        %v505 = vld [vmem:[%s359 + $0x24] sm:$0xf]
        %v506 = vld [vmem:[%s359 + $0x28] sm:$0xf]
        %v507 = vld [vmem:[%s359 + $0x2c] sm:$0xf]
        %v508 = vld [vmem:[%s359 + $0x30] sm:$0xf]
        %v509 = vld [vmem:[%s359 + $0x34] sm:$0xf]
        %v510 = vld [vmem:[%s359 + $0x38] sm:$0xf]
        %v511 = vld [vmem:[%s359 + $0x3c] sm:$0xf]
        %v512 = vld [vmem:[%s368] sm:$0xf]
        %v513 = vld [vmem:[%s368 + $0x4] sm:$0xf]
        %v514 = vld [vmem:[%s368 + $0x8] sm:$0xf]
        %v515 = vld [vmem:[%s368 + $0xc] sm:$0xf]
        %v516 = vld [vmem:[%s368 + $0x10] sm:$0xf]
        %v517 = vld [vmem:[%s368 + $0x14] sm:$0xf]
        %v518 = vld [vmem:[%s368 + $0x18] sm:$0xf]
        %v519 = vld [vmem:[%s368 + $0x1c] sm:$0xf]
        %v520 = vld [vmem:[%s368 + $0x20] sm:$0xf]
        %v521 = vld [vmem:[%s368 + $0x24] sm:$0xf]
        %v522 = vld [vmem:[%s368 + $0x28] sm:$0xf]
        %v523 = vld [vmem:[%s368 + $0x2c] sm:$0xf]
        %v524 = vld [vmem:[%s368 + $0x30] sm:$0xf]
        %v525 = vld [vmem:[%s368 + $0x34] sm:$0xf]
        %v526 = vld [vmem:[%s368 + $0x38] sm:$0xf]
        %v527 = vld [vmem:[%s368 + $0x3c] sm:$0xf]
        %v528 = vld [vmem:[%s427] sm:$0x1]
        %p529 = scmp.eq.s32.totalorder %s28, 0
        // Predicated region
        $region65: #{tpu_custom_call.1} parent=43 // pred_check
          %p530 = pneg %p529
        $region66: #{tpu_custom_call.1} parent=43 // pred_check_branch
          %532 = sbr.rel (%p530) target = $region68
        $region67: #{tpu_custom_call.1} parent=43 // pred_region
          %v533 = vld [vmem:[#allocation7] sm:$0xf]
          %v534 = vld [vmem:[#allocation7 + $0x4] sm:$0xf]
          %v535 = vld [vmem:[#allocation7 + $0x8] sm:$0xf]
          %v536 = vld [vmem:[#allocation7 + $0xc] sm:$0xf]
          %v537 = vld [vmem:[#allocation7 + $0x10] sm:$0xf]
          %v538 = vld [vmem:[#allocation7 + $0x14] sm:$0xf]
          %v539 = vld [vmem:[#allocation7 + $0x18] sm:$0xf]
          %v540 = vld [vmem:[#allocation7 + $0x1c] sm:$0xf]
          %v541 = vld [vmem:[#allocation7 + $0x20] sm:$0xf]
          %v542 = vld [vmem:[#allocation7 + $0x24] sm:$0xf]
          %v543 = vld [vmem:[#allocation7 + $0x28] sm:$0xf]
          %v544 = vld [vmem:[#allocation7 + $0x2c] sm:$0xf]
          %v545 = vld [vmem:[#allocation7 + $0x30] sm:$0xf]
          %v546 = vld [vmem:[#allocation7 + $0x34] sm:$0xf]
          %v547 = vld [vmem:[#allocation7 + $0x38] sm:$0xf]
          %v548 = vld [vmem:[#allocation7 + $0x3c] sm:$0xf]
          %v549 = vld [vmem:[#allocation7 + $0x40] sm:$0xf]
          %v550 = vld [vmem:[#allocation7 + $0x44] sm:$0xf]
          %v551 = vld [vmem:[#allocation7 + $0x48] sm:$0xf]
          %v552 = vld [vmem:[#allocation7 + $0x4c] sm:$0xf]
          %v553 = vld [vmem:[#allocation7 + $0x50] sm:$0xf]
          %v554 = vld [vmem:[#allocation7 + $0x54] sm:$0xf]
          %v555 = vld [vmem:[#allocation7 + $0x58] sm:$0xf]
          %v556 = vld [vmem:[#allocation7 + $0x5c] sm:$0xf]
          %v557 = vld [vmem:[#allocation7 + $0x60] sm:$0xf]
          %v558 = vld [vmem:[#allocation7 + $0x64] sm:$0xf]
          %v559 = vld [vmem:[#allocation7 + $0x68] sm:$0xf]
          %v560 = vld [vmem:[#allocation7 + $0x6c] sm:$0xf]
          %v561 = vld [vmem:[#allocation7 + $0x70] sm:$0xf]
          %v562 = vld [vmem:[#allocation7 + $0x74] sm:$0xf]
          %v563 = vld [vmem:[#allocation7 + $0x78] sm:$0xf]
          %v564 = vld [vmem:[#allocation7 + $0x7c] sm:$0xf]
          %v565 = vld [vmem:[#allocation7 + $0x80] sm:$0xf]
          %v566 = vld [vmem:[#allocation7 + $0x84] sm:$0xf]
          %v567 = vld [vmem:[#allocation7 + $0x88] sm:$0xf]
          %v568 = vld [vmem:[#allocation7 + $0x8c] sm:$0xf]
          %v569 = vld [vmem:[#allocation7 + $0x90] sm:$0xf]
          %v570 = vld [vmem:[#allocation7 + $0x94] sm:$0xf]
          %v571 = vld [vmem:[#allocation7 + $0x98] sm:$0xf]
          %v572 = vld [vmem:[#allocation7 + $0x9c] sm:$0xf]
          %v573 = vld [vmem:[#allocation7 + $0xa0] sm:$0xf]
          %v574 = vld [vmem:[#allocation7 + $0xa4] sm:$0xf]
          %v575 = vld [vmem:[#allocation7 + $0xa8] sm:$0xf]
          %v576 = vld [vmem:[#allocation7 + $0xac] sm:$0xf]
          %v577 = vld [vmem:[#allocation7 + $0xb0] sm:$0xf]
          %v578 = vld [vmem:[#allocation7 + $0xb4] sm:$0xf]
          %v579 = vld [vmem:[#allocation7 + $0xb8] sm:$0xf]
          %v580 = vld [vmem:[#allocation7 + $0xbc] sm:$0xf]
          %v581 = vld [vmem:[#allocation7 + $0xc0] sm:$0xf]
          %v582 = vld [vmem:[#allocation7 + $0xc4] sm:$0xf]
          %v583 = vld [vmem:[#allocation7 + $0xc8] sm:$0xf]
          %v584 = vld [vmem:[#allocation7 + $0xcc] sm:$0xf]
          %v585 = vld [vmem:[#allocation7 + $0xd0] sm:$0xf]
          %v586 = vld [vmem:[#allocation7 + $0xd4] sm:$0xf]
          %v587 = vld [vmem:[#allocation7 + $0xd8] sm:$0xf]
          %v588 = vld [vmem:[#allocation7 + $0xdc] sm:$0xf]
          %v589 = vld [vmem:[#allocation7 + $0xe0] sm:$0xf]
          %v590 = vld [vmem:[#allocation7 + $0xe4] sm:$0xf]
          %v591 = vld [vmem:[#allocation7 + $0xe8] sm:$0xf]
          %v592 = vld [vmem:[#allocation7 + $0xec] sm:$0xf]
          %v593 = vld [vmem:[#allocation7 + $0xf0] sm:$0xf]
          %v594 = vld [vmem:[#allocation7 + $0xf4] sm:$0xf]
          %v595 = vld [vmem:[#allocation7 + $0xf8] sm:$0xf]
          %v596 = vld [vmem:[#allocation7 + $0xfc] sm:$0xf]
          %v661 = vunpack.c.l.b16 %v432
          %v662 = vunpack.c.h.b16 %v432
          %v663 = vunpack.c.l.b16 %v433
          %v664 = vunpack.c.h.b16 %v433
          %v665 = vunpack.c.l.b16 %v434
          %v666 = vunpack.c.h.b16 %v434
          %v667 = vunpack.c.l.b16 %v435
          %v668 = vunpack.c.h.b16 %v435
          %v669 = vunpack.c.l.b16 %v436
          %v670 = vunpack.c.h.b16 %v436
          %v671 = vunpack.c.l.b16 %v437
          %v672 = vunpack.c.h.b16 %v437
          %v673 = vunpack.c.l.b16 %v438
          %v674 = vunpack.c.h.b16 %v438
          %v675 = vunpack.c.l.b16 %v439
          %v676 = vunpack.c.h.b16 %v439
          %v677 = vunpack.c.l.b16 %v440
          %v678 = vunpack.c.h.b16 %v440
          %v679 = vunpack.c.l.b16 %v441
          %v680 = vunpack.c.h.b16 %v441
          %v681 = vunpack.c.l.b16 %v442
          %v682 = vunpack.c.h.b16 %v442
          %v683 = vunpack.c.l.b16 %v443
          %v684 = vunpack.c.h.b16 %v443
          %v685 = vunpack.c.l.b16 %v444
          %v686 = vunpack.c.h.b16 %v444
          %v687 = vunpack.c.l.b16 %v445
          %v688 = vunpack.c.h.b16 %v445
          %v689 = vunpack.c.l.b16 %v446
          %v690 = vunpack.c.h.b16 %v446
          %v691 = vunpack.c.l.b16 %v447
          %v692 = vunpack.c.h.b16 %v447
          %v693 = vunpack.c.l.b16 %v448
          %v694 = vunpack.c.h.b16 %v448
          %v695 = vunpack.c.l.b16 %v449
          %v696 = vunpack.c.h.b16 %v449
          %v697 = vunpack.c.l.b16 %v450
          %v698 = vunpack.c.h.b16 %v450
          %v699 = vunpack.c.l.b16 %v451
          %v700 = vunpack.c.h.b16 %v451
          %v701 = vunpack.c.l.b16 %v452
          %v702 = vunpack.c.h.b16 %v452
          %v703 = vunpack.c.l.b16 %v453
          %v704 = vunpack.c.h.b16 %v453
          %v705 = vunpack.c.l.b16 %v454
          %v706 = vunpack.c.h.b16 %v454
          %v707 = vunpack.c.l.b16 %v455
          %v708 = vunpack.c.h.b16 %v455
          %v709 = vunpack.c.l.b16 %v456
          %v710 = vunpack.c.h.b16 %v456
          %v711 = vunpack.c.l.b16 %v457
          %v712 = vunpack.c.h.b16 %v457
          %v713 = vunpack.c.l.b16 %v458
          %v714 = vunpack.c.h.b16 %v458
          %v715 = vunpack.c.l.b16 %v459
          %v716 = vunpack.c.h.b16 %v459
          %v717 = vunpack.c.l.b16 %v460
          %v718 = vunpack.c.h.b16 %v460
          %v719 = vunpack.c.l.b16 %v461
          %v720 = vunpack.c.h.b16 %v461
          %v721 = vunpack.c.l.b16 %v462
          %v722 = vunpack.c.h.b16 %v462
          %v723 = vunpack.c.l.b16 %v463
          %v724 = vunpack.c.h.b16 %v463
          %v725 = vunpack.c.l.b16 %v464
          %v726 = vunpack.c.h.b16 %v464
          %v727 = vunpack.c.l.b16 %v465
          %v728 = vunpack.c.h.b16 %v465
          %v729 = vunpack.c.l.b16 %v466
          %v730 = vunpack.c.h.b16 %v466
          %v731 = vunpack.c.l.b16 %v467
          %v732 = vunpack.c.h.b16 %v467
          %v733 = vunpack.c.l.b16 %v468
          %v734 = vunpack.c.h.b16 %v468
          %v735 = vunpack.c.l.b16 %v469
          %v736 = vunpack.c.h.b16 %v469
          %v737 = vunpack.c.l.b16 %v470
          %v738 = vunpack.c.h.b16 %v470
          %v739 = vunpack.c.l.b16 %v471
          %v740 = vunpack.c.h.b16 %v471
          %v741 = vunpack.c.l.b16 %v472
          %v742 = vunpack.c.h.b16 %v472
          %v743 = vunpack.c.l.b16 %v473
          %v744 = vunpack.c.h.b16 %v473
          %v745 = vunpack.c.l.b16 %v474
          %v746 = vunpack.c.h.b16 %v474
          %v747 = vunpack.c.l.b16 %v475
          %v748 = vunpack.c.h.b16 %v475
          %v749 = vunpack.c.l.b16 %v476
          %v750 = vunpack.c.h.b16 %v476
          %v751 = vunpack.c.l.b16 %v477
          %v752 = vunpack.c.h.b16 %v477
          %v753 = vunpack.c.l.b16 %v478
          %v754 = vunpack.c.h.b16 %v478
          %v755 = vunpack.c.l.b16 %v479
          %v756 = vunpack.c.h.b16 %v479
          %v757 = vunpack.c.l.b16 %v480
          %v758 = vunpack.c.h.b16 %v480
          %v759 = vunpack.c.l.b16 %v481
          %v760 = vunpack.c.h.b16 %v481
          %v761 = vunpack.c.l.b16 %v482
          %v762 = vunpack.c.h.b16 %v482
          %v763 = vunpack.c.l.b16 %v483
          %v764 = vunpack.c.h.b16 %v483
          %v765 = vunpack.c.l.b16 %v484
          %v766 = vunpack.c.h.b16 %v484
          %v767 = vunpack.c.l.b16 %v485
          %v768 = vunpack.c.h.b16 %v485
          %v769 = vunpack.c.l.b16 %v486
          %v770 = vunpack.c.h.b16 %v486
          %v771 = vunpack.c.l.b16 %v487
          %v772 = vunpack.c.h.b16 %v487
          %v773 = vunpack.c.l.b16 %v488
          %v774 = vunpack.c.h.b16 %v488
          %v775 = vunpack.c.l.b16 %v489
          %v776 = vunpack.c.h.b16 %v489
          %v777 = vunpack.c.l.b16 %v490
          %v778 = vunpack.c.h.b16 %v490
          %v779 = vunpack.c.l.b16 %v491
          %v780 = vunpack.c.h.b16 %v491
          %v781 = vunpack.c.l.b16 %v492
          %v782 = vunpack.c.h.b16 %v492
          %v783 = vunpack.c.l.b16 %v493
          %v784 = vunpack.c.h.b16 %v493
          %v785 = vunpack.c.l.b16 %v494
          %v786 = vunpack.c.h.b16 %v494
          %v787 = vunpack.c.l.b16 %v495
          %v788 = vunpack.c.h.b16 %v495
          %v789 = vpack.c.b16 %v665, %v661
          %v790 = vpack.c.b16 %v666, %v662
          %v791 = vpack.c.b16 %v667, %v663
          %v792 = vpack.c.b16 %v668, %v664
          %v793 = vpack.c.b16 %v673, %v669
          %v794 = vpack.c.b16 %v674, %v670
          %v795 = vpack.c.b16 %v675, %v671
          %v796 = vpack.c.b16 %v676, %v672
          %v797 = vpack.c.b16 %v681, %v677
          %v798 = vpack.c.b16 %v682, %v678
          %v799 = vpack.c.b16 %v683, %v679
          %v800 = vpack.c.b16 %v684, %v680
          %v801 = vpack.c.b16 %v689, %v685
          %v802 = vpack.c.b16 %v690, %v686
          %v803 = vpack.c.b16 %v691, %v687
          %v804 = vpack.c.b16 %v692, %v688
          %v805 = vpack.c.b16 %v697, %v693
          %v806 = vpack.c.b16 %v698, %v694
          %v807 = vpack.c.b16 %v699, %v695
          %v808 = vpack.c.b16 %v700, %v696
          %v809 = vpack.c.b16 %v705, %v701
          %v810 = vpack.c.b16 %v706, %v702
          %v811 = vpack.c.b16 %v707, %v703
          %v812 = vpack.c.b16 %v708, %v704
          %v813 = vpack.c.b16 %v713, %v709
          %v814 = vpack.c.b16 %v714, %v710
          %v815 = vpack.c.b16 %v715, %v711
          %v816 = vpack.c.b16 %v716, %v712
          %v817 = vpack.c.b16 %v721, %v717
          %v818 = vpack.c.b16 %v722, %v718
          %v819 = vpack.c.b16 %v723, %v719
          %v820 = vpack.c.b16 %v724, %v720
          %v821 = vpack.c.b16 %v729, %v725
          %v822 = vpack.c.b16 %v730, %v726
          %v823 = vpack.c.b16 %v731, %v727
          %v824 = vpack.c.b16 %v732, %v728
          %v825 = vpack.c.b16 %v737, %v733
          %v826 = vpack.c.b16 %v738, %v734
          %v827 = vpack.c.b16 %v739, %v735
          %v828 = vpack.c.b16 %v740, %v736
          %v829 = vpack.c.b16 %v745, %v741
          %v830 = vpack.c.b16 %v746, %v742
          %v831 = vpack.c.b16 %v747, %v743
          %v832 = vpack.c.b16 %v748, %v744
          %v833 = vpack.c.b16 %v753, %v749
          %v834 = vpack.c.b16 %v754, %v750
          %v835 = vpack.c.b16 %v755, %v751
          %v836 = vpack.c.b16 %v756, %v752
          %v837 = vpack.c.b16 %v761, %v757
          %v838 = vpack.c.b16 %v762, %v758
          %v839 = vpack.c.b16 %v763, %v759
          %v840 = vpack.c.b16 %v764, %v760
          %v841 = vpack.c.b16 %v769, %v765
          %v842 = vpack.c.b16 %v770, %v766
          %v843 = vpack.c.b16 %v771, %v767
          %v844 = vpack.c.b16 %v772, %v768
          %v845 = vpack.c.b16 %v777, %v773
          %v846 = vpack.c.b16 %v778, %v774
          %v847 = vpack.c.b16 %v779, %v775
          %v848 = vpack.c.b16 %v780, %v776
          %v849 = vpack.c.b16 %v785, %v781
          %v850 = vpack.c.b16 %v786, %v782
          %v851 = vpack.c.b16 %v787, %v783
          %v852 = vpack.c.b16 %v788, %v784
          %v981 = vunpack.c.l.b16 %v533
          %v982 = vunpack.c.l.b16 %v534
          %v983 = vunpack.c.l.b16 %v535
          %v984 = vunpack.c.l.b16 %v536
          %v985 = vunpack.c.l.b16 %v537
          %v986 = vunpack.c.l.b16 %v538
          %v987 = vunpack.c.l.b16 %v539
          %v988 = vunpack.c.l.b16 %v540
          %v989 = vunpack.c.l.b16 %v541
          %v990 = vunpack.c.l.b16 %v542
          %v991 = vunpack.c.l.b16 %v543
          %v992 = vunpack.c.l.b16 %v544
          %v993 = vunpack.c.l.b16 %v545
          %v994 = vunpack.c.l.b16 %v546
          %v995 = vunpack.c.l.b16 %v547
          %v996 = vunpack.c.l.b16 %v548
          %v997 = vunpack.c.l.b16 %v549
          %v998 = vunpack.c.l.b16 %v550
          %v999 = vunpack.c.l.b16 %v551
          %v1000 = vunpack.c.l.b16 %v552
          %v1001 = vunpack.c.l.b16 %v553
          %v1002 = vunpack.c.l.b16 %v554
          %v1003 = vunpack.c.l.b16 %v555
          %v1004 = vunpack.c.l.b16 %v556
          %v1005 = vunpack.c.l.b16 %v557
          %v1006 = vunpack.c.l.b16 %v558
          %v1007 = vunpack.c.l.b16 %v559
          %v1008 = vunpack.c.l.b16 %v560
          %v1009 = vunpack.c.l.b16 %v561
          %v1010 = vunpack.c.l.b16 %v562
          %v1011 = vunpack.c.l.b16 %v563
          %v1012 = vunpack.c.l.b16 %v564
          %v1013 = vunpack.c.l.b16 %v565
          %v1014 = vunpack.c.l.b16 %v566
          %v1015 = vunpack.c.l.b16 %v567
          %v1016 = vunpack.c.l.b16 %v568
          %v1017 = vunpack.c.l.b16 %v569
          %v1018 = vunpack.c.l.b16 %v570
          %v1019 = vunpack.c.l.b16 %v571
          %v1020 = vunpack.c.l.b16 %v572
          %v1021 = vunpack.c.l.b16 %v573
          %v1022 = vunpack.c.l.b16 %v574
          %v1023 = vunpack.c.l.b16 %v575
          %v1024 = vunpack.c.l.b16 %v576
          %v1025 = vunpack.c.l.b16 %v577
          %v1026 = vunpack.c.l.b16 %v578
          %v1027 = vunpack.c.l.b16 %v579
          %v1028 = vunpack.c.l.b16 %v580
          %v1029 = vunpack.c.l.b16 %v581
          %v1030 = vunpack.c.l.b16 %v582
          %v1031 = vunpack.c.l.b16 %v583
          %v1032 = vunpack.c.l.b16 %v584
          %v1033 = vunpack.c.l.b16 %v585
          %v1034 = vunpack.c.l.b16 %v586
          %v1035 = vunpack.c.l.b16 %v587
          %v1036 = vunpack.c.l.b16 %v588
          %v1037 = vunpack.c.l.b16 %v589
          %v1038 = vunpack.c.l.b16 %v590
          %v1039 = vunpack.c.l.b16 %v591
          %v1040 = vunpack.c.l.b16 %v592
          %v1041 = vunpack.c.l.b16 %v593
          %v1042 = vunpack.c.l.b16 %v594
          %v1043 = vunpack.c.l.b16 %v595
          %v1044 = vunpack.c.l.b16 %v596
          %v1045 = vpack.c.b16 %v982, %v981
          %v1046 = vpack.c.b16 %v984, %v983
          %v1047 = vpack.c.b16 %v986, %v985
          %v1048 = vpack.c.b16 %v988, %v987
          %v1049 = vpack.c.b16 %v990, %v989
          %v1050 = vpack.c.b16 %v992, %v991
          %v1051 = vpack.c.b16 %v994, %v993
          %v1052 = vpack.c.b16 %v996, %v995
          %v1053 = vpack.c.b16 %v998, %v997
          %v1054 = vpack.c.b16 %v1000, %v999
          %v1055 = vpack.c.b16 %v1002, %v1001
          %v1056 = vpack.c.b16 %v1004, %v1003
          %v1057 = vpack.c.b16 %v1006, %v1005
          %v1058 = vpack.c.b16 %v1008, %v1007
          %v1059 = vpack.c.b16 %v1010, %v1009
          %v1060 = vpack.c.b16 %v1012, %v1011
          %v1061 = vpack.c.b16 %v1014, %v1013
          %v1062 = vpack.c.b16 %v1016, %v1015
          %v1063 = vpack.c.b16 %v1018, %v1017
          %v1064 = vpack.c.b16 %v1020, %v1019
          %v1065 = vpack.c.b16 %v1022, %v1021
          %v1066 = vpack.c.b16 %v1024, %v1023
          %v1067 = vpack.c.b16 %v1026, %v1025
          %v1068 = vpack.c.b16 %v1028, %v1027
          %v1069 = vpack.c.b16 %v1030, %v1029
          %v1070 = vpack.c.b16 %v1032, %v1031
          %v1071 = vpack.c.b16 %v1034, %v1033
          %v1072 = vpack.c.b16 %v1036, %v1035
          %v1073 = vpack.c.b16 %v1038, %v1037
          %v1074 = vpack.c.b16 %v1040, %v1039
          %v1075 = vpack.c.b16 %v1042, %v1041
          %v1076 = vpack.c.b16 %v1044, %v1043
          %1109 = vmatprep.subr.bf16.mxu0 0
          %1110 = vmatpush1.bf16.msra.mxu0 %v1045
          %1111 = vmatprep.subr.bf16.mxu0 0
          %1112 = vmatpush1.bf16.msra.mxu0 %v1046
          %1113 = vmatprep.subr.bf16.mxu0 0
          %1114 = vmatpush1.bf16.msra.mxu0 %v1047
          %1115 = vmatprep.subr.bf16.mxu0 0
          %1116 = vmatpush1.bf16.msra.mxu0 %v1048
          %1117 = vmatprep.subr.bf16.mxu0 0
          %1118 = vmatpush1.bf16.msra.mxu0 %v1049
          %1119 = vmatprep.subr.bf16.mxu0 0
          %1120 = vmatpush1.bf16.msra.mxu0 %v1050
          %1121 = vmatprep.subr.bf16.mxu0 0
          %1122 = vmatpush1.bf16.msra.mxu0 %v1051
          %1123 = vmatprep.subr.bf16.mxu0 0
          %1124 = vmatpush1.bf16.msra.mxu0 %v1052
          %1125 = vmatprep.subr.bf16.mxu0 0
          %1126 = vmatpush1.bf16.msra.mxu0 %v1053
          %1127 = vmatprep.subr.bf16.mxu0 0
          %1128 = vmatpush1.bf16.msra.mxu0 %v1054
          %1129 = vmatprep.subr.bf16.mxu0 0
          %1130 = vmatpush1.bf16.msra.mxu0 %v1055
          %1131 = vmatprep.subr.bf16.mxu0 0
          %1132 = vmatpush1.bf16.msra.mxu0 %v1056
          %1133 = vmatprep.subr.bf16.mxu0 0
          %1134 = vmatpush1.bf16.msra.mxu0 %v1057
          %1135 = vmatprep.subr.bf16.mxu0 0
          %1136 = vmatpush1.bf16.msra.mxu0 %v1058
          %1137 = vmatprep.subr.bf16.mxu0 0
          %1138 = vmatpush1.bf16.msra.mxu0 %v1059
          %1139 = vmatprep.subr.bf16.mxu0 0
          %1140 = vmatpush1.bf16.msra.mxu0 %v1060
          %1141 = vmatprep.mubr.bf16.mxu0 %v790
          %1142 = vmatmul.mubr.bf16.gmra.mrb[0].mxu0 %v789
          %v1143 = vpop.f32.mrb[0].mxu0
          %v1144 = vadd.f32 0.0, %v1143
          %v1145 = vpop.f32.mrb[0].mxu0
          %v1146 = vpop.f32.mrb[0].mxu0
          %v1147 = vadd.f32 0.0, %v1146
          %v1148 = vpop.f32.mrb[0].mxu0
          %1149 = vmatprep.mubr.bf16.mxu0 %v794
          %1150 = vmatmul.mubr.bf16.gmra.mrb[0].mxu0 %v793
          %v1151 = vpop.f32.mrb[0].mxu0
          %v1152 = vadd.f32 0.0, %v1151
          %v1153 = vpop.f32.mrb[0].mxu0
          %v1154 = vpop.f32.mrb[0].mxu0
          %v1155 = vadd.f32 0.0, %v1154
          %v1156 = vpop.f32.mrb[0].mxu0
          %1157 = vmatprep.mubr.bf16.mxu0 %v798
          %1158 = vmatmul.mubr.bf16.gmra.mrb[0].mxu0 %v797
          %v1159 = vpop.f32.mrb[0].mxu0
          %v1160 = vadd.f32 0.0, %v1159
          %v1161 = vpop.f32.mrb[0].mxu0
          %v1162 = vpop.f32.mrb[0].mxu0
          %v1163 = vadd.f32 0.0, %v1162
          %v1164 = vpop.f32.mrb[0].mxu0
          %1165 = vmatprep.mubr.bf16.mxu0 %v802
          %1166 = vmatmul.mubr.bf16.gmra.mrb[0].mxu0 %v801
          %v1167 = vpop.f32.mrb[0].mxu0
          %v1168 = vadd.f32 0.0, %v1167
          %v1169 = vpop.f32.mrb[0].mxu0
          %v1170 = vpop.f32.mrb[0].mxu0
          %v1171 = vadd.f32 0.0, %v1170
          %v1172 = vpop.f32.mrb[0].mxu0
          %1173 = vmatprep.mubr.bf16.mxu0 %v806
          %1174 = vmatmul.mubr.bf16.gmra.mrb[0].mxu0 %v805
          %v1175 = vpop.f32.mrb[0].mxu0
          %v1176 = vadd.f32 0.0, %v1175
          %v1177 = vpop.f32.mrb[0].mxu0
          %v1178 = vpop.f32.mrb[0].mxu0
          %v1179 = vadd.f32 0.0, %v1178
          %v1180 = vpop.f32.mrb[0].mxu0
          %1181 = vmatprep.mubr.bf16.mxu0 %v810
          %1182 = vmatmul.mubr.bf16.gmra.mrb[0].mxu0 %v809
          %v1183 = vpop.f32.mrb[0].mxu0
          %v1184 = vadd.f32 0.0, %v1183
          %v1185 = vpop.f32.mrb[0].mxu0
          %v1186 = vpop.f32.mrb[0].mxu0
          %v1187 = vadd.f32 0.0, %v1186
          %v1188 = vpop.f32.mrb[0].mxu0
          %1189 = vmatprep.mubr.bf16.mxu0 %v814
          %1190 = vmatmul.mubr.bf16.gmra.mrb[0].mxu0 %v813
          %v1191 = vpop.f32.mrb[0].mxu0
          %v1192 = vadd.f32 0.0, %v1191
          %v1193 = vpop.f32.mrb[0].mxu0
          %v1194 = vpop.f32.mrb[0].mxu0
          %v1195 = vadd.f32 0.0, %v1194
          %v1196 = vpop.f32.mrb[0].mxu0
          %1197 = vmatprep.mubr.bf16.mxu0 %v818
          %1198 = vmatmul.mubr.bf16.gmra.mrb[0].mxu0 %v817
          %v1199 = vpop.f32.mrb[0].mxu0
          %v1200 = vadd.f32 0.0, %v1199
          %v1201 = vpop.f32.mrb[0].mxu0
          %v1202 = vpop.f32.mrb[0].mxu0
          %v1203 = vadd.f32 0.0, %v1202
          %v1204 = vpop.f32.mrb[0].mxu0
          %1205 = vmatprep.mubr.bf16.mxu0 %v822
          %1206 = vmatmul.mubr.bf16.gmra.mrb[0].mxu0 %v821
          %v1207 = vpop.f32.mrb[0].mxu0
          %v1208 = vadd.f32 0.0, %v1207
          %v1209 = vpop.f32.mrb[0].mxu0
          %v1210 = vpop.f32.mrb[0].mxu0
          %v1211 = vadd.f32 0.0, %v1210
          %v1212 = vpop.f32.mrb[0].mxu0
          %1213 = vmatprep.mubr.bf16.mxu0 %v826
          %1214 = vmatmul.mubr.bf16.gmra.mrb[0].mxu0 %v825
          %v1215 = vpop.f32.mrb[0].mxu0
          %v1216 = vadd.f32 0.0, %v1215
          %v1217 = vpop.f32.mrb[0].mxu0
          %v1218 = vpop.f32.mrb[0].mxu0
          %v1219 = vadd.f32 0.0, %v1218
          %v1220 = vpop.f32.mrb[0].mxu0
          %1221 = vmatprep.mubr.bf16.mxu0 %v830
          %1222 = vmatmul.mubr.bf16.gmra.mrb[0].mxu0 %v829
          %v1223 = vpop.f32.mrb[0].mxu0
          %v1224 = vadd.f32 0.0, %v1223
          %v1225 = vpop.f32.mrb[0].mxu0
          %v1226 = vpop.f32.mrb[0].mxu0
          %v1227 = vadd.f32 0.0, %v1226
          %v1228 = vpop.f32.mrb[0].mxu0
          %1229 = vmatprep.mubr.bf16.mxu0 %v834
          %1230 = vmatmul.mubr.bf16.gmra.mrb[0].mxu0 %v833
          %v1231 = vpop.f32.mrb[0].mxu0
          %v1232 = vadd.f32 0.0, %v1231
          %v1233 = vpop.f32.mrb[0].mxu0
          %v1234 = vpop.f32.mrb[0].mxu0
          %v1235 = vadd.f32 0.0, %v1234
          %v1236 = vpop.f32.mrb[0].mxu0
          %1237 = vmatprep.mubr.bf16.mxu0 %v838
          %1238 = vmatmul.mubr.bf16.gmra.mrb[0].mxu0 %v837
          %v1239 = vpop.f32.mrb[0].mxu0
          %v1240 = vadd.f32 0.0, %v1239
          %v1241 = vpop.f32.mrb[0].mxu0
          %v1242 = vpop.f32.mrb[0].mxu0
          %v1243 = vadd.f32 0.0, %v1242
          %v1244 = vpop.f32.mrb[0].mxu0
          %1245 = vmatprep.mubr.bf16.mxu0 %v842
          %1246 = vmatmul.mubr.bf16.gmra.mrb[0].mxu0 %v841
          %v1247 = vpop.f32.mrb[0].mxu0
          %v1248 = vadd.f32 0.0, %v1247
          %v1249 = vpop.f32.mrb[0].mxu0
          %v1250 = vpop.f32.mrb[0].mxu0
          %v1251 = vadd.f32 0.0, %v1250
          %v1252 = vpop.f32.mrb[0].mxu0
          %1253 = vmatprep.mubr.bf16.mxu0 %v846
          %1254 = vmatmul.mubr.bf16.gmra.mrb[0].mxu0 %v845
          %v1255 = vpop.f32.mrb[0].mxu0
          %v1256 = vadd.f32 0.0, %v1255
          %v1257 = vpop.f32.mrb[0].mxu0
          %v1258 = vpop.f32.mrb[0].mxu0
          %v1259 = vadd.f32 0.0, %v1258
          %v1260 = vpop.f32.mrb[0].mxu0
          %1261 = vmatprep.mubr.bf16.mxu0 %v850
          %1262 = vmatmul.mubr.bf16.gmra.mrb[0].mxu0 %v849
          %v1263 = vpop.f32.mrb[0].mxu0
          %v1264 = vadd.f32 0.0, %v1263
          %v1265 = vpop.f32.mrb[0].mxu0
          %v1266 = vpop.f32.mrb[0].mxu0
          %v1267 = vadd.f32 0.0, %v1266
          %v1268 = vpop.f32.mrb[0].mxu0
          %1269 = vdwg.mxu0
          %1270 = vmatprep.subr.bf16.mxu0 0
          %1271 = vmatpush1.bf16.msra.mxu0 %v1061
          %1272 = vmatprep.subr.bf16.mxu0 0
          %1273 = vmatpush1.bf16.msra.mxu0 %v1062
          %1274 = vmatprep.subr.bf16.mxu0 0
          %1275 = vmatpush1.bf16.msra.mxu0 %v1063
          %1276 = vmatprep.subr.bf16.mxu0 0
          %1277 = vmatpush1.bf16.msra.mxu0 %v1064
          %1278 = vmatprep.subr.bf16.mxu0 0
          %1279 = vmatpush1.bf16.msra.mxu0 %v1065
          %1280 = vmatprep.subr.bf16.mxu0 0
          %1281 = vmatpush1.bf16.msra.mxu0 %v1066
          %1282 = vmatprep.subr.bf16.mxu0 0
          %1283 = vmatpush1.bf16.msra.mxu0 %v1067
          %1284 = vmatprep.subr.bf16.mxu0 0
          %1285 = vmatpush1.bf16.msra.mxu0 %v1068
          %1286 = vmatprep.subr.bf16.mxu0 0
          %1287 = vmatpush1.bf16.msra.mxu0 %v1069
          %1288 = vmatprep.subr.bf16.mxu0 0
          %1289 = vmatpush1.bf16.msra.mxu0 %v1070
          %1290 = vmatprep.subr.bf16.mxu0 0
          %1291 = vmatpush1.bf16.msra.mxu0 %v1071
          %1292 = vmatprep.subr.bf16.mxu0 0
          %1293 = vmatpush1.bf16.msra.mxu0 %v1072
          %1294 = vmatprep.subr.bf16.mxu0 0
          %1295 = vmatpush1.bf16.msra.mxu0 %v1073
          %1296 = vmatprep.subr.bf16.mxu0 0
          %1297 = vmatpush1.bf16.msra.mxu0 %v1074
          %1298 = vmatprep.subr.bf16.mxu0 0
          %1299 = vmatpush1.bf16.msra.mxu0 %v1075
          %1300 = vmatprep.subr.bf16.mxu0 0
          %1301 = vmatpush1.bf16.msra.mxu0 %v1076
          %1302 = vmatprep.mubr.bf16.mxu0 %v792
          %1303 = vmatmul.mubr.bf16.gmra.mrb[0].mxu0 %v791
          %v1304 = vpop.f32.mrb[0].mxu0
          %v1305 = vadd.f32 %v1144, %v1304
          %v1306 = vpop.f32.mrb[0].mxu0
          %v1307 = vpop.f32.mrb[0].mxu0
          %v1308 = vadd.f32 %v1147, %v1307
          %v1309 = vpop.f32.mrb[0].mxu0
          %1310 = vmatprep.mubr.bf16.mxu0 %v796
          %1311 = vmatmul.mubr.bf16.gmra.mrb[0].mxu0 %v795
          %v1312 = vpop.f32.mrb[0].mxu0
          %v1313 = vadd.f32 %v1152, %v1312
          %v1314 = vpop.f32.mrb[0].mxu0
          %v1315 = vpop.f32.mrb[0].mxu0
          %v1316 = vadd.f32 %v1155, %v1315
          %v1317 = vpop.f32.mrb[0].mxu0
          %1318 = vmatprep.mubr.bf16.mxu0 %v800
          %1319 = vmatmul.mubr.bf16.gmra.mrb[0].mxu0 %v799
          %v1320 = vpop.f32.mrb[0].mxu0
          %v1321 = vadd.f32 %v1160, %v1320
          %v1322 = vpop.f32.mrb[0].mxu0
          %v1323 = vpop.f32.mrb[0].mxu0
          %v1324 = vadd.f32 %v1163, %v1323
          %v1325 = vpop.f32.mrb[0].mxu0
          %1326 = vmatprep.mubr.bf16.mxu0 %v804
          %1327 = vmatmul.mubr.bf16.gmra.mrb[0].mxu0 %v803
          %v1328 = vpop.f32.mrb[0].mxu0
          %v1329 = vadd.f32 %v1168, %v1328
          %v1330 = vpop.f32.mrb[0].mxu0
          %v1331 = vpop.f32.mrb[0].mxu0
          %v1332 = vadd.f32 %v1171, %v1331
          %v1333 = vpop.f32.mrb[0].mxu0
          %1334 = vmatprep.mubr.bf16.mxu0 %v808
          %1335 = vmatmul.mubr.bf16.gmra.mrb[0].mxu0 %v807
          %v1336 = vpop.f32.mrb[0].mxu0
          %v1337 = vadd.f32 %v1176, %v1336
          %v1338 = vpop.f32.mrb[0].mxu0
          %v1339 = vpop.f32.mrb[0].mxu0
          %v1340 = vadd.f32 %v1179, %v1339
          %v1341 = vpop.f32.mrb[0].mxu0
          %1342 = vmatprep.mubr.bf16.mxu0 %v812
          %1343 = vmatmul.mubr.bf16.gmra.mrb[0].mxu0 %v811
          %v1344 = vpop.f32.mrb[0].mxu0
          %v1345 = vadd.f32 %v1184, %v1344
          %v1346 = vpop.f32.mrb[0].mxu0
          %v1347 = vpop.f32.mrb[0].mxu0
          %v1348 = vadd.f32 %v1187, %v1347
          %v1349 = vpop.f32.mrb[0].mxu0
          %1350 = vmatprep.mubr.bf16.mxu0 %v816
          %1351 = vmatmul.mubr.bf16.gmra.mrb[0].mxu0 %v815
          %v1352 = vpop.f32.mrb[0].mxu0
          %v1353 = vadd.f32 %v1192, %v1352
          %v1354 = vpop.f32.mrb[0].mxu0
          %v1355 = vpop.f32.mrb[0].mxu0
          %v1356 = vadd.f32 %v1195, %v1355
          %v1357 = vpop.f32.mrb[0].mxu0
          %1358 = vmatprep.mubr.bf16.mxu0 %v820
          %1359 = vmatmul.mubr.bf16.gmra.mrb[0].mxu0 %v819
          %v1360 = vpop.f32.mrb[0].mxu0
          %v1361 = vadd.f32 %v1200, %v1360
          %v1362 = vpop.f32.mrb[0].mxu0
          %v1363 = vpop.f32.mrb[0].mxu0
          %v1364 = vadd.f32 %v1203, %v1363
          %v1365 = vpop.f32.mrb[0].mxu0
          %1366 = vmatprep.mubr.bf16.mxu0 %v824
          %1367 = vmatmul.mubr.bf16.gmra.mrb[0].mxu0 %v823
          %v1368 = vpop.f32.mrb[0].mxu0
          %v1369 = vadd.f32 %v1208, %v1368
          %v1370 = vpop.f32.mrb[0].mxu0
          %v1371 = vpop.f32.mrb[0].mxu0
          %v1372 = vadd.f32 %v1211, %v1371
          %v1373 = vpop.f32.mrb[0].mxu0
          %1374 = vmatprep.mubr.bf16.mxu0 %v828
          %1375 = vmatmul.mubr.bf16.gmra.mrb[0].mxu0 %v827
          %v1376 = vpop.f32.mrb[0].mxu0
          %v1377 = vadd.f32 %v1216, %v1376
          %v1378 = vpop.f32.mrb[0].mxu0
          %v1379 = vpop.f32.mrb[0].mxu0
          %v1380 = vadd.f32 %v1219, %v1379
          %v1381 = vpop.f32.mrb[0].mxu0
          %1382 = vmatprep.mubr.bf16.mxu0 %v832
          %1383 = vmatmul.mubr.bf16.gmra.mrb[0].mxu0 %v831
          %v1384 = vpop.f32.mrb[0].mxu0
          %v1385 = vadd.f32 %v1224, %v1384
          %v1386 = vpop.f32.mrb[0].mxu0
          %v1387 = vpop.f32.mrb[0].mxu0
          %v1388 = vadd.f32 %v1227, %v1387
          %v1389 = vpop.f32.mrb[0].mxu0
          %1390 = vmatprep.mubr.bf16.mxu0 %v836
          %1391 = vmatmul.mubr.bf16.gmra.mrb[0].mxu0 %v835
          %v1392 = vpop.f32.mrb[0].mxu0
          %v1393 = vadd.f32 %v1232, %v1392
          %v1394 = vpop.f32.mrb[0].mxu0
          %v1395 = vpop.f32.mrb[0].mxu0
          %v1396 = vadd.f32 %v1235, %v1395
          %v1397 = vpop.f32.mrb[0].mxu0
          %1398 = vmatprep.mubr.bf16.mxu0 %v840
          %1399 = vmatmul.mubr.bf16.gmra.mrb[0].mxu0 %v839
          %v1400 = vpop.f32.mrb[0].mxu0
          %v1401 = vadd.f32 %v1240, %v1400
          %v1402 = vpop.f32.mrb[0].mxu0
          %v1403 = vpop.f32.mrb[0].mxu0
          %v1404 = vadd.f32 %v1243, %v1403
          %v1405 = vpop.f32.mrb[0].mxu0
          %1406 = vmatprep.mubr.bf16.mxu0 %v844
          %1407 = vmatmul.mubr.bf16.gmra.mrb[0].mxu0 %v843
          %v1408 = vpop.f32.mrb[0].mxu0
          %v1409 = vadd.f32 %v1248, %v1408
          %v1410 = vpop.f32.mrb[0].mxu0
          %v1411 = vpop.f32.mrb[0].mxu0
          %v1412 = vadd.f32 %v1251, %v1411
          %v1413 = vpop.f32.mrb[0].mxu0
          %1414 = vmatprep.mubr.bf16.mxu0 %v848
          %1415 = vmatmul.mubr.bf16.gmra.mrb[0].mxu0 %v847
          %v1416 = vpop.f32.mrb[0].mxu0
          %v1417 = vadd.f32 %v1256, %v1416
          %v1418 = vpop.f32.mrb[0].mxu0
          %v1419 = vpop.f32.mrb[0].mxu0
          %v1420 = vadd.f32 %v1259, %v1419
          %v1421 = vpop.f32.mrb[0].mxu0
          %1422 = vmatprep.mubr.bf16.mxu0 %v852
          %1423 = vmatmul.mubr.bf16.gmra.mrb[0].mxu0 %v851
          %v1424 = vpop.f32.mrb[0].mxu0
          %v1425 = vadd.f32 %v1264, %v1424
          %v1426 = vpop.f32.mrb[0].mxu0
          %v1427 = vpop.f32.mrb[0].mxu0
          %v1428 = vadd.f32 %v1267, %v1427
          %v1429 = vpop.f32.mrb[0].mxu0
          %1430 = vdwg.mxu0
          %s1431 = sshra.s32 %s431, 3
          %s1432 = sand.u32 %s431, 7
          %s1433 = smul.addr %s1431, 4
          %s1434 = scalar_lea.vmem [#allocation7], %s1433
          %v1435 = vld [vmem:[%s1434] sm:$0xf]
          %v1436 = vld [vmem:[%s1434 + $0x4] sm:$0xf]
          %v1437 = vld [vmem:[%s1434 + $0x8] sm:$0xf]
          %v1438 = vld [vmem:[%s1434 + $0xc] sm:$0xf]
          %v1439 = vld [vmem:[%s1434 + $0x10] sm:$0xf]
          %v1440 = vld [vmem:[%s1434 + $0x14] sm:$0xf]
          %v1441 = vld [vmem:[%s1434 + $0x18] sm:$0xf]
          %v1442 = vld [vmem:[%s1434 + $0x1c] sm:$0xf]
          %v1443 = vld [vmem:[%s1434 + $0x20] sm:$0xf]
          %v1444 = vld [vmem:[%s1434 + $0x24] sm:$0xf]
          %v1445 = vld [vmem:[%s1434 + $0x28] sm:$0xf]
          %v1446 = vld [vmem:[%s1434 + $0x2c] sm:$0xf]
          %v1447 = vld [vmem:[%s1434 + $0x30] sm:$0xf]
          %v1448 = vld [vmem:[%s1434 + $0x34] sm:$0xf]
          %v1449 = vld [vmem:[%s1434 + $0x38] sm:$0xf]
          %v1450 = vld [vmem:[%s1434 + $0x3c] sm:$0xf]
          %v1451 = vld [vmem:[%s1434 + $0x40] sm:$0xf]
          %v1452 = vld [vmem:[%s1434 + $0x44] sm:$0xf]
          %v1453 = vld [vmem:[%s1434 + $0x48] sm:$0xf]
          %v1454 = vld [vmem:[%s1434 + $0x4c] sm:$0xf]
          %v1455 = vld [vmem:[%s1434 + $0x50] sm:$0xf]
          %v1456 = vld [vmem:[%s1434 + $0x54] sm:$0xf]
          %v1457 = vld [vmem:[%s1434 + $0x58] sm:$0xf]
          %v1458 = vld [vmem:[%s1434 + $0x5c] sm:$0xf]
          %v1459 = vld [vmem:[%s1434 + $0x60] sm:$0xf]
          %v1460 = vld [vmem:[%s1434 + $0x64] sm:$0xf]
          %v1461 = vld [vmem:[%s1434 + $0x68] sm:$0xf]
          %v1462 = vld [vmem:[%s1434 + $0x6c] sm:$0xf]
          %v1463 = vld [vmem:[%s1434 + $0x70] sm:$0xf]
          %v1464 = vld [vmem:[%s1434 + $0x74] sm:$0xf]
          %v1465 = vld [vmem:[%s1434 + $0x78] sm:$0xf]
          %v1466 = vld [vmem:[%s1434 + $0x7c] sm:$0xf]
          %v1467 = vpack.c.bf16 %v1308, %v1305
          %v1468 = vpack.c.bf16 %v1316, %v1313
          %v1469 = vpack.c.bf16 %v1324, %v1321
          %v1470 = vpack.c.bf16 %v1332, %v1329
          %v1471 = vpack.c.bf16 %v1340, %v1337
          %v1472 = vpack.c.bf16 %v1348, %v1345
          %v1473 = vpack.c.bf16 %v1356, %v1353
          %v1474 = vpack.c.bf16 %v1364, %v1361
          %v1475 = vpack.c.bf16 %v1372, %v1369
          %v1476 = vpack.c.bf16 %v1380, %v1377
          %v1477 = vpack.c.bf16 %v1388, %v1385
          %v1478 = vpack.c.bf16 %v1396, %v1393
          %v1479 = vpack.c.bf16 %v1404, %v1401
          %v1480 = vpack.c.bf16 %v1412, %v1409
          %v1481 = vpack.c.bf16 %v1420, %v1417
          %v1482 = vpack.c.bf16 %v1428, %v1425
          %v1499 = vunpack.c.l.b16 %v512
          %v1500 = vunpack.c.l.b16 %v513
          %v1501 = vunpack.c.l.b16 %v514
          %v1502 = vunpack.c.l.b16 %v515
          %v1503 = vunpack.c.l.b16 %v516
          %v1504 = vunpack.c.l.b16 %v517
          %v1505 = vunpack.c.l.b16 %v518
          %v1506 = vunpack.c.l.b16 %v519
          %v1507 = vunpack.c.l.b16 %v520
          %v1508 = vunpack.c.l.b16 %v521
          %v1509 = vunpack.c.l.b16 %v522
          %v1510 = vunpack.c.l.b16 %v523
          %v1511 = vunpack.c.l.b16 %v524
          %v1512 = vunpack.c.l.b16 %v525
          %v1513 = vunpack.c.l.b16 %v526
          %v1514 = vunpack.c.l.b16 %v527
          %v1515 = vpack.c.b16 %v1500, %v1499
          %v1516 = vpack.c.b16 %v1502, %v1501
          %v1517 = vpack.c.b16 %v1504, %v1503
          %v1518 = vpack.c.b16 %v1506, %v1505
          %v1519 = vpack.c.b16 %v1508, %v1507
          %v1520 = vpack.c.b16 %v1510, %v1509
          %v1521 = vpack.c.b16 %v1512, %v1511
          %v1522 = vpack.c.b16 %v1514, %v1513
          %1531 = vmatprep.subr.bf16.mxu0 0
          %1532 = vmatpush1.bf16.msra.mxu0 %v1515
          %1533 = vmatprep.subr.bf16.mxu0 0
          %1534 = vmatpush1.bf16.msra.mxu0 %v1516
          %1535 = vmatprep.subr.bf16.mxu0 0
          %1536 = vmatpush1.bf16.msra.mxu0 %v1517
          %1537 = vmatprep.subr.bf16.mxu0 0
          %1538 = vmatpush1.bf16.msra.mxu0 %v1518
          %1539 = vmatprep.subr.bf16.mxu0 0
          %1540 = vmatpush1.bf16.msra.mxu0 %v1519
          %1541 = vmatprep.subr.bf16.mxu0 0
          %1542 = vmatpush1.bf16.msra.mxu0 %v1520
          %1543 = vmatprep.subr.bf16.mxu0 0
          %1544 = vmatpush1.bf16.msra.mxu0 %v1521
          %1545 = vmatprep.subr.bf16.mxu0 0
          %1546 = vmatpush1.bf16.msra.mxu0 %v1522
          %1547 = vmatprep.subr.bf16.mxu0 0
          %1548 = vmatpush1.bf16.msra.mxu0 0
          %1549 = vmatprep.subr.bf16.mxu0 0
          %1550 = vmatpush1.bf16.msra.mxu0 0
          %1551 = vmatprep.subr.bf16.mxu0 0
          %1552 = vmatpush1.bf16.msra.mxu0 0
          %1553 = vmatprep.subr.bf16.mxu0 0
          %1554 = vmatpush1.bf16.msra.mxu0 0
          %1555 = vmatprep.subr.bf16.mxu0 0
          %1556 = vmatpush1.bf16.msra.mxu0 0
          %1557 = vmatprep.subr.bf16.mxu0 0
          %1558 = vmatpush1.bf16.msra.mxu0 0
          %1559 = vmatprep.subr.bf16.mxu0 0
          %1560 = vmatpush1.bf16.msra.mxu0 0
          %1561 = vmatprep.subr.bf16.mxu0 0
          %1562 = vmatpush1.bf16.msra.mxu0 0
          %1563 = vmatprep.mubr.bf16.mxu0 0
          %1564 = vmatmul.mubr.bf16.gmra.mrb[0].mxu0 %v1467
          %v1565 = vpop.f32.mrb[0].mxu0
          %v1566 = vadd.f32 0.0, %v1565
          %v1567 = vpop.f32.mrb[0].mxu0
          %v1568 = vpop.f32.mrb[0].mxu0
          %v1569 = vadd.f32 0.0, %v1568
          %v1570 = vpop.f32.mrb[0].mxu0
          %1571 = vmatprep.mubr.bf16.mxu0 0
          %1572 = vmatmul.mubr.bf16.gmra.mrb[0].mxu0 %v1468
          %v1573 = vpop.f32.mrb[0].mxu0
          %v1574 = vadd.f32 0.0, %v1573
          %v1575 = vpop.f32.mrb[0].mxu0
          %v1576 = vpop.f32.mrb[0].mxu0
          %v1577 = vadd.f32 0.0, %v1576
          %v1578 = vpop.f32.mrb[0].mxu0
          %1579 = vmatprep.mubr.bf16.mxu0 0
          %1580 = vmatmul.mubr.bf16.gmra.mrb[0].mxu0 %v1469
          %v1581 = vpop.f32.mrb[0].mxu0
          %v1582 = vadd.f32 0.0, %v1581
          %v1583 = vpop.f32.mrb[0].mxu0
          %v1584 = vpop.f32.mrb[0].mxu0
          %v1585 = vadd.f32 0.0, %v1584
          %v1586 = vpop.f32.mrb[0].mxu0
          %1587 = vmatprep.mubr.bf16.mxu0 0
          %1588 = vmatmul.mubr.bf16.gmra.mrb[0].mxu0 %v1470
          %v1589 = vpop.f32.mrb[0].mxu0
          %v1590 = vadd.f32 0.0, %v1589
          %v1591 = vpop.f32.mrb[0].mxu0
          %v1592 = vpop.f32.mrb[0].mxu0
          %v1593 = vadd.f32 0.0, %v1592
          %v1594 = vpop.f32.mrb[0].mxu0
          %1595 = vmatprep.mubr.bf16.mxu0 0
          %1596 = vmatmul.mubr.bf16.gmra.mrb[0].mxu0 %v1471
          %v1597 = vpop.f32.mrb[0].mxu0
          %v1598 = vadd.f32 0.0, %v1597
          %v1599 = vpop.f32.mrb[0].mxu0
          %v1600 = vpop.f32.mrb[0].mxu0
          %v1601 = vadd.f32 0.0, %v1600
          %v1602 = vpop.f32.mrb[0].mxu0
          %1603 = vmatprep.mubr.bf16.mxu0 0
          %1604 = vmatmul.mubr.bf16.gmra.mrb[0].mxu0 %v1472
          %v1605 = vpop.f32.mrb[0].mxu0
          %v1606 = vadd.f32 0.0, %v1605
          %v1607 = vpop.f32.mrb[0].mxu0
          %v1608 = vpop.f32.mrb[0].mxu0
          %v1609 = vadd.f32 0.0, %v1608
          %v1610 = vpop.f32.mrb[0].mxu0
          %1611 = vmatprep.mubr.bf16.mxu0 0
          %1612 = vmatmul.mubr.bf16.gmra.mrb[0].mxu0 %v1473
          %v1613 = vpop.f32.mrb[0].mxu0
          %v1614 = vadd.f32 0.0, %v1613
          %v1615 = vpop.f32.mrb[0].mxu0
          %v1616 = vpop.f32.mrb[0].mxu0
          %v1617 = vadd.f32 0.0, %v1616
          %v1618 = vpop.f32.mrb[0].mxu0
          %1619 = vmatprep.mubr.bf16.mxu0 0
          %1620 = vmatmul.mubr.bf16.gmra.mrb[0].mxu0 %v1474
          %v1621 = vpop.f32.mrb[0].mxu0
          %v1622 = vadd.f32 0.0, %v1621
          %v1623 = vpop.f32.mrb[0].mxu0
          %v1624 = vpop.f32.mrb[0].mxu0
          %v1625 = vadd.f32 0.0, %v1624
          %v1626 = vpop.f32.mrb[0].mxu0
          %1627 = vmatprep.mubr.bf16.mxu0 0
          %1628 = vmatmul.mubr.bf16.gmra.mrb[0].mxu0 %v1475
          %v1629 = vpop.f32.mrb[0].mxu0
          %v1630 = vadd.f32 0.0, %v1629
          %v1631 = vpop.f32.mrb[0].mxu0
          %v1632 = vpop.f32.mrb[0].mxu0
          %v1633 = vadd.f32 0.0, %v1632
          %v1634 = vpop.f32.mrb[0].mxu0
          %1635 = vmatprep.mubr.bf16.mxu0 0
          %1636 = vmatmul.mubr.bf16.gmra.mrb[0].mxu0 %v1476
          %v1637 = vpop.f32.mrb[0].mxu0
          %v1638 = vadd.f32 0.0, %v1637
          %v1639 = vpop.f32.mrb[0].mxu0
          %v1640 = vpop.f32.mrb[0].mxu0
          %v1641 = vadd.f32 0.0, %v1640
          %v1642 = vpop.f32.mrb[0].mxu0
          %1643 = vmatprep.mubr.bf16.mxu0 0
          %1644 = vmatmul.mubr.bf16.gmra.mrb[0].mxu0 %v1477
          %v1645 = vpop.f32.mrb[0].mxu0
          %v1646 = vadd.f32 0.0, %v1645
          %v1647 = vpop.f32.mrb[0].mxu0
          %v1648 = vpop.f32.mrb[0].mxu0
          %v1649 = vadd.f32 0.0, %v1648
          %v1650 = vpop.f32.mrb[0].mxu0
          %1651 = vmatprep.mubr.bf16.mxu0 0
          %1652 = vmatmul.mubr.bf16.gmra.mrb[0].mxu0 %v1478
          %v1653 = vpop.f32.mrb[0].mxu0
          %v1654 = vadd.f32 0.0, %v1653
          %v1655 = vpop.f32.mrb[0].mxu0
          %v1656 = vpop.f32.mrb[0].mxu0
          %v1657 = vadd.f32 0.0, %v1656
          %v1658 = vpop.f32.mrb[0].mxu0
          %1659 = vmatprep.mubr.bf16.mxu0 0
          %1660 = vmatmul.mubr.bf16.gmra.mrb[0].mxu0 %v1479
          %v1661 = vpop.f32.mrb[0].mxu0
          %v1662 = vadd.f32 0.0, %v1661
          %v1663 = vpop.f32.mrb[0].mxu0
          %v1664 = vpop.f32.mrb[0].mxu0
          %v1665 = vadd.f32 0.0, %v1664
          %v1666 = vpop.f32.mrb[0].mxu0
          %1667 = vmatprep.mubr.bf16.mxu0 0
          %1668 = vmatmul.mubr.bf16.gmra.mrb[0].mxu0 %v1480
          %v1669 = vpop.f32.mrb[0].mxu0
          %v1670 = vadd.f32 0.0, %v1669
          %v1671 = vpop.f32.mrb[0].mxu0
          %v1672 = vpop.f32.mrb[0].mxu0
          %v1673 = vadd.f32 0.0, %v1672
          %v1674 = vpop.f32.mrb[0].mxu0
          %1675 = vmatprep.mubr.bf16.mxu0 0
          %1676 = vmatmul.mubr.bf16.gmra.mrb[0].mxu0 %v1481
          %v1677 = vpop.f32.mrb[0].mxu0
          %v1678 = vadd.f32 0.0, %v1677
          %v1679 = vpop.f32.mrb[0].mxu0
          %v1680 = vpop.f32.mrb[0].mxu0
          %v1681 = vadd.f32 0.0, %v1680
          %v1682 = vpop.f32.mrb[0].mxu0
          %1683 = vmatprep.mubr.bf16.mxu0 0
          %1684 = vmatmul.mubr.bf16.gmra.mrb[0].mxu0 %v1482
          %v1685 = vpop.f32.mrb[0].mxu0
          %v1686 = vadd.f32 0.0, %v1685
          %v1687 = vpop.f32.mrb[0].mxu0
          %v1688 = vpop.f32.mrb[0].mxu0
          %v1689 = vadd.f32 0.0, %v1688
          %v1690 = vpop.f32.mrb[0].mxu0
          %1691 = vdwg.mxu0
          %v1724 = vunpack.c.l.b16 %v1435
          %v1725 = vunpack.c.l.b16 %v1436
          %v1726 = vunpack.c.l.b16 %v1437
          %v1727 = vunpack.c.l.b16 %v1438
          %v1728 = vunpack.c.l.b16 %v1439
          %v1729 = vunpack.c.l.b16 %v1440
          %v1730 = vunpack.c.l.b16 %v1441
          %v1731 = vunpack.c.l.b16 %v1442
          %v1732 = vunpack.c.l.b16 %v1443
          %v1733 = vunpack.c.l.b16 %v1444
          %v1734 = vunpack.c.l.b16 %v1445
          %v1735 = vunpack.c.l.b16 %v1446
          %v1736 = vunpack.c.l.b16 %v1447
          %v1737 = vunpack.c.l.b16 %v1448
          %v1738 = vunpack.c.l.b16 %v1449
          %v1739 = vunpack.c.l.b16 %v1450
          %v1740 = vunpack.c.l.b16 %v1451
          %v1741 = vunpack.c.l.b16 %v1452
          %v1742 = vunpack.c.l.b16 %v1453
          %v1743 = vunpack.c.l.b16 %v1454
          %v1744 = vunpack.c.l.b16 %v1455
          %v1745 = vunpack.c.l.b16 %v1456
          %v1746 = vunpack.c.l.b16 %v1457
          %v1747 = vunpack.c.l.b16 %v1458
          %v1748 = vunpack.c.l.b16 %v1459
          %v1749 = vunpack.c.l.b16 %v1460
          %v1750 = vunpack.c.l.b16 %v1461
          %v1751 = vunpack.c.l.b16 %v1462
          %v1752 = vunpack.c.l.b16 %v1463
          %v1753 = vunpack.c.l.b16 %v1464
          %v1754 = vunpack.c.l.b16 %v1465
          %v1755 = vunpack.c.l.b16 %v1466
          %v1756 = vpack.c.b16 %v1725, %v1724
          %v1757 = vpack.c.b16 %v1727, %v1726
          %v1758 = vpack.c.b16 %v1729, %v1728
          %v1759 = vpack.c.b16 %v1731, %v1730
          %v1760 = vpack.c.b16 %v1733, %v1732
          %v1761 = vpack.c.b16 %v1735, %v1734
          %v1762 = vpack.c.b16 %v1737, %v1736
          %v1763 = vpack.c.b16 %v1739, %v1738
          %v1764 = vpack.c.b16 %v1741, %v1740
          %v1765 = vpack.c.b16 %v1743, %v1742
          %v1766 = vpack.c.b16 %v1745, %v1744
          %v1767 = vpack.c.b16 %v1747, %v1746
          %v1768 = vpack.c.b16 %v1749, %v1748
          %v1769 = vpack.c.b16 %v1751, %v1750
          %v1770 = vpack.c.b16 %v1753, %v1752
          %v1771 = vpack.c.b16 %v1755, %v1754
          %v1804 = vunpack.c.l.b16 %v496
          %v1805 = vunpack.c.l.b16 %v497
          %v1806 = vunpack.c.l.b16 %v498
          %v1807 = vunpack.c.l.b16 %v499
          %v1808 = vunpack.c.l.b16 %v500
          %v1809 = vunpack.c.l.b16 %v501
          %v1810 = vunpack.c.l.b16 %v502
          %v1811 = vunpack.c.l.b16 %v503
          %v1812 = vunpack.c.l.b16 %v504
          %v1813 = vunpack.c.l.b16 %v505
          %v1814 = vunpack.c.l.b16 %v506
          %v1815 = vunpack.c.l.b16 %v507
          %v1816 = vunpack.c.l.b16 %v508
          %v1817 = vunpack.c.l.b16 %v509
          %v1818 = vunpack.c.l.b16 %v510
          %v1819 = vunpack.c.l.b16 %v511
          %v1820 = vpack.c.b16 %v1805, %v1804
          %v1821 = vpack.c.b16 %v1807, %v1806
          %v1822 = vpack.c.b16 %v1809, %v1808
          %v1823 = vpack.c.b16 %v1811, %v1810
          %v1824 = vpack.c.b16 %v1813, %v1812
          %v1825 = vpack.c.b16 %v1815, %v1814
          %v1826 = vpack.c.b16 %v1817, %v1816
          %v1827 = vpack.c.b16 %v1819, %v1818
          %1836 = vmatprep.subr.bf16.mxu0 0
          %1837 = vmatpush1.bf16.msra.mxu0 %v1820
          %1838 = vmatprep.subr.bf16.mxu0 0
          %1839 = vmatpush1.bf16.msra.mxu0 %v1821
          %1840 = vmatprep.subr.bf16.mxu0 0
          %1841 = vmatpush1.bf16.msra.mxu0 %v1822
          %1842 = vmatprep.subr.bf16.mxu0 0
          %1843 = vmatpush1.bf16.msra.mxu0 %v1823
          %1844 = vmatprep.subr.bf16.mxu0 0
          %1845 = vmatpush1.bf16.msra.mxu0 %v1824
          %1846 = vmatprep.subr.bf16.mxu0 0
          %1847 = vmatpush1.bf16.msra.mxu0 %v1825
          %1848 = vmatprep.subr.bf16.mxu0 0
          %1849 = vmatpush1.bf16.msra.mxu0 %v1826
          %1850 = vmatprep.subr.bf16.mxu0 0
          %1851 = vmatpush1.bf16.msra.mxu0 %v1827
          %1852 = vmatprep.subr.bf16.mxu0 0
          %1853 = vmatpush1.bf16.msra.mxu0 0
          %1854 = vmatprep.subr.bf16.mxu0 0
          %1855 = vmatpush1.bf16.msra.mxu0 0
          %1856 = vmatprep.subr.bf16.mxu0 0
          %1857 = vmatpush1.bf16.msra.mxu0 0
          %1858 = vmatprep.subr.bf16.mxu0 0
          %1859 = vmatpush1.bf16.msra.mxu0 0
          %1860 = vmatprep.subr.bf16.mxu0 0
          %1861 = vmatpush1.bf16.msra.mxu0 0
          %1862 = vmatprep.subr.bf16.mxu0 0
          %1863 = vmatpush1.bf16.msra.mxu0 0
          %1864 = vmatprep.subr.bf16.mxu0 0
          %1865 = vmatpush1.bf16.msra.mxu0 0
          %1866 = vmatprep.subr.bf16.mxu0 0
          %1867 = vmatpush1.bf16.msra.mxu0 0
          %1868 = vmatprep.mubr.bf16.mxu0 0
          %1869 = vmatmul.mubr.bf16.gmra.mrb[0].mxu0 %v1756
          %v1870 = vpop.f32.mrb[0].mxu0
          %v1871 = vadd.f32 %v1566, %v1870
          %v1872 = vpop.f32.mrb[0].mxu0
          %v1873 = vpop.f32.mrb[0].mxu0
          %v1874 = vadd.f32 %v1569, %v1873
          %v1875 = vpop.f32.mrb[0].mxu0
          %1876 = vmatprep.mubr.bf16.mxu0 0
          %1877 = vmatmul.mubr.bf16.gmra.mrb[0].mxu0 %v1757
          %v1878 = vpop.f32.mrb[0].mxu0
          %v1879 = vadd.f32 %v1574, %v1878
          %v1880 = vpop.f32.mrb[0].mxu0
          %v1881 = vpop.f32.mrb[0].mxu0
          %v1882 = vadd.f32 %v1577, %v1881
          %v1883 = vpop.f32.mrb[0].mxu0
          %1884 = vmatprep.mubr.bf16.mxu0 0
          %1885 = vmatmul.mubr.bf16.gmra.mrb[0].mxu0 %v1758
          %v1886 = vpop.f32.mrb[0].mxu0
          %v1887 = vadd.f32 %v1582, %v1886
          %v1888 = vpop.f32.mrb[0].mxu0
          %v1889 = vpop.f32.mrb[0].mxu0
          %v1890 = vadd.f32 %v1585, %v1889
          %v1891 = vpop.f32.mrb[0].mxu0
          %1892 = vmatprep.mubr.bf16.mxu0 0
          %1893 = vmatmul.mubr.bf16.gmra.mrb[0].mxu0 %v1759
          %v1894 = vpop.f32.mrb[0].mxu0
          %v1895 = vadd.f32 %v1590, %v1894
          %v1896 = vpop.f32.mrb[0].mxu0
          %v1897 = vpop.f32.mrb[0].mxu0
          %v1898 = vadd.f32 %v1593, %v1897
          %v1899 = vpop.f32.mrb[0].mxu0
          %1900 = vmatprep.mubr.bf16.mxu0 0
          %1901 = vmatmul.mubr.bf16.gmra.mrb[0].mxu0 %v1760
          %v1902 = vpop.f32.mrb[0].mxu0
          %v1903 = vadd.f32 %v1598, %v1902
          %v1904 = vpop.f32.mrb[0].mxu0
          %v1905 = vpop.f32.mrb[0].mxu0
          %v1906 = vadd.f32 %v1601, %v1905
          %v1907 = vpop.f32.mrb[0].mxu0
          %1908 = vmatprep.mubr.bf16.mxu0 0
          %1909 = vmatmul.mubr.bf16.gmra.mrb[0].mxu0 %v1761
          %v1910 = vpop.f32.mrb[0].mxu0
          %v1911 = vadd.f32 %v1606, %v1910
          %v1912 = vpop.f32.mrb[0].mxu0
          %v1913 = vpop.f32.mrb[0].mxu0
          %v1914 = vadd.f32 %v1609, %v1913
          %v1915 = vpop.f32.mrb[0].mxu0
          %1916 = vmatprep.mubr.bf16.mxu0 0
          %1917 = vmatmul.mubr.bf16.gmra.mrb[0].mxu0 %v1762
          %v1918 = vpop.f32.mrb[0].mxu0
          %v1919 = vadd.f32 %v1614, %v1918
          %v1920 = vpop.f32.mrb[0].mxu0
          %v1921 = vpop.f32.mrb[0].mxu0
          %v1922 = vadd.f32 %v1617, %v1921
          %v1923 = vpop.f32.mrb[0].mxu0
          %1924 = vmatprep.mubr.bf16.mxu0 0
          %1925 = vmatmul.mubr.bf16.gmra.mrb[0].mxu0 %v1763
          %v1926 = vpop.f32.mrb[0].mxu0
          %v1927 = vadd.f32 %v1622, %v1926
          %v1928 = vpop.f32.mrb[0].mxu0
          %v1929 = vpop.f32.mrb[0].mxu0
          %v1930 = vadd.f32 %v1625, %v1929
          %v1931 = vpop.f32.mrb[0].mxu0
          %1932 = vmatprep.mubr.bf16.mxu0 0
          %1933 = vmatmul.mubr.bf16.gmra.mrb[0].mxu0 %v1764
          %v1934 = vpop.f32.mrb[0].mxu0
          %v1935 = vadd.f32 %v1630, %v1934
          %v1936 = vpop.f32.mrb[0].mxu0
          %v1937 = vpop.f32.mrb[0].mxu0
          %v1938 = vadd.f32 %v1633, %v1937
          %v1939 = vpop.f32.mrb[0].mxu0
          %1940 = vmatprep.mubr.bf16.mxu0 0
          %1941 = vmatmul.mubr.bf16.gmra.mrb[0].mxu0 %v1765
          %v1942 = vpop.f32.mrb[0].mxu0
          %v1943 = vadd.f32 %v1638, %v1942
          %v1944 = vpop.f32.mrb[0].mxu0
          %v1945 = vpop.f32.mrb[0].mxu0
          %v1946 = vadd.f32 %v1641, %v1945
          %v1947 = vpop.f32.mrb[0].mxu0
          %1948 = vmatprep.mubr.bf16.mxu0 0
          %1949 = vmatmul.mubr.bf16.gmra.mrb[0].mxu0 %v1766
          %v1950 = vpop.f32.mrb[0].mxu0
          %v1951 = vadd.f32 %v1646, %v1950
          %v1952 = vpop.f32.mrb[0].mxu0
          %v1953 = vpop.f32.mrb[0].mxu0
          %v1954 = vadd.f32 %v1649, %v1953
          %v1955 = vpop.f32.mrb[0].mxu0
          %1956 = vmatprep.mubr.bf16.mxu0 0
          %1957 = vmatmul.mubr.bf16.gmra.mrb[0].mxu0 %v1767
          %v1958 = vpop.f32.mrb[0].mxu0
          %v1959 = vadd.f32 %v1654, %v1958
          %v1960 = vpop.f32.mrb[0].mxu0
          %v1961 = vpop.f32.mrb[0].mxu0
          %v1962 = vadd.f32 %v1657, %v1961
          %v1963 = vpop.f32.mrb[0].mxu0
          %1964 = vmatprep.mubr.bf16.mxu0 0
          %1965 = vmatmul.mubr.bf16.gmra.mrb[0].mxu0 %v1768
          %v1966 = vpop.f32.mrb[0].mxu0
          %v1967 = vadd.f32 %v1662, %v1966
          %v1968 = vpop.f32.mrb[0].mxu0
          %v1969 = vpop.f32.mrb[0].mxu0
          %v1970 = vadd.f32 %v1665, %v1969
          %v1971 = vpop.f32.mrb[0].mxu0
          %1972 = vmatprep.mubr.bf16.mxu0 0
          %1973 = vmatmul.mubr.bf16.gmra.mrb[0].mxu0 %v1769
          %v1974 = vpop.f32.mrb[0].mxu0
          %v1975 = vadd.f32 %v1670, %v1974
          %v1976 = vpop.f32.mrb[0].mxu0
          %v1977 = vpop.f32.mrb[0].mxu0
          %v1978 = vadd.f32 %v1673, %v1977
          %v1979 = vpop.f32.mrb[0].mxu0
          %1980 = vmatprep.mubr.bf16.mxu0 0
          %1981 = vmatmul.mubr.bf16.gmra.mrb[0].mxu0 %v1770
          %v1982 = vpop.f32.mrb[0].mxu0
          %v1983 = vadd.f32 %v1678, %v1982
          %v1984 = vpop.f32.mrb[0].mxu0
          %v1985 = vpop.f32.mrb[0].mxu0
          %v1986 = vadd.f32 %v1681, %v1985
          %v1987 = vpop.f32.mrb[0].mxu0
          %1988 = vmatprep.mubr.bf16.mxu0 0
          %1989 = vmatmul.mubr.bf16.gmra.mrb[0].mxu0 %v1771
          %v1990 = vpop.f32.mrb[0].mxu0
          %v1991 = vadd.f32 %v1686, %v1990
          %v1992 = vpop.f32.mrb[0].mxu0
          %v1993 = vpop.f32.mrb[0].mxu0
          %v1994 = vadd.f32 %v1689, %v1993
          %v1995 = vpop.f32.mrb[0].mxu0
          %1996 = vdwg.mxu0
          %v1998 = vlaneseq
          %v1999 = vshrl.u32 %v1998, 7
          %v2000 = vsub.s32 0, %v1999
          %v2001 = vrot.slane %v528, %v2000
          %v2003 = vadd.f32 %v1871, %v2001
          %v2004 = vadd.f32 %v1874, %v2001
          %v2005 = vadd.f32 %v1879, %v2001
          %v2006 = vadd.f32 %v1882, %v2001
          %v2007 = vadd.f32 %v1887, %v2001
          %v2008 = vadd.f32 %v1890, %v2001
          %v2009 = vadd.f32 %v1895, %v2001
          %v2010 = vadd.f32 %v1898, %v2001
          %v2011 = vadd.f32 %v1903, %v2001
          %v2012 = vadd.f32 %v1906, %v2001
          %v2013 = vadd.f32 %v1911, %v2001
          %v2014 = vadd.f32 %v1914, %v2001
          %v2015 = vadd.f32 %v1919, %v2001
          %v2016 = vadd.f32 %v1922, %v2001
          %v2017 = vadd.f32 %v1927, %v2001
          %v2018 = vadd.f32 %v1930, %v2001
          %v2019 = vadd.f32 %v1935, %v2001
          %v2020 = vadd.f32 %v1938, %v2001
          %v2021 = vadd.f32 %v1943, %v2001
          %v2022 = vadd.f32 %v1946, %v2001
          %v2023 = vadd.f32 %v1951, %v2001
          %v2024 = vadd.f32 %v1954, %v2001
          %v2025 = vadd.f32 %v1959, %v2001
          %v2026 = vadd.f32 %v1962, %v2001
          %v2027 = vadd.f32 %v1967, %v2001
          %v2028 = vadd.f32 %v1970, %v2001
          %v2029 = vadd.f32 %v1975, %v2001
          %v2030 = vadd.f32 %v1978, %v2001
          %v2031 = vadd.f32 %v1983, %v2001
          %v2032 = vadd.f32 %v1986, %v2001
          %v2033 = vadd.f32 %v1991, %v2001
          %v2034 = vadd.f32 %v1994, %v2001
          %v2035 = vmax.f32 %v2003, 0.0
          %v2036 = vmax.f32 %v2004, 0.0
          %v2037 = vmax.f32 %v2005, 0.0
          %v2038 = vmax.f32 %v2006, 0.0
          %v2039 = vmax.f32 %v2007, 0.0
          %v2040 = vmax.f32 %v2008, 0.0
          %v2041 = vmax.f32 %v2009, 0.0
          %v2042 = vmax.f32 %v2010, 0.0
          %v2043 = vmax.f32 %v2011, 0.0
          %v2044 = vmax.f32 %v2012, 0.0
          %v2045 = vmax.f32 %v2013, 0.0
          %v2046 = vmax.f32 %v2014, 0.0
          %v2047 = vmax.f32 %v2015, 0.0
          %v2048 = vmax.f32 %v2016, 0.0
          %v2049 = vmax.f32 %v2017, 0.0
          %v2050 = vmax.f32 %v2018, 0.0
          %v2051 = vmax.f32 %v2019, 0.0
          %v2052 = vmax.f32 %v2020, 0.0
          %v2053 = vmax.f32 %v2021, 0.0
          %v2054 = vmax.f32 %v2022, 0.0
          %v2055 = vmax.f32 %v2023, 0.0
          %v2056 = vmax.f32 %v2024, 0.0
          %v2057 = vmax.f32 %v2025, 0.0
          %v2058 = vmax.f32 %v2026, 0.0
          %v2059 = vmax.f32 %v2027, 0.0
          %v2060 = vmax.f32 %v2028, 0.0
          %v2061 = vmax.f32 %v2029, 0.0
          %v2062 = vmax.f32 %v2030, 0.0
          %v2063 = vmax.f32 %v2031, 0.0
          %v2064 = vmax.f32 %v2032, 0.0
          %v2065 = vmax.f32 %v2033, 0.0
          %v2066 = vmax.f32 %v2034, 0.0
          %v2067 = vld [vmem:[%s377] sm:$0xf]
          %v2068 = vld [vmem:[%s377 + $0x4] sm:$0xf]
          %v2069 = vld [vmem:[%s377 + $0x8] sm:$0xf]
          %v2070 = vld [vmem:[%s377 + $0xc] sm:$0xf]
          %v2071 = vld [vmem:[%s377 + $0x10] sm:$0xf]
          %v2072 = vld [vmem:[%s377 + $0x14] sm:$0xf]
          %v2073 = vld [vmem:[%s377 + $0x18] sm:$0xf]
          %v2074 = vld [vmem:[%s377 + $0x1c] sm:$0xf]
          %v2075 = vld [vmem:[%s377 + $0x20] sm:$0xf]
          %v2076 = vld [vmem:[%s377 + $0x24] sm:$0xf]
          %v2077 = vld [vmem:[%s377 + $0x28] sm:$0xf]
          %v2078 = vld [vmem:[%s377 + $0x2c] sm:$0xf]
          %v2079 = vld [vmem:[%s377 + $0x30] sm:$0xf]
          %v2080 = vld [vmem:[%s377 + $0x34] sm:$0xf]
          %v2081 = vld [vmem:[%s377 + $0x38] sm:$0xf]
          %v2082 = vld [vmem:[%s377 + $0x3c] sm:$0xf]
          %v2083 = vld [vmem:[%s377 + $0x40] sm:$0xf]
          %v2084 = vld [vmem:[%s377 + $0x44] sm:$0xf]
          %v2085 = vld [vmem:[%s377 + $0x48] sm:$0xf]
          %v2086 = vld [vmem:[%s377 + $0x4c] sm:$0xf]
          %v2087 = vld [vmem:[%s377 + $0x50] sm:$0xf]
          %v2088 = vld [vmem:[%s377 + $0x54] sm:$0xf]
          %v2089 = vld [vmem:[%s377 + $0x58] sm:$0xf]
          %v2090 = vld [vmem:[%s377 + $0x5c] sm:$0xf]
          %v2091 = vld [vmem:[%s377 + $0x60] sm:$0xf]
          %v2092 = vld [vmem:[%s377 + $0x64] sm:$0xf]
          %v2093 = vld [vmem:[%s377 + $0x68] sm:$0xf]
          %v2094 = vld [vmem:[%s377 + $0x6c] sm:$0xf]
          %v2095 = vld [vmem:[%s377 + $0x70] sm:$0xf]
          %v2096 = vld [vmem:[%s377 + $0x74] sm:$0xf]
          %v2097 = vld [vmem:[%s377 + $0x78] sm:$0xf]
          %v2098 = vld [vmem:[%s377 + $0x7c] sm:$0xf]
          %v2099 = vunpack.c.l.bf16 %v2067
          %v2100 = vunpack.c.l.bf16 %v2068
          %v2101 = vunpack.c.l.bf16 %v2069
          %v2102 = vunpack.c.l.bf16 %v2070
          %v2103 = vunpack.c.l.bf16 %v2071
          %v2104 = vunpack.c.l.bf16 %v2072
          %v2105 = vunpack.c.l.bf16 %v2073
          %v2106 = vunpack.c.l.bf16 %v2074
          %v2107 = vunpack.c.l.bf16 %v2075
          %v2108 = vunpack.c.l.bf16 %v2076
          %v2109 = vunpack.c.l.bf16 %v2077
          %v2110 = vunpack.c.l.bf16 %v2078
          %v2111 = vunpack.c.l.bf16 %v2079
          %v2112 = vunpack.c.l.bf16 %v2080
          %v2113 = vunpack.c.l.bf16 %v2081
          %v2114 = vunpack.c.l.bf16 %v2082
          %v2115 = vunpack.c.l.bf16 %v2083
          %v2116 = vunpack.c.l.bf16 %v2084
          %v2117 = vunpack.c.l.bf16 %v2085
          %v2118 = vunpack.c.l.bf16 %v2086
          %v2119 = vunpack.c.l.bf16 %v2087
          %v2120 = vunpack.c.l.bf16 %v2088
          %v2121 = vunpack.c.l.bf16 %v2089
          %v2122 = vunpack.c.l.bf16 %v2090
          %v2123 = vunpack.c.l.bf16 %v2091
          %v2124 = vunpack.c.l.bf16 %v2092
          %v2125 = vunpack.c.l.bf16 %v2093
          %v2126 = vunpack.c.l.bf16 %v2094
          %v2127 = vunpack.c.l.bf16 %v2095
          %v2128 = vunpack.c.l.bf16 %v2096
          %v2129 = vunpack.c.l.bf16 %v2097
          %v2130 = vunpack.c.l.bf16 %v2098
          %v2131 = vmul.f32 %v2035, %v2099
          %v2132 = vmul.f32 %v2036, %v2100
          %v2133 = vmul.f32 %v2037, %v2101
          %v2134 = vmul.f32 %v2038, %v2102
          %v2135 = vmul.f32 %v2039, %v2103
          %v2136 = vmul.f32 %v2040, %v2104
          %v2137 = vmul.f32 %v2041, %v2105
          %v2138 = vmul.f32 %v2042, %v2106
          %v2139 = vmul.f32 %v2043, %v2107
          %v2140 = vmul.f32 %v2044, %v2108
          %v2141 = vmul.f32 %v2045, %v2109
          %v2142 = vmul.f32 %v2046, %v2110
          %v2143 = vmul.f32 %v2047, %v2111
          %v2144 = vmul.f32 %v2048, %v2112
          %v2145 = vmul.f32 %v2049, %v2113
          %v2146 = vmul.f32 %v2050, %v2114
          %v2147 = vmul.f32 %v2051, %v2115
          %v2148 = vmul.f32 %v2052, %v2116
          %v2149 = vmul.f32 %v2053, %v2117
          %v2150 = vmul.f32 %v2054, %v2118
          %v2151 = vmul.f32 %v2055, %v2119
          %v2152 = vmul.f32 %v2056, %v2120
          %v2153 = vmul.f32 %v2057, %v2121
          %v2154 = vmul.f32 %v2058, %v2122
          %v2155 = vmul.f32 %v2059, %v2123
          %v2156 = vmul.f32 %v2060, %v2124
          %v2157 = vmul.f32 %v2061, %v2125
          %v2158 = vmul.f32 %v2062, %v2126
          %v2159 = vmul.f32 %v2063, %v2127
          %v2160 = vmul.f32 %v2064, %v2128
          %v2161 = vmul.f32 %v2065, %v2129
          %v2162 = vmul.f32 %v2066, %v2130
          %v2163 = vpack.c.bf16 %v2132, %v2131
          %v2164 = vpack.c.bf16 %v2134, %v2133
          %v2165 = vpack.c.bf16 %v2136, %v2135
          %v2166 = vpack.c.bf16 %v2138, %v2137
          %v2167 = vpack.c.bf16 %v2140, %v2139
          %v2168 = vpack.c.bf16 %v2142, %v2141
          %v2169 = vpack.c.bf16 %v2144, %v2143
          %v2170 = vpack.c.bf16 %v2146, %v2145
          %v2171 = vpack.c.bf16 %v2148, %v2147
          %v2172 = vpack.c.bf16 %v2150, %v2149
          %v2173 = vpack.c.bf16 %v2152, %v2151
          %v2174 = vpack.c.bf16 %v2154, %v2153
          %v2175 = vpack.c.bf16 %v2156, %v2155
          %v2176 = vpack.c.bf16 %v2158, %v2157
          %v2177 = vpack.c.bf16 %v2160, %v2159
          %v2178 = vpack.c.bf16 %v2162, %v2161
          %s2179 = sshra.s32 %s431, 4
          %s2180 = sand.u32 %s431, 15
          %s2181 = smul.addr %s2179, 8
          %s2182 = scalar_lea.vmem [#allocation2], %s2181
          %2183 = vst [vmem:[%s2182] sm:$0xff] %v2163
          %2184 = vst [vmem:[%s2182 + $0x8] sm:$0xff] %v2164
          %2185 = vst [vmem:[%s2182 + $0x10] sm:$0xff] %v2165
          %2186 = vst [vmem:[%s2182 + $0x18] sm:$0xff] %v2166
          %2187 = vst [vmem:[%s2182 + $0x20] sm:$0xff] %v2167
          %2188 = vst [vmem:[%s2182 + $0x28] sm:$0xff] %v2168
          %2189 = vst [vmem:[%s2182 + $0x30] sm:$0xff] %v2169
          %2190 = vst [vmem:[%s2182 + $0x38] sm:$0xff] %v2170
          %2191 = vst [vmem:[%s2182 + $0x40] sm:$0xff] %v2171
          %2192 = vst [vmem:[%s2182 + $0x48] sm:$0xff] %v2172
          %2193 = vst [vmem:[%s2182 + $0x50] sm:$0xff] %v2173
          %2194 = vst [vmem:[%s2182 + $0x58] sm:$0xff] %v2174
          %2195 = vst [vmem:[%s2182 + $0x60] sm:$0xff] %v2175
          %2196 = vst [vmem:[%s2182 + $0x68] sm:$0xff] %v2176
          %2197 = vst [vmem:[%s2182 + $0x70] sm:$0xff] %v2177
          %2198 = vst [vmem:[%s2182 + $0x78] sm:$0xff] %v2178
          %2199 = vst [vmem:[%s423] sm:$0xff] %v2131
          %2200 = vst [vmem:[%s423 + $0x8] sm:$0xff] %v2132
          %2201 = vst [vmem:[%s423 + $0x10] sm:$0xff] %v2133
          %2202 = vst [vmem:[%s423 + $0x18] sm:$0xff] %v2134
          %2203 = vst [vmem:[%s423 + $0x20] sm:$0xff] %v2135
          %2204 = vst [vmem:[%s423 + $0x28] sm:$0xff] %v2136
          %2205 = vst [vmem:[%s423 + $0x30] sm:$0xff] %v2137
          %2206 = vst [vmem:[%s423 + $0x38] sm:$0xff] %v2138
          %2207 = vst [vmem:[%s423 + $0x40] sm:$0xff] %v2139
          %2208 = vst [vmem:[%s423 + $0x48] sm:$0xff] %v2140
          %2209 = vst [vmem:[%s423 + $0x50] sm:$0xff] %v2141
          %2210 = vst [vmem:[%s423 + $0x58] sm:$0xff] %v2142
          %2211 = vst [vmem:[%s423 + $0x60] sm:$0xff] %v2143
          %2212 = vst [vmem:[%s423 + $0x68] sm:$0xff] %v2144
          %2213 = vst [vmem:[%s423 + $0x70] sm:$0xff] %v2145
          %2214 = vst [vmem:[%s423 + $0x78] sm:$0xff] %v2146
          %2215 = vst [vmem:[%s423 + $0x80] sm:$0xff] %v2147
          %2216 = vst [vmem:[%s423 + $0x88] sm:$0xff] %v2148
          %2217 = vst [vmem:[%s423 + $0x90] sm:$0xff] %v2149
          %2218 = vst [vmem:[%s423 + $0x98] sm:$0xff] %v2150
          %2219 = vst [vmem:[%s423 + $0xa0] sm:$0xff] %v2151
          %2220 = vst [vmem:[%s423 + $0xa8] sm:$0xff] %v2152
          %2221 = vst [vmem:[%s423 + $0xb0] sm:$0xff] %v2153
          %2222 = vst [vmem:[%s423 + $0xb8] sm:$0xff] %v2154
          %2223 = vst [vmem:[%s423 + $0xc0] sm:$0xff] %v2155
          %2224 = vst [vmem:[%s423 + $0xc8] sm:$0xff] %v2156
          %2225 = vst [vmem:[%s423 + $0xd0] sm:$0xff] %v2157
          %2226 = vst [vmem:[%s423 + $0xd8] sm:$0xff] %v2158
          %2227 = vst [vmem:[%s423 + $0xe0] sm:$0xff] %v2159
          %2228 = vst [vmem:[%s423 + $0xe8] sm:$0xff] %v2160
          %2229 = vst [vmem:[%s423 + $0xf0] sm:$0xff] %v2161
          %2230 = vst [vmem:[%s423 + $0xf8] sm:$0xff] %v2162
        $region68: #{tpu_custom_call.1} parent=43 // pred_fallthru
          _
        %p2231 = scmp.eq.s32.totalorder %s28, 1
        // Predicated region
        $region69: #{tpu_custom_call.1} parent=43 // pred_check
          %p2232 = pneg %p2231
        $region70: #{tpu_custom_call.1} parent=43 // pred_check_branch
          %2234 = sbr.rel (%p2232) target = $region72
        $region71: #{tpu_custom_call.1} parent=43 // pred_region
          %v2235 = vld [vmem:[#allocation2] sm:$0xff]
          %v2236 = vld [vmem:[#allocation2 + $0x8] sm:$0xff]
          %v2237 = vld [vmem:[#allocation2 + $0x10] sm:$0xff]
          %v2238 = vld [vmem:[#allocation2 + $0x18] sm:$0xff]
          %v2239 = vld [vmem:[#allocation2 + $0x20] sm:$0xff]
          %v2240 = vld [vmem:[#allocation2 + $0x28] sm:$0xff]
          %v2241 = vld [vmem:[#allocation2 + $0x30] sm:$0xff]
          %v2242 = vld [vmem:[#allocation2 + $0x38] sm:$0xff]
          %v2243 = vld [vmem:[#allocation2 + $0x40] sm:$0xff]
          %v2244 = vld [vmem:[#allocation2 + $0x48] sm:$0xff]
          %v2245 = vld [vmem:[#allocation2 + $0x50] sm:$0xff]
          %v2246 = vld [vmem:[#allocation2 + $0x58] sm:$0xff]
          %v2247 = vld [vmem:[#allocation2 + $0x60] sm:$0xff]
          %v2248 = vld [vmem:[#allocation2 + $0x68] sm:$0xff]
          %v2249 = vld [vmem:[#allocation2 + $0x70] sm:$0xff]
          %v2250 = vld [vmem:[#allocation2 + $0x78] sm:$0xff]
          %v2251 = vld [vmem:[#allocation2 + $0x80] sm:$0xff]
          %v2252 = vld [vmem:[#allocation2 + $0x88] sm:$0xff]
          %v2253 = vld [vmem:[#allocation2 + $0x90] sm:$0xff]
          %v2254 = vld [vmem:[#allocation2 + $0x98] sm:$0xff]
          %v2255 = vld [vmem:[#allocation2 + $0xa0] sm:$0xff]
          %v2256 = vld [vmem:[#allocation2 + $0xa8] sm:$0xff]
          %v2257 = vld [vmem:[#allocation2 + $0xb0] sm:$0xff]
          %v2258 = vld [vmem:[#allocation2 + $0xb8] sm:$0xff]
          %v2259 = vld [vmem:[#allocation2 + $0xc0] sm:$0xff]
          %v2260 = vld [vmem:[#allocation2 + $0xc8] sm:$0xff]
          %v2261 = vld [vmem:[#allocation2 + $0xd0] sm:$0xff]
          %v2262 = vld [vmem:[#allocation2 + $0xd8] sm:$0xff]
          %v2263 = vld [vmem:[#allocation2 + $0xe0] sm:$0xff]
          %v2264 = vld [vmem:[#allocation2 + $0xe8] sm:$0xff]
          %v2265 = vld [vmem:[#allocation2 + $0xf0] sm:$0xff]
          %v2266 = vld [vmem:[#allocation2 + $0xf8] sm:$0xff]
          %v2331 = vunpack.c.l.b16 %v432
          %v2332 = vunpack.c.h.b16 %v432
          %v2333 = vunpack.c.l.b16 %v433
          %v2334 = vunpack.c.h.b16 %v433
          %v2335 = vunpack.c.l.b16 %v434
          %v2336 = vunpack.c.h.b16 %v434
          %v2337 = vunpack.c.l.b16 %v435
          %v2338 = vunpack.c.h.b16 %v435
          %v2339 = vunpack.c.l.b16 %v436
          %v2340 = vunpack.c.h.b16 %v436
          %v2341 = vunpack.c.l.b16 %v437
          %v2342 = vunpack.c.h.b16 %v437
          %v2343 = vunpack.c.l.b16 %v438
          %v2344 = vunpack.c.h.b16 %v438
          %v2345 = vunpack.c.l.b16 %v439
          %v2346 = vunpack.c.h.b16 %v439
          %v2347 = vunpack.c.l.b16 %v440
          %v2348 = vunpack.c.h.b16 %v440
          %v2349 = vunpack.c.l.b16 %v441
          %v2350 = vunpack.c.h.b16 %v441
          %v2351 = vunpack.c.l.b16 %v442
          %v2352 = vunpack.c.h.b16 %v442
          %v2353 = vunpack.c.l.b16 %v443
          %v2354 = vunpack.c.h.b16 %v443
          %v2355 = vunpack.c.l.b16 %v444
          %v2356 = vunpack.c.h.b16 %v444
          %v2357 = vunpack.c.l.b16 %v445
          %v2358 = vunpack.c.h.b16 %v445
          %v2359 = vunpack.c.l.b16 %v446
          %v2360 = vunpack.c.h.b16 %v446
          %v2361 = vunpack.c.l.b16 %v447
          %v2362 = vunpack.c.h.b16 %v447
          %v2363 = vunpack.c.l.b16 %v448
          %v2364 = vunpack.c.h.b16 %v448
          %v2365 = vunpack.c.l.b16 %v449
          %v2366 = vunpack.c.h.b16 %v449
          %v2367 = vunpack.c.l.b16 %v450
          %v2368 = vunpack.c.h.b16 %v450
          %v2369 = vunpack.c.l.b16 %v451
          %v2370 = vunpack.c.h.b16 %v451
          %v2371 = vunpack.c.l.b16 %v452
          %v2372 = vunpack.c.h.b16 %v452
          %v2373 = vunpack.c.l.b16 %v453
          %v2374 = vunpack.c.h.b16 %v453
          %v2375 = vunpack.c.l.b16 %v454
          %v2376 = vunpack.c.h.b16 %v454
          %v2377 = vunpack.c.l.b16 %v455
          %v2378 = vunpack.c.h.b16 %v455
          %v2379 = vunpack.c.l.b16 %v456
          %v2380 = vunpack.c.h.b16 %v456
          %v2381 = vunpack.c.l.b16 %v457
          %v2382 = vunpack.c.h.b16 %v457
          %v2383 = vunpack.c.l.b16 %v458
          %v2384 = vunpack.c.h.b16 %v458
          %v2385 = vunpack.c.l.b16 %v459
          %v2386 = vunpack.c.h.b16 %v459
          %v2387 = vunpack.c.l.b16 %v460
          %v2388 = vunpack.c.h.b16 %v460
          %v2389 = vunpack.c.l.b16 %v461
          %v2390 = vunpack.c.h.b16 %v461
          %v2391 = vunpack.c.l.b16 %v462
          %v2392 = vunpack.c.h.b16 %v462
          %v2393 = vunpack.c.l.b16 %v463
          %v2394 = vunpack.c.h.b16 %v463
          %v2395 = vunpack.c.l.b16 %v464
          %v2396 = vunpack.c.h.b16 %v464
          %v2397 = vunpack.c.l.b16 %v465
          %v2398 = vunpack.c.h.b16 %v465
          %v2399 = vunpack.c.l.b16 %v466
          %v2400 = vunpack.c.h.b16 %v466
          %v2401 = vunpack.c.l.b16 %v467
          %v2402 = vunpack.c.h.b16 %v467
          %v2403 = vunpack.c.l.b16 %v468
          %v2404 = vunpack.c.h.b16 %v468
          %v2405 = vunpack.c.l.b16 %v469
          %v2406 = vunpack.c.h.b16 %v469
          %v2407 = vunpack.c.l.b16 %v470
          %v2408 = vunpack.c.h.b16 %v470
          %v2409 = vunpack.c.l.b16 %v471
          %v2410 = vunpack.c.h.b16 %v471
          %v2411 = vunpack.c.l.b16 %v472
          %v2412 = vunpack.c.h.b16 %v472
          %v2413 = vunpack.c.l.b16 %v473
          %v2414 = vunpack.c.h.b16 %v473
          %v2415 = vunpack.c.l.b16 %v474
          %v2416 = vunpack.c.h.b16 %v474
          %v2417 = vunpack.c.l.b16 %v475
          %v2418 = vunpack.c.h.b16 %v475
          %v2419 = vunpack.c.l.b16 %v476
          %v2420 = vunpack.c.h.b16 %v476
          %v2421 = vunpack.c.l.b16 %v477
          %v2422 = vunpack.c.h.b16 %v477
          %v2423 = vunpack.c.l.b16 %v478
          %v2424 = vunpack.c.h.b16 %v478
          %v2425 = vunpack.c.l.b16 %v479
          %v2426 = vunpack.c.h.b16 %v479
          %v2427 = vunpack.c.l.b16 %v480
          %v2428 = vunpack.c.h.b16 %v480
          %v2429 = vunpack.c.l.b16 %v481
          %v2430 = vunpack.c.h.b16 %v481
          %v2431 = vunpack.c.l.b16 %v482
          %v2432 = vunpack.c.h.b16 %v482
          %v2433 = vunpack.c.l.b16 %v483
          %v2434 = vunpack.c.h.b16 %v483
          %v2435 = vunpack.c.l.b16 %v484
          %v2436 = vunpack.c.h.b16 %v484
          %v2437 = vunpack.c.l.b16 %v485
          %v2438 = vunpack.c.h.b16 %v485
          %v2439 = vunpack.c.l.b16 %v486
          %v2440 = vunpack.c.h.b16 %v486
          %v2441 = vunpack.c.l.b16 %v487
          %v2442 = vunpack.c.h.b16 %v487
          %v2443 = vunpack.c.l.b16 %v488
          %v2444 = vunpack.c.h.b16 %v488
          %v2445 = vunpack.c.l.b16 %v489
          %v2446 = vunpack.c.h.b16 %v489
          %v2447 = vunpack.c.l.b16 %v490
          %v2448 = vunpack.c.h.b16 %v490
          %v2449 = vunpack.c.l.b16 %v491
          %v2450 = vunpack.c.h.b16 %v491
          %v2451 = vunpack.c.l.b16 %v492
          %v2452 = vunpack.c.h.b16 %v492
          %v2453 = vunpack.c.l.b16 %v493
          %v2454 = vunpack.c.h.b16 %v493
          %v2455 = vunpack.c.l.b16 %v494
          %v2456 = vunpack.c.h.b16 %v494
          %v2457 = vunpack.c.l.b16 %v495
          %v2458 = vunpack.c.h.b16 %v495
          %v2459 = vpack.c.b16 %v2335, %v2331
          %v2460 = vpack.c.b16 %v2336, %v2332
          %v2461 = vpack.c.b16 %v2337, %v2333
          %v2462 = vpack.c.b16 %v2338, %v2334
          %v2463 = vpack.c.b16 %v2343, %v2339
          %v2464 = vpack.c.b16 %v2344, %v2340
          %v2465 = vpack.c.b16 %v2345, %v2341
          %v2466 = vpack.c.b16 %v2346, %v2342
          %v2467 = vpack.c.b16 %v2351, %v2347
          %v2468 = vpack.c.b16 %v2352, %v2348
          %v2469 = vpack.c.b16 %v2353, %v2349
          %v2470 = vpack.c.b16 %v2354, %v2350
          %v2471 = vpack.c.b16 %v2359, %v2355
          %v2472 = vpack.c.b16 %v2360, %v2356
          %v2473 = vpack.c.b16 %v2361, %v2357
          %v2474 = vpack.c.b16 %v2362, %v2358
          %v2475 = vpack.c.b16 %v2367, %v2363
          %v2476 = vpack.c.b16 %v2368, %v2364
          %v2477 = vpack.c.b16 %v2369, %v2365
          %v2478 = vpack.c.b16 %v2370, %v2366
          %v2479 = vpack.c.b16 %v2375, %v2371
          %v2480 = vpack.c.b16 %v2376, %v2372
          %v2481 = vpack.c.b16 %v2377, %v2373
          %v2482 = vpack.c.b16 %v2378, %v2374
          %v2483 = vpack.c.b16 %v2383, %v2379
          %v2484 = vpack.c.b16 %v2384, %v2380
          %v2485 = vpack.c.b16 %v2385, %v2381
          %v2486 = vpack.c.b16 %v2386, %v2382
          %v2487 = vpack.c.b16 %v2391, %v2387
          %v2488 = vpack.c.b16 %v2392, %v2388
          %v2489 = vpack.c.b16 %v2393, %v2389
          %v2490 = vpack.c.b16 %v2394, %v2390
          %v2491 = vpack.c.b16 %v2399, %v2395
          %v2492 = vpack.c.b16 %v2400, %v2396
          %v2493 = vpack.c.b16 %v2401, %v2397
          %v2494 = vpack.c.b16 %v2402, %v2398
          %v2495 = vpack.c.b16 %v2407, %v2403
          %v2496 = vpack.c.b16 %v2408, %v2404
          %v2497 = vpack.c.b16 %v2409, %v2405
          %v2498 = vpack.c.b16 %v2410, %v2406
          %v2499 = vpack.c.b16 %v2415, %v2411
          %v2500 = vpack.c.b16 %v2416, %v2412
          %v2501 = vpack.c.b16 %v2417, %v2413
          %v2502 = vpack.c.b16 %v2418, %v2414
          %v2503 = vpack.c.b16 %v2423, %v2419
          %v2504 = vpack.c.b16 %v2424, %v2420
          %v2505 = vpack.c.b16 %v2425, %v2421
          %v2506 = vpack.c.b16 %v2426, %v2422
          %v2507 = vpack.c.b16 %v2431, %v2427
          %v2508 = vpack.c.b16 %v2432, %v2428
          %v2509 = vpack.c.b16 %v2433, %v2429
          %v2510 = vpack.c.b16 %v2434, %v2430
          %v2511 = vpack.c.b16 %v2439, %v2435
          %v2512 = vpack.c.b16 %v2440, %v2436
          %v2513 = vpack.c.b16 %v2441, %v2437
          %v2514 = vpack.c.b16 %v2442, %v2438
          %v2515 = vpack.c.b16 %v2447, %v2443
          %v2516 = vpack.c.b16 %v2448, %v2444
          %v2517 = vpack.c.b16 %v2449, %v2445
          %v2518 = vpack.c.b16 %v2450, %v2446
          %v2519 = vpack.c.b16 %v2455, %v2451
          %v2520 = vpack.c.b16 %v2456, %v2452
          %v2521 = vpack.c.b16 %v2457, %v2453
          %v2522 = vpack.c.b16 %v2458, %v2454
          %2587 = vmatprep.subr.bf16.mxu0 0
          %2588 = vmatpush1.bf16.msra.mxu0 %v2235
          %2589 = vmatprep.subr.bf16.mxu0 0
          %2590 = vmatpush1.bf16.msra.mxu0 %v2236
          %2591 = vmatprep.subr.bf16.mxu0 0
          %2592 = vmatpush1.bf16.msra.mxu0 %v2237
          %2593 = vmatprep.subr.bf16.mxu0 0
          %2594 = vmatpush1.bf16.msra.mxu0 %v2238
          %2595 = vmatprep.subr.bf16.mxu0 0
          %2596 = vmatpush1.bf16.msra.mxu0 %v2239
          %2597 = vmatprep.subr.bf16.mxu0 0
          %2598 = vmatpush1.bf16.msra.mxu0 %v2240
          %2599 = vmatprep.subr.bf16.mxu0 0
          %2600 = vmatpush1.bf16.msra.mxu0 %v2241
          %2601 = vmatprep.subr.bf16.mxu0 0
          %2602 = vmatpush1.bf16.msra.mxu0 %v2242
          %2603 = vmatprep.subr.bf16.mxu0 0
          %2604 = vmatpush1.bf16.msra.mxu0 %v2243
          %2605 = vmatprep.subr.bf16.mxu0 0
          %2606 = vmatpush1.bf16.msra.mxu0 %v2244
          %2607 = vmatprep.subr.bf16.mxu0 0
          %2608 = vmatpush1.bf16.msra.mxu0 %v2245
          %2609 = vmatprep.subr.bf16.mxu0 0
          %2610 = vmatpush1.bf16.msra.mxu0 %v2246
          %2611 = vmatprep.subr.bf16.mxu0 0
          %2612 = vmatpush1.bf16.msra.mxu0 %v2247
          %2613 = vmatprep.subr.bf16.mxu0 0
          %2614 = vmatpush1.bf16.msra.mxu0 %v2248
          %2615 = vmatprep.subr.bf16.mxu0 0
          %2616 = vmatpush1.bf16.msra.mxu0 %v2249
          %2617 = vmatprep.subr.bf16.mxu0 0
          %2618 = vmatpush1.bf16.msra.mxu0 %v2250
          %2619 = vmatprep.mubr.bf16.mxu0 %v2460
          %2620 = vmatmul.mubr.bf16.gmra.mrb[0].mxu0 %v2459
          %v2621 = vpop.f32.mrb[0].mxu0
          %v2622 = vadd.f32 0.0, %v2621
          %v2623 = vpop.f32.mrb[0].mxu0
          %v2624 = vpop.f32.mrb[0].mxu0
          %v2625 = vadd.f32 0.0, %v2624
          %v2626 = vpop.f32.mrb[0].mxu0
          %2627 = vmatprep.mubr.bf16.mxu0 %v2464
          %2628 = vmatmul.mubr.bf16.gmra.mrb[0].mxu0 %v2463
          %v2629 = vpop.f32.mrb[0].mxu0
          %v2630 = vadd.f32 0.0, %v2629
          %v2631 = vpop.f32.mrb[0].mxu0
          %v2632 = vpop.f32.mrb[0].mxu0
          %v2633 = vadd.f32 0.0, %v2632
          %v2634 = vpop.f32.mrb[0].mxu0
          %2635 = vmatprep.mubr.bf16.mxu0 %v2468
          %2636 = vmatmul.mubr.bf16.gmra.mrb[0].mxu0 %v2467
          %v2637 = vpop.f32.mrb[0].mxu0
          %v2638 = vadd.f32 0.0, %v2637
          %v2639 = vpop.f32.mrb[0].mxu0
          %v2640 = vpop.f32.mrb[0].mxu0
          %v2641 = vadd.f32 0.0, %v2640
          %v2642 = vpop.f32.mrb[0].mxu0
          %2643 = vmatprep.mubr.bf16.mxu0 %v2472
          %2644 = vmatmul.mubr.bf16.gmra.mrb[0].mxu0 %v2471
          %v2645 = vpop.f32.mrb[0].mxu0
          %v2646 = vadd.f32 0.0, %v2645
          %v2647 = vpop.f32.mrb[0].mxu0
          %v2648 = vpop.f32.mrb[0].mxu0
          %v2649 = vadd.f32 0.0, %v2648
          %v2650 = vpop.f32.mrb[0].mxu0
          %2651 = vmatprep.mubr.bf16.mxu0 %v2476
          %2652 = vmatmul.mubr.bf16.gmra.mrb[0].mxu0 %v2475
          %v2653 = vpop.f32.mrb[0].mxu0
          %v2654 = vadd.f32 0.0, %v2653
          %v2655 = vpop.f32.mrb[0].mxu0
          %v2656 = vpop.f32.mrb[0].mxu0
          %v2657 = vadd.f32 0.0, %v2656
          %v2658 = vpop.f32.mrb[0].mxu0
          %2659 = vmatprep.mubr.bf16.mxu0 %v2480
          %2660 = vmatmul.mubr.bf16.gmra.mrb[0].mxu0 %v2479
          %v2661 = vpop.f32.mrb[0].mxu0
          %v2662 = vadd.f32 0.0, %v2661
          %v2663 = vpop.f32.mrb[0].mxu0
          %v2664 = vpop.f32.mrb[0].mxu0
          %v2665 = vadd.f32 0.0, %v2664
          %v2666 = vpop.f32.mrb[0].mxu0
          %2667 = vmatprep.mubr.bf16.mxu0 %v2484
          %2668 = vmatmul.mubr.bf16.gmra.mrb[0].mxu0 %v2483
          %v2669 = vpop.f32.mrb[0].mxu0
          %v2670 = vadd.f32 0.0, %v2669
          %v2671 = vpop.f32.mrb[0].mxu0
          %v2672 = vpop.f32.mrb[0].mxu0
          %v2673 = vadd.f32 0.0, %v2672
          %v2674 = vpop.f32.mrb[0].mxu0
          %2675 = vmatprep.mubr.bf16.mxu0 %v2488
          %2676 = vmatmul.mubr.bf16.gmra.mrb[0].mxu0 %v2487
          %v2677 = vpop.f32.mrb[0].mxu0
          %v2678 = vadd.f32 0.0, %v2677
          %v2679 = vpop.f32.mrb[0].mxu0
          %v2680 = vpop.f32.mrb[0].mxu0
          %v2681 = vadd.f32 0.0, %v2680
          %v2682 = vpop.f32.mrb[0].mxu0
          %2683 = vmatprep.mubr.bf16.mxu0 %v2492
          %2684 = vmatmul.mubr.bf16.gmra.mrb[0].mxu0 %v2491
          %v2685 = vpop.f32.mrb[0].mxu0
          %v2686 = vadd.f32 0.0, %v2685
          %v2687 = vpop.f32.mrb[0].mxu0
          %v2688 = vpop.f32.mrb[0].mxu0
          %v2689 = vadd.f32 0.0, %v2688
          %v2690 = vpop.f32.mrb[0].mxu0
          %2691 = vmatprep.mubr.bf16.mxu0 %v2496
          %2692 = vmatmul.mubr.bf16.gmra.mrb[0].mxu0 %v2495
          %v2693 = vpop.f32.mrb[0].mxu0
          %v2694 = vadd.f32 0.0, %v2693
          %v2695 = vpop.f32.mrb[0].mxu0
          %v2696 = vpop.f32.mrb[0].mxu0
          %v2697 = vadd.f32 0.0, %v2696
          %v2698 = vpop.f32.mrb[0].mxu0
          %2699 = vmatprep.mubr.bf16.mxu0 %v2500
          %2700 = vmatmul.mubr.bf16.gmra.mrb[0].mxu0 %v2499
          %v2701 = vpop.f32.mrb[0].mxu0
          %v2702 = vadd.f32 0.0, %v2701
          %v2703 = vpop.f32.mrb[0].mxu0
          %v2704 = vpop.f32.mrb[0].mxu0
          %v2705 = vadd.f32 0.0, %v2704
          %v2706 = vpop.f32.mrb[0].mxu0
          %2707 = vmatprep.mubr.bf16.mxu0 %v2504
          %2708 = vmatmul.mubr.bf16.gmra.mrb[0].mxu0 %v2503
          %v2709 = vpop.f32.mrb[0].mxu0
          %v2710 = vadd.f32 0.0, %v2709
          %v2711 = vpop.f32.mrb[0].mxu0
          %v2712 = vpop.f32.mrb[0].mxu0
          %v2713 = vadd.f32 0.0, %v2712
          %v2714 = vpop.f32.mrb[0].mxu0
          %2715 = vmatprep.mubr.bf16.mxu0 %v2508
          %2716 = vmatmul.mubr.bf16.gmra.mrb[0].mxu0 %v2507
          %v2717 = vpop.f32.mrb[0].mxu0
          %v2718 = vadd.f32 0.0, %v2717
          %v2719 = vpop.f32.mrb[0].mxu0
          %v2720 = vpop.f32.mrb[0].mxu0
          %v2721 = vadd.f32 0.0, %v2720
          %v2722 = vpop.f32.mrb[0].mxu0
          %2723 = vmatprep.mubr.bf16.mxu0 %v2512
          %2724 = vmatmul.mubr.bf16.gmra.mrb[0].mxu0 %v2511
          %v2725 = vpop.f32.mrb[0].mxu0
          %v2726 = vadd.f32 0.0, %v2725
          %v2727 = vpop.f32.mrb[0].mxu0
          %v2728 = vpop.f32.mrb[0].mxu0
          %v2729 = vadd.f32 0.0, %v2728
          %v2730 = vpop.f32.mrb[0].mxu0
          %2731 = vmatprep.mubr.bf16.mxu0 %v2516
          %2732 = vmatmul.mubr.bf16.gmra.mrb[0].mxu0 %v2515
          %v2733 = vpop.f32.mrb[0].mxu0
          %v2734 = vadd.f32 0.0, %v2733
          %v2735 = vpop.f32.mrb[0].mxu0
          %v2736 = vpop.f32.mrb[0].mxu0
          %v2737 = vadd.f32 0.0, %v2736
          %v2738 = vpop.f32.mrb[0].mxu0
          %2739 = vmatprep.mubr.bf16.mxu0 %v2520
          %2740 = vmatmul.mubr.bf16.gmra.mrb[0].mxu0 %v2519
          %v2741 = vpop.f32.mrb[0].mxu0
          %v2742 = vadd.f32 0.0, %v2741
          %v2743 = vpop.f32.mrb[0].mxu0
          %v2744 = vpop.f32.mrb[0].mxu0
          %v2745 = vadd.f32 0.0, %v2744
          %v2746 = vpop.f32.mrb[0].mxu0
          %2747 = vdwg.mxu0
          %2748 = vmatprep.subr.bf16.mxu0 0
          %2749 = vmatpush1.bf16.msra.mxu0 %v2251
          %2750 = vmatprep.subr.bf16.mxu0 0
          %2751 = vmatpush1.bf16.msra.mxu0 %v2252
          %2752 = vmatprep.subr.bf16.mxu0 0
          %2753 = vmatpush1.bf16.msra.mxu0 %v2253
          %2754 = vmatprep.subr.bf16.mxu0 0
          %2755 = vmatpush1.bf16.msra.mxu0 %v2254
          %2756 = vmatprep.subr.bf16.mxu0 0
          %2757 = vmatpush1.bf16.msra.mxu0 %v2255
          %2758 = vmatprep.subr.bf16.mxu0 0
          %2759 = vmatpush1.bf16.msra.mxu0 %v2256
          %2760 = vmatprep.subr.bf16.mxu0 0
          %2761 = vmatpush1.bf16.msra.mxu0 %v2257
          %2762 = vmatprep.subr.bf16.mxu0 0
          %2763 = vmatpush1.bf16.msra.mxu0 %v2258
          %2764 = vmatprep.subr.bf16.mxu0 0
          %2765 = vmatpush1.bf16.msra.mxu0 %v2259
          %2766 = vmatprep.subr.bf16.mxu0 0
          %2767 = vmatpush1.bf16.msra.mxu0 %v2260
          %2768 = vmatprep.subr.bf16.mxu0 0
          %2769 = vmatpush1.bf16.msra.mxu0 %v2261
          %2770 = vmatprep.subr.bf16.mxu0 0
          %2771 = vmatpush1.bf16.msra.mxu0 %v2262
          %2772 = vmatprep.subr.bf16.mxu0 0
          %2773 = vmatpush1.bf16.msra.mxu0 %v2263
          %2774 = vmatprep.subr.bf16.mxu0 0
          %2775 = vmatpush1.bf16.msra.mxu0 %v2264
          %2776 = vmatprep.subr.bf16.mxu0 0
          %2777 = vmatpush1.bf16.msra.mxu0 %v2265
          %2778 = vmatprep.subr.bf16.mxu0 0
          %2779 = vmatpush1.bf16.msra.mxu0 %v2266
          %2780 = vmatprep.mubr.bf16.mxu0 %v2462
          %2781 = vmatmul.mubr.bf16.gmra.mrb[0].mxu0 %v2461
          %v2782 = vpop.f32.mrb[0].mxu0
          %v2783 = vadd.f32 %v2622, %v2782
          %v2784 = vpop.f32.mrb[0].mxu0
          %v2785 = vpop.f32.mrb[0].mxu0
          %v2786 = vadd.f32 %v2625, %v2785
          %v2787 = vpop.f32.mrb[0].mxu0
          %2788 = vmatprep.mubr.bf16.mxu0 %v2466
          %2789 = vmatmul.mubr.bf16.gmra.mrb[0].mxu0 %v2465
          %v2790 = vpop.f32.mrb[0].mxu0
          %v2791 = vadd.f32 %v2630, %v2790
          %v2792 = vpop.f32.mrb[0].mxu0
          %v2793 = vpop.f32.mrb[0].mxu0
          %v2794 = vadd.f32 %v2633, %v2793
          %v2795 = vpop.f32.mrb[0].mxu0
          %2796 = vmatprep.mubr.bf16.mxu0 %v2470
          %2797 = vmatmul.mubr.bf16.gmra.mrb[0].mxu0 %v2469
          %v2798 = vpop.f32.mrb[0].mxu0
          %v2799 = vadd.f32 %v2638, %v2798
          %v2800 = vpop.f32.mrb[0].mxu0
          %v2801 = vpop.f32.mrb[0].mxu0
          %v2802 = vadd.f32 %v2641, %v2801
          %v2803 = vpop.f32.mrb[0].mxu0
          %2804 = vmatprep.mubr.bf16.mxu0 %v2474
          %2805 = vmatmul.mubr.bf16.gmra.mrb[0].mxu0 %v2473
          %v2806 = vpop.f32.mrb[0].mxu0
          %v2807 = vadd.f32 %v2646, %v2806
          %v2808 = vpop.f32.mrb[0].mxu0
          %v2809 = vpop.f32.mrb[0].mxu0
          %v2810 = vadd.f32 %v2649, %v2809
          %v2811 = vpop.f32.mrb[0].mxu0
          %2812 = vmatprep.mubr.bf16.mxu0 %v2478
          %2813 = vmatmul.mubr.bf16.gmra.mrb[0].mxu0 %v2477
          %v2814 = vpop.f32.mrb[0].mxu0
          %v2815 = vadd.f32 %v2654, %v2814
          %v2816 = vpop.f32.mrb[0].mxu0
          %v2817 = vpop.f32.mrb[0].mxu0
          %v2818 = vadd.f32 %v2657, %v2817
          %v2819 = vpop.f32.mrb[0].mxu0
          %2820 = vmatprep.mubr.bf16.mxu0 %v2482
          %2821 = vmatmul.mubr.bf16.gmra.mrb[0].mxu0 %v2481
          %v2822 = vpop.f32.mrb[0].mxu0
          %v2823 = vadd.f32 %v2662, %v2822
          %v2824 = vpop.f32.mrb[0].mxu0
          %v2825 = vpop.f32.mrb[0].mxu0
          %v2826 = vadd.f32 %v2665, %v2825
          %v2827 = vpop.f32.mrb[0].mxu0
          %2828 = vmatprep.mubr.bf16.mxu0 %v2486
          %2829 = vmatmul.mubr.bf16.gmra.mrb[0].mxu0 %v2485
          %v2830 = vpop.f32.mrb[0].mxu0
          %v2831 = vadd.f32 %v2670, %v2830
          %v2832 = vpop.f32.mrb[0].mxu0
          %v2833 = vpop.f32.mrb[0].mxu0
          %v2834 = vadd.f32 %v2673, %v2833
          %v2835 = vpop.f32.mrb[0].mxu0
          %2836 = vmatprep.mubr.bf16.mxu0 %v2490
          %2837 = vmatmul.mubr.bf16.gmra.mrb[0].mxu0 %v2489
          %v2838 = vpop.f32.mrb[0].mxu0
          %v2839 = vadd.f32 %v2678, %v2838
          %v2840 = vpop.f32.mrb[0].mxu0
          %v2841 = vpop.f32.mrb[0].mxu0
          %v2842 = vadd.f32 %v2681, %v2841
          %v2843 = vpop.f32.mrb[0].mxu0
          %2844 = vmatprep.mubr.bf16.mxu0 %v2494
          %2845 = vmatmul.mubr.bf16.gmra.mrb[0].mxu0 %v2493
          %v2846 = vpop.f32.mrb[0].mxu0
          %v2847 = vadd.f32 %v2686, %v2846
          %v2848 = vpop.f32.mrb[0].mxu0
          %v2849 = vpop.f32.mrb[0].mxu0
          %v2850 = vadd.f32 %v2689, %v2849
          %v2851 = vpop.f32.mrb[0].mxu0
          %2852 = vmatprep.mubr.bf16.mxu0 %v2498
          %2853 = vmatmul.mubr.bf16.gmra.mrb[0].mxu0 %v2497
          %v2854 = vpop.f32.mrb[0].mxu0
          %v2855 = vadd.f32 %v2694, %v2854
          %v2856 = vpop.f32.mrb[0].mxu0
          %v2857 = vpop.f32.mrb[0].mxu0
          %v2858 = vadd.f32 %v2697, %v2857
          %v2859 = vpop.f32.mrb[0].mxu0
          %2860 = vmatprep.mubr.bf16.mxu0 %v2502
          %2861 = vmatmul.mubr.bf16.gmra.mrb[0].mxu0 %v2501
          %v2862 = vpop.f32.mrb[0].mxu0
          %v2863 = vadd.f32 %v2702, %v2862
          %v2864 = vpop.f32.mrb[0].mxu0
          %v2865 = vpop.f32.mrb[0].mxu0
          %v2866 = vadd.f32 %v2705, %v2865
          %v2867 = vpop.f32.mrb[0].mxu0
          %2868 = vmatprep.mubr.bf16.mxu0 %v2506
          %2869 = vmatmul.mubr.bf16.gmra.mrb[0].mxu0 %v2505
          %v2870 = vpop.f32.mrb[0].mxu0
          %v2871 = vadd.f32 %v2710, %v2870
          %v2872 = vpop.f32.mrb[0].mxu0
          %v2873 = vpop.f32.mrb[0].mxu0
          %v2874 = vadd.f32 %v2713, %v2873
          %v2875 = vpop.f32.mrb[0].mxu0
          %2876 = vmatprep.mubr.bf16.mxu0 %v2510
          %2877 = vmatmul.mubr.bf16.gmra.mrb[0].mxu0 %v2509
          %v2878 = vpop.f32.mrb[0].mxu0
          %v2879 = vadd.f32 %v2718, %v2878
          %v2880 = vpop.f32.mrb[0].mxu0
          %v2881 = vpop.f32.mrb[0].mxu0
          %v2882 = vadd.f32 %v2721, %v2881
          %v2883 = vpop.f32.mrb[0].mxu0
          %2884 = vmatprep.mubr.bf16.mxu0 %v2514
          %2885 = vmatmul.mubr.bf16.gmra.mrb[0].mxu0 %v2513
          %v2886 = vpop.f32.mrb[0].mxu0
          %v2887 = vadd.f32 %v2726, %v2886
          %v2888 = vpop.f32.mrb[0].mxu0
          %v2889 = vpop.f32.mrb[0].mxu0
          %v2890 = vadd.f32 %v2729, %v2889
          %v2891 = vpop.f32.mrb[0].mxu0
          %2892 = vmatprep.mubr.bf16.mxu0 %v2518
          %2893 = vmatmul.mubr.bf16.gmra.mrb[0].mxu0 %v2517
          %v2894 = vpop.f32.mrb[0].mxu0
          %v2895 = vadd.f32 %v2734, %v2894
          %v2896 = vpop.f32.mrb[0].mxu0
          %v2897 = vpop.f32.mrb[0].mxu0
          %v2898 = vadd.f32 %v2737, %v2897
          %v2899 = vpop.f32.mrb[0].mxu0
          %2900 = vmatprep.mubr.bf16.mxu0 %v2522
          %2901 = vmatmul.mubr.bf16.gmra.mrb[0].mxu0 %v2521
          %v2902 = vpop.f32.mrb[0].mxu0
          %v2903 = vadd.f32 %v2742, %v2902
          %v2904 = vpop.f32.mrb[0].mxu0
          %v2905 = vpop.f32.mrb[0].mxu0
          %v2906 = vadd.f32 %v2745, %v2905
          %v2907 = vpop.f32.mrb[0].mxu0
          %2908 = vdwg.mxu0
          %s2909 = sshra.s32 %s431, 4
          %s2910 = sand.u32 %s431, 15
          %s2911 = smul.addr %s2909, 8
          %s2912 = scalar_lea.vmem [#allocation2], %s2911
          %v2913 = vld [vmem:[%s2912] sm:$0xff]
          %v2914 = vld [vmem:[%s2912 + $0x8] sm:$0xff]
          %v2915 = vld [vmem:[%s2912 + $0x10] sm:$0xff]
          %v2916 = vld [vmem:[%s2912 + $0x18] sm:$0xff]
          %v2917 = vld [vmem:[%s2912 + $0x20] sm:$0xff]
          %v2918 = vld [vmem:[%s2912 + $0x28] sm:$0xff]
          %v2919 = vld [vmem:[%s2912 + $0x30] sm:$0xff]
          %v2920 = vld [vmem:[%s2912 + $0x38] sm:$0xff]
          %v2921 = vld [vmem:[%s2912 + $0x40] sm:$0xff]
          %v2922 = vld [vmem:[%s2912 + $0x48] sm:$0xff]
          %v2923 = vld [vmem:[%s2912 + $0x50] sm:$0xff]
          %v2924 = vld [vmem:[%s2912 + $0x58] sm:$0xff]
          %v2925 = vld [vmem:[%s2912 + $0x60] sm:$0xff]
          %v2926 = vld [vmem:[%s2912 + $0x68] sm:$0xff]
          %v2927 = vld [vmem:[%s2912 + $0x70] sm:$0xff]
          %v2928 = vld [vmem:[%s2912 + $0x78] sm:$0xff]
          %v2929 = vpack.c.bf16 %v2786, %v2783
          %v2930 = vpack.c.bf16 %v2794, %v2791
          %v2931 = vpack.c.bf16 %v2802, %v2799
          %v2932 = vpack.c.bf16 %v2810, %v2807
          %v2933 = vpack.c.bf16 %v2818, %v2815
          %v2934 = vpack.c.bf16 %v2826, %v2823
          %v2935 = vpack.c.bf16 %v2834, %v2831
          %v2936 = vpack.c.bf16 %v2842, %v2839
          %v2937 = vpack.c.bf16 %v2850, %v2847
          %v2938 = vpack.c.bf16 %v2858, %v2855
          %v2939 = vpack.c.bf16 %v2866, %v2863
          %v2940 = vpack.c.bf16 %v2874, %v2871
          %v2941 = vpack.c.bf16 %v2882, %v2879
          %v2942 = vpack.c.bf16 %v2890, %v2887
          %v2943 = vpack.c.bf16 %v2898, %v2895
          %v2944 = vpack.c.bf16 %v2906, %v2903
          %v2961 = vunpack.c.l.b16 %v512
          %v2962 = vunpack.c.l.b16 %v513
          %v2963 = vunpack.c.l.b16 %v514
          %v2964 = vunpack.c.l.b16 %v515
          %v2965 = vunpack.c.l.b16 %v516
          %v2966 = vunpack.c.l.b16 %v517
          %v2967 = vunpack.c.l.b16 %v518
          %v2968 = vunpack.c.l.b16 %v519
          %v2969 = vunpack.c.l.b16 %v520
          %v2970 = vunpack.c.l.b16 %v521
          %v2971 = vunpack.c.l.b16 %v522
          %v2972 = vunpack.c.l.b16 %v523
          %v2973 = vunpack.c.l.b16 %v524
          %v2974 = vunpack.c.l.b16 %v525
          %v2975 = vunpack.c.l.b16 %v526
          %v2976 = vunpack.c.l.b16 %v527
          %v2977 = vpack.c.b16 %v2962, %v2961
          %v2978 = vpack.c.b16 %v2964, %v2963
          %v2979 = vpack.c.b16 %v2966, %v2965
          %v2980 = vpack.c.b16 %v2968, %v2967
          %v2981 = vpack.c.b16 %v2970, %v2969
          %v2982 = vpack.c.b16 %v2972, %v2971
          %v2983 = vpack.c.b16 %v2974, %v2973
          %v2984 = vpack.c.b16 %v2976, %v2975
          %2993 = vmatprep.subr.bf16.mxu0 0
          %2994 = vmatpush1.bf16.msra.mxu0 %v2977
          %2995 = vmatprep.subr.bf16.mxu0 0
          %2996 = vmatpush1.bf16.msra.mxu0 %v2978
          %2997 = vmatprep.subr.bf16.mxu0 0
          %2998 = vmatpush1.bf16.msra.mxu0 %v2979
          %2999 = vmatprep.subr.bf16.mxu0 0
          %3000 = vmatpush1.bf16.msra.mxu0 %v2980
          %3001 = vmatprep.subr.bf16.mxu0 0
          %3002 = vmatpush1.bf16.msra.mxu0 %v2981
          %3003 = vmatprep.subr.bf16.mxu0 0
          %3004 = vmatpush1.bf16.msra.mxu0 %v2982
          %3005 = vmatprep.subr.bf16.mxu0 0
          %3006 = vmatpush1.bf16.msra.mxu0 %v2983
          %3007 = vmatprep.subr.bf16.mxu0 0
          %3008 = vmatpush1.bf16.msra.mxu0 %v2984
          %3009 = vmatprep.subr.bf16.mxu0 0
          %3010 = vmatpush1.bf16.msra.mxu0 0
          %3011 = vmatprep.subr.bf16.mxu0 0
          %3012 = vmatpush1.bf16.msra.mxu0 0
          %3013 = vmatprep.subr.bf16.mxu0 0
          %3014 = vmatpush1.bf16.msra.mxu0 0
          %3015 = vmatprep.subr.bf16.mxu0 0
          %3016 = vmatpush1.bf16.msra.mxu0 0
          %3017 = vmatprep.subr.bf16.mxu0 0
          %3018 = vmatpush1.bf16.msra.mxu0 0
          %3019 = vmatprep.subr.bf16.mxu0 0
          %3020 = vmatpush1.bf16.msra.mxu0 0
          %3021 = vmatprep.subr.bf16.mxu0 0
          %3022 = vmatpush1.bf16.msra.mxu0 0
          %3023 = vmatprep.subr.bf16.mxu0 0
          %3024 = vmatpush1.bf16.msra.mxu0 0
          %3025 = vmatprep.mubr.bf16.mxu0 0
          %3026 = vmatmul.mubr.bf16.gmra.mrb[0].mxu0 %v2929
          %v3027 = vpop.f32.mrb[0].mxu0
          %v3028 = vadd.f32 0.0, %v3027
          %v3029 = vpop.f32.mrb[0].mxu0
          %v3030 = vpop.f32.mrb[0].mxu0
          %v3031 = vadd.f32 0.0, %v3030
          %v3032 = vpop.f32.mrb[0].mxu0
          %3033 = vmatprep.mubr.bf16.mxu0 0
          %3034 = vmatmul.mubr.bf16.gmra.mrb[0].mxu0 %v2930
          %v3035 = vpop.f32.mrb[0].mxu0
          %v3036 = vadd.f32 0.0, %v3035
          %v3037 = vpop.f32.mrb[0].mxu0
          %v3038 = vpop.f32.mrb[0].mxu0
          %v3039 = vadd.f32 0.0, %v3038
          %v3040 = vpop.f32.mrb[0].mxu0
          %3041 = vmatprep.mubr.bf16.mxu0 0
          %3042 = vmatmul.mubr.bf16.gmra.mrb[0].mxu0 %v2931
          %v3043 = vpop.f32.mrb[0].mxu0
          %v3044 = vadd.f32 0.0, %v3043
          %v3045 = vpop.f32.mrb[0].mxu0
          %v3046 = vpop.f32.mrb[0].mxu0
          %v3047 = vadd.f32 0.0, %v3046
          %v3048 = vpop.f32.mrb[0].mxu0
          %3049 = vmatprep.mubr.bf16.mxu0 0
          %3050 = vmatmul.mubr.bf16.gmra.mrb[0].mxu0 %v2932
          %v3051 = vpop.f32.mrb[0].mxu0
          %v3052 = vadd.f32 0.0, %v3051
          %v3053 = vpop.f32.mrb[0].mxu0
          %v3054 = vpop.f32.mrb[0].mxu0
          %v3055 = vadd.f32 0.0, %v3054
          %v3056 = vpop.f32.mrb[0].mxu0
          %3057 = vmatprep.mubr.bf16.mxu0 0
          %3058 = vmatmul.mubr.bf16.gmra.mrb[0].mxu0 %v2933
          %v3059 = vpop.f32.mrb[0].mxu0
          %v3060 = vadd.f32 0.0, %v3059
          %v3061 = vpop.f32.mrb[0].mxu0
          %v3062 = vpop.f32.mrb[0].mxu0
          %v3063 = vadd.f32 0.0, %v3062
          %v3064 = vpop.f32.mrb[0].mxu0
          %3065 = vmatprep.mubr.bf16.mxu0 0
          %3066 = vmatmul.mubr.bf16.gmra.mrb[0].mxu0 %v2934
          %v3067 = vpop.f32.mrb[0].mxu0
          %v3068 = vadd.f32 0.0, %v3067
          %v3069 = vpop.f32.mrb[0].mxu0
          %v3070 = vpop.f32.mrb[0].mxu0
          %v3071 = vadd.f32 0.0, %v3070
          %v3072 = vpop.f32.mrb[0].mxu0
          %3073 = vmatprep.mubr.bf16.mxu0 0
          %3074 = vmatmul.mubr.bf16.gmra.mrb[0].mxu0 %v2935
          %v3075 = vpop.f32.mrb[0].mxu0
          %v3076 = vadd.f32 0.0, %v3075
          %v3077 = vpop.f32.mrb[0].mxu0
          %v3078 = vpop.f32.mrb[0].mxu0
          %v3079 = vadd.f32 0.0, %v3078
          %v3080 = vpop.f32.mrb[0].mxu0
          %3081 = vmatprep.mubr.bf16.mxu0 0
          %3082 = vmatmul.mubr.bf16.gmra.mrb[0].mxu0 %v2936
          %v3083 = vpop.f32.mrb[0].mxu0
          %v3084 = vadd.f32 0.0, %v3083
          %v3085 = vpop.f32.mrb[0].mxu0
          %v3086 = vpop.f32.mrb[0].mxu0
          %v3087 = vadd.f32 0.0, %v3086
          %v3088 = vpop.f32.mrb[0].mxu0
          %3089 = vmatprep.mubr.bf16.mxu0 0
          %3090 = vmatmul.mubr.bf16.gmra.mrb[0].mxu0 %v2937
          %v3091 = vpop.f32.mrb[0].mxu0
          %v3092 = vadd.f32 0.0, %v3091
          %v3093 = vpop.f32.mrb[0].mxu0
          %v3094 = vpop.f32.mrb[0].mxu0
          %v3095 = vadd.f32 0.0, %v3094
          %v3096 = vpop.f32.mrb[0].mxu0
          %3097 = vmatprep.mubr.bf16.mxu0 0
          %3098 = vmatmul.mubr.bf16.gmra.mrb[0].mxu0 %v2938
          %v3099 = vpop.f32.mrb[0].mxu0
          %v3100 = vadd.f32 0.0, %v3099
          %v3101 = vpop.f32.mrb[0].mxu0
          %v3102 = vpop.f32.mrb[0].mxu0
          %v3103 = vadd.f32 0.0, %v3102
          %v3104 = vpop.f32.mrb[0].mxu0
          %3105 = vmatprep.mubr.bf16.mxu0 0
          %3106 = vmatmul.mubr.bf16.gmra.mrb[0].mxu0 %v2939
          %v3107 = vpop.f32.mrb[0].mxu0
          %v3108 = vadd.f32 0.0, %v3107
          %v3109 = vpop.f32.mrb[0].mxu0
          %v3110 = vpop.f32.mrb[0].mxu0
          %v3111 = vadd.f32 0.0, %v3110
          %v3112 = vpop.f32.mrb[0].mxu0
          %3113 = vmatprep.mubr.bf16.mxu0 0
          %3114 = vmatmul.mubr.bf16.gmra.mrb[0].mxu0 %v2940
          %v3115 = vpop.f32.mrb[0].mxu0
          %v3116 = vadd.f32 0.0, %v3115
          %v3117 = vpop.f32.mrb[0].mxu0
          %v3118 = vpop.f32.mrb[0].mxu0
          %v3119 = vadd.f32 0.0, %v3118
          %v3120 = vpop.f32.mrb[0].mxu0
          %3121 = vmatprep.mubr.bf16.mxu0 0
          %3122 = vmatmul.mubr.bf16.gmra.mrb[0].mxu0 %v2941
          %v3123 = vpop.f32.mrb[0].mxu0
          %v3124 = vadd.f32 0.0, %v3123
          %v3125 = vpop.f32.mrb[0].mxu0
          %v3126 = vpop.f32.mrb[0].mxu0
          %v3127 = vadd.f32 0.0, %v3126
          %v3128 = vpop.f32.mrb[0].mxu0
          %3129 = vmatprep.mubr.bf16.mxu0 0
          %3130 = vmatmul.mubr.bf16.gmra.mrb[0].mxu0 %v2942
          %v3131 = vpop.f32.mrb[0].mxu0
          %v3132 = vadd.f32 0.0, %v3131
          %v3133 = vpop.f32.mrb[0].mxu0
          %v3134 = vpop.f32.mrb[0].mxu0
          %v3135 = vadd.f32 0.0, %v3134
          %v3136 = vpop.f32.mrb[0].mxu0
          %3137 = vmatprep.mubr.bf16.mxu0 0
          %3138 = vmatmul.mubr.bf16.gmra.mrb[0].mxu0 %v2943
          %v3139 = vpop.f32.mrb[0].mxu0
          %v3140 = vadd.f32 0.0, %v3139
          %v3141 = vpop.f32.mrb[0].mxu0
          %v3142 = vpop.f32.mrb[0].mxu0
          %v3143 = vadd.f32 0.0, %v3142
          %v3144 = vpop.f32.mrb[0].mxu0
          %3145 = vmatprep.mubr.bf16.mxu0 0
          %3146 = vmatmul.mubr.bf16.gmra.mrb[0].mxu0 %v2944
          %v3147 = vpop.f32.mrb[0].mxu0
          %v3148 = vadd.f32 0.0, %v3147
          %v3149 = vpop.f32.mrb[0].mxu0
          %v3150 = vpop.f32.mrb[0].mxu0
          %v3151 = vadd.f32 0.0, %v3150
          %v3152 = vpop.f32.mrb[0].mxu0
          %3153 = vdwg.mxu0
          %v3170 = vunpack.c.l.b16 %v496
          %v3171 = vunpack.c.l.b16 %v497
          %v3172 = vunpack.c.l.b16 %v498
          %v3173 = vunpack.c.l.b16 %v499
          %v3174 = vunpack.c.l.b16 %v500
          %v3175 = vunpack.c.l.b16 %v501
          %v3176 = vunpack.c.l.b16 %v502
          %v3177 = vunpack.c.l.b16 %v503
          %v3178 = vunpack.c.l.b16 %v504
          %v3179 = vunpack.c.l.b16 %v505
          %v3180 = vunpack.c.l.b16 %v506
          %v3181 = vunpack.c.l.b16 %v507
          %v3182 = vunpack.c.l.b16 %v508
          %v3183 = vunpack.c.l.b16 %v509
          %v3184 = vunpack.c.l.b16 %v510
          %v3185 = vunpack.c.l.b16 %v511
          %v3186 = vpack.c.b16 %v3171, %v3170
          %v3187 = vpack.c.b16 %v3173, %v3172
          %v3188 = vpack.c.b16 %v3175, %v3174
          %v3189 = vpack.c.b16 %v3177, %v3176
          %v3190 = vpack.c.b16 %v3179, %v3178
          %v3191 = vpack.c.b16 %v3181, %v3180
          %v3192 = vpack.c.b16 %v3183, %v3182
          %v3193 = vpack.c.b16 %v3185, %v3184
          %3202 = vmatprep.subr.bf16.mxu0 0
          %3203 = vmatpush1.bf16.msra.mxu0 %v3186
          %3204 = vmatprep.subr.bf16.mxu0 0
          %3205 = vmatpush1.bf16.msra.mxu0 %v3187
          %3206 = vmatprep.subr.bf16.mxu0 0
          %3207 = vmatpush1.bf16.msra.mxu0 %v3188
          %3208 = vmatprep.subr.bf16.mxu0 0
          %3209 = vmatpush1.bf16.msra.mxu0 %v3189
          %3210 = vmatprep.subr.bf16.mxu0 0
          %3211 = vmatpush1.bf16.msra.mxu0 %v3190
          %3212 = vmatprep.subr.bf16.mxu0 0
          %3213 = vmatpush1.bf16.msra.mxu0 %v3191
          %3214 = vmatprep.subr.bf16.mxu0 0
          %3215 = vmatpush1.bf16.msra.mxu0 %v3192
          %3216 = vmatprep.subr.bf16.mxu0 0
          %3217 = vmatpush1.bf16.msra.mxu0 %v3193
          %3218 = vmatprep.subr.bf16.mxu0 0
          %3219 = vmatpush1.bf16.msra.mxu0 0
          %3220 = vmatprep.subr.bf16.mxu0 0
          %3221 = vmatpush1.bf16.msra.mxu0 0
          %3222 = vmatprep.subr.bf16.mxu0 0
          %3223 = vmatpush1.bf16.msra.mxu0 0
          %3224 = vmatprep.subr.bf16.mxu0 0
          %3225 = vmatpush1.bf16.msra.mxu0 0
          %3226 = vmatprep.subr.bf16.mxu0 0
          %3227 = vmatpush1.bf16.msra.mxu0 0
          %3228 = vmatprep.subr.bf16.mxu0 0
          %3229 = vmatpush1.bf16.msra.mxu0 0
          %3230 = vmatprep.subr.bf16.mxu0 0
          %3231 = vmatpush1.bf16.msra.mxu0 0
          %3232 = vmatprep.subr.bf16.mxu0 0
          %3233 = vmatpush1.bf16.msra.mxu0 0
          %3234 = vmatprep.mubr.bf16.mxu0 0
          %3235 = vmatmul.mubr.bf16.gmra.mrb[0].mxu0 %v2913
          %v3236 = vpop.f32.mrb[0].mxu0
          %v3237 = vadd.f32 %v3028, %v3236
          %v3238 = vpop.f32.mrb[0].mxu0
          %v3239 = vpop.f32.mrb[0].mxu0
          %v3240 = vadd.f32 %v3031, %v3239
          %v3241 = vpop.f32.mrb[0].mxu0
          %3242 = vmatprep.mubr.bf16.mxu0 0
          %3243 = vmatmul.mubr.bf16.gmra.mrb[0].mxu0 %v2914
          %v3244 = vpop.f32.mrb[0].mxu0
          %v3245 = vadd.f32 %v3036, %v3244
          %v3246 = vpop.f32.mrb[0].mxu0
          %v3247 = vpop.f32.mrb[0].mxu0
          %v3248 = vadd.f32 %v3039, %v3247
          %v3249 = vpop.f32.mrb[0].mxu0
          %3250 = vmatprep.mubr.bf16.mxu0 0
          %3251 = vmatmul.mubr.bf16.gmra.mrb[0].mxu0 %v2915
          %v3252 = vpop.f32.mrb[0].mxu0
          %v3253 = vadd.f32 %v3044, %v3252
          %v3254 = vpop.f32.mrb[0].mxu0
          %v3255 = vpop.f32.mrb[0].mxu0
          %v3256 = vadd.f32 %v3047, %v3255
          %v3257 = vpop.f32.mrb[0].mxu0
          %3258 = vmatprep.mubr.bf16.mxu0 0
          %3259 = vmatmul.mubr.bf16.gmra.mrb[0].mxu0 %v2916
          %v3260 = vpop.f32.mrb[0].mxu0
          %v3261 = vadd.f32 %v3052, %v3260
          %v3262 = vpop.f32.mrb[0].mxu0
          %v3263 = vpop.f32.mrb[0].mxu0
          %v3264 = vadd.f32 %v3055, %v3263
          %v3265 = vpop.f32.mrb[0].mxu0
          %3266 = vmatprep.mubr.bf16.mxu0 0
          %3267 = vmatmul.mubr.bf16.gmra.mrb[0].mxu0 %v2917
          %v3268 = vpop.f32.mrb[0].mxu0
          %v3269 = vadd.f32 %v3060, %v3268
          %v3270 = vpop.f32.mrb[0].mxu0
          %v3271 = vpop.f32.mrb[0].mxu0
          %v3272 = vadd.f32 %v3063, %v3271
          %v3273 = vpop.f32.mrb[0].mxu0
          %3274 = vmatprep.mubr.bf16.mxu0 0
          %3275 = vmatmul.mubr.bf16.gmra.mrb[0].mxu0 %v2918
          %v3276 = vpop.f32.mrb[0].mxu0
          %v3277 = vadd.f32 %v3068, %v3276
          %v3278 = vpop.f32.mrb[0].mxu0
          %v3279 = vpop.f32.mrb[0].mxu0
          %v3280 = vadd.f32 %v3071, %v3279
          %v3281 = vpop.f32.mrb[0].mxu0
          %3282 = vmatprep.mubr.bf16.mxu0 0
          %3283 = vmatmul.mubr.bf16.gmra.mrb[0].mxu0 %v2919
          %v3284 = vpop.f32.mrb[0].mxu0
          %v3285 = vadd.f32 %v3076, %v3284
          %v3286 = vpop.f32.mrb[0].mxu0
          %v3287 = vpop.f32.mrb[0].mxu0
          %v3288 = vadd.f32 %v3079, %v3287
          %v3289 = vpop.f32.mrb[0].mxu0
          %3290 = vmatprep.mubr.bf16.mxu0 0
          %3291 = vmatmul.mubr.bf16.gmra.mrb[0].mxu0 %v2920
          %v3292 = vpop.f32.mrb[0].mxu0
          %v3293 = vadd.f32 %v3084, %v3292
          %v3294 = vpop.f32.mrb[0].mxu0
          %v3295 = vpop.f32.mrb[0].mxu0
          %v3296 = vadd.f32 %v3087, %v3295
          %v3297 = vpop.f32.mrb[0].mxu0
          %3298 = vmatprep.mubr.bf16.mxu0 0
          %3299 = vmatmul.mubr.bf16.gmra.mrb[0].mxu0 %v2921
          %v3300 = vpop.f32.mrb[0].mxu0
          %v3301 = vadd.f32 %v3092, %v3300
          %v3302 = vpop.f32.mrb[0].mxu0
          %v3303 = vpop.f32.mrb[0].mxu0
          %v3304 = vadd.f32 %v3095, %v3303
          %v3305 = vpop.f32.mrb[0].mxu0
          %3306 = vmatprep.mubr.bf16.mxu0 0
          %3307 = vmatmul.mubr.bf16.gmra.mrb[0].mxu0 %v2922
          %v3308 = vpop.f32.mrb[0].mxu0
          %v3309 = vadd.f32 %v3100, %v3308
          %v3310 = vpop.f32.mrb[0].mxu0
          %v3311 = vpop.f32.mrb[0].mxu0
          %v3312 = vadd.f32 %v3103, %v3311
          %v3313 = vpop.f32.mrb[0].mxu0
          %3314 = vmatprep.mubr.bf16.mxu0 0
          %3315 = vmatmul.mubr.bf16.gmra.mrb[0].mxu0 %v2923
          %v3316 = vpop.f32.mrb[0].mxu0
          %v3317 = vadd.f32 %v3108, %v3316
          %v3318 = vpop.f32.mrb[0].mxu0
          %v3319 = vpop.f32.mrb[0].mxu0
          %v3320 = vadd.f32 %v3111, %v3319
          %v3321 = vpop.f32.mrb[0].mxu0
          %3322 = vmatprep.mubr.bf16.mxu0 0
          %3323 = vmatmul.mubr.bf16.gmra.mrb[0].mxu0 %v2924
          %v3324 = vpop.f32.mrb[0].mxu0
          %v3325 = vadd.f32 %v3116, %v3324
          %v3326 = vpop.f32.mrb[0].mxu0
          %v3327 = vpop.f32.mrb[0].mxu0
          %v3328 = vadd.f32 %v3119, %v3327
          %v3329 = vpop.f32.mrb[0].mxu0
          %3330 = vmatprep.mubr.bf16.mxu0 0
          %3331 = vmatmul.mubr.bf16.gmra.mrb[0].mxu0 %v2925
          %v3332 = vpop.f32.mrb[0].mxu0
          %v3333 = vadd.f32 %v3124, %v3332
          %v3334 = vpop.f32.mrb[0].mxu0
          %v3335 = vpop.f32.mrb[0].mxu0
          %v3336 = vadd.f32 %v3127, %v3335
          %v3337 = vpop.f32.mrb[0].mxu0
          %3338 = vmatprep.mubr.bf16.mxu0 0
          %3339 = vmatmul.mubr.bf16.gmra.mrb[0].mxu0 %v2926
          %v3340 = vpop.f32.mrb[0].mxu0
          %v3341 = vadd.f32 %v3132, %v3340
          %v3342 = vpop.f32.mrb[0].mxu0
          %v3343 = vpop.f32.mrb[0].mxu0
          %v3344 = vadd.f32 %v3135, %v3343
          %v3345 = vpop.f32.mrb[0].mxu0
          %3346 = vmatprep.mubr.bf16.mxu0 0
          %3347 = vmatmul.mubr.bf16.gmra.mrb[0].mxu0 %v2927
          %v3348 = vpop.f32.mrb[0].mxu0
          %v3349 = vadd.f32 %v3140, %v3348
          %v3350 = vpop.f32.mrb[0].mxu0
          %v3351 = vpop.f32.mrb[0].mxu0
          %v3352 = vadd.f32 %v3143, %v3351
          %v3353 = vpop.f32.mrb[0].mxu0
          %3354 = vmatprep.mubr.bf16.mxu0 0
          %3355 = vmatmul.mubr.bf16.gmra.mrb[0].mxu0 %v2928
          %v3356 = vpop.f32.mrb[0].mxu0
          %v3357 = vadd.f32 %v3148, %v3356
          %v3358 = vpop.f32.mrb[0].mxu0
          %v3359 = vpop.f32.mrb[0].mxu0
          %v3360 = vadd.f32 %v3151, %v3359
          %v3361 = vpop.f32.mrb[0].mxu0
          %3362 = vdwg.mxu0
          %v3364 = vlaneseq
          %v3365 = vshrl.u32 %v3364, 7
          %v3366 = vsub.s32 0, %v3365
          %v3367 = vrot.slane %v528, %v3366
          %v3369 = vadd.f32 %v3237, %v3367
          %v3370 = vadd.f32 %v3240, %v3367
          %v3371 = vadd.f32 %v3245, %v3367
          %v3372 = vadd.f32 %v3248, %v3367
          %v3373 = vadd.f32 %v3253, %v3367
          %v3374 = vadd.f32 %v3256, %v3367
          %v3375 = vadd.f32 %v3261, %v3367
          %v3376 = vadd.f32 %v3264, %v3367
          %v3377 = vadd.f32 %v3269, %v3367
          %v3378 = vadd.f32 %v3272, %v3367
          %v3379 = vadd.f32 %v3277, %v3367
          %v3380 = vadd.f32 %v3280, %v3367
          %v3381 = vadd.f32 %v3285, %v3367
          %v3382 = vadd.f32 %v3288, %v3367
          %v3383 = vadd.f32 %v3293, %v3367
          %v3384 = vadd.f32 %v3296, %v3367
          %v3385 = vadd.f32 %v3301, %v3367
          %v3386 = vadd.f32 %v3304, %v3367
          %v3387 = vadd.f32 %v3309, %v3367
          %v3388 = vadd.f32 %v3312, %v3367
          %v3389 = vadd.f32 %v3317, %v3367
          %v3390 = vadd.f32 %v3320, %v3367
          %v3391 = vadd.f32 %v3325, %v3367
          %v3392 = vadd.f32 %v3328, %v3367
          %v3393 = vadd.f32 %v3333, %v3367
          %v3394 = vadd.f32 %v3336, %v3367
          %v3395 = vadd.f32 %v3341, %v3367
          %v3396 = vadd.f32 %v3344, %v3367
          %v3397 = vadd.f32 %v3349, %v3367
          %v3398 = vadd.f32 %v3352, %v3367
          %v3399 = vadd.f32 %v3357, %v3367
          %v3400 = vadd.f32 %v3360, %v3367
          %v3401 = vmax.f32 %v3369, 0.0
          %v3402 = vmax.f32 %v3370, 0.0
          %v3403 = vmax.f32 %v3371, 0.0
          %v3404 = vmax.f32 %v3372, 0.0
          %v3405 = vmax.f32 %v3373, 0.0
          %v3406 = vmax.f32 %v3374, 0.0
          %v3407 = vmax.f32 %v3375, 0.0
          %v3408 = vmax.f32 %v3376, 0.0
          %v3409 = vmax.f32 %v3377, 0.0
          %v3410 = vmax.f32 %v3378, 0.0
          %v3411 = vmax.f32 %v3379, 0.0
          %v3412 = vmax.f32 %v3380, 0.0
          %v3413 = vmax.f32 %v3381, 0.0
          %v3414 = vmax.f32 %v3382, 0.0
          %v3415 = vmax.f32 %v3383, 0.0
          %v3416 = vmax.f32 %v3384, 0.0
          %v3417 = vmax.f32 %v3385, 0.0
          %v3418 = vmax.f32 %v3386, 0.0
          %v3419 = vmax.f32 %v3387, 0.0
          %v3420 = vmax.f32 %v3388, 0.0
          %v3421 = vmax.f32 %v3389, 0.0
          %v3422 = vmax.f32 %v3390, 0.0
          %v3423 = vmax.f32 %v3391, 0.0
          %v3424 = vmax.f32 %v3392, 0.0
          %v3425 = vmax.f32 %v3393, 0.0
          %v3426 = vmax.f32 %v3394, 0.0
          %v3427 = vmax.f32 %v3395, 0.0
          %v3428 = vmax.f32 %v3396, 0.0
          %v3429 = vmax.f32 %v3397, 0.0
          %v3430 = vmax.f32 %v3398, 0.0
          %v3431 = vmax.f32 %v3399, 0.0
          %v3432 = vmax.f32 %v3400, 0.0
          %v3433 = vld [vmem:[%s377] sm:$0xf]
          %v3434 = vld [vmem:[%s377 + $0x4] sm:$0xf]
          %v3435 = vld [vmem:[%s377 + $0x8] sm:$0xf]
          %v3436 = vld [vmem:[%s377 + $0xc] sm:$0xf]
          %v3437 = vld [vmem:[%s377 + $0x10] sm:$0xf]
          %v3438 = vld [vmem:[%s377 + $0x14] sm:$0xf]
          %v3439 = vld [vmem:[%s377 + $0x18] sm:$0xf]
          %v3440 = vld [vmem:[%s377 + $0x1c] sm:$0xf]
          %v3441 = vld [vmem:[%s377 + $0x20] sm:$0xf]
          %v3442 = vld [vmem:[%s377 + $0x24] sm:$0xf]
          %v3443 = vld [vmem:[%s377 + $0x28] sm:$0xf]
          %v3444 = vld [vmem:[%s377 + $0x2c] sm:$0xf]
          %v3445 = vld [vmem:[%s377 + $0x30] sm:$0xf]
          %v3446 = vld [vmem:[%s377 + $0x34] sm:$0xf]
          %v3447 = vld [vmem:[%s377 + $0x38] sm:$0xf]
          %v3448 = vld [vmem:[%s377 + $0x3c] sm:$0xf]
          %v3449 = vld [vmem:[%s377 + $0x40] sm:$0xf]
          %v3450 = vld [vmem:[%s377 + $0x44] sm:$0xf]
          %v3451 = vld [vmem:[%s377 + $0x48] sm:$0xf]
          %v3452 = vld [vmem:[%s377 + $0x4c] sm:$0xf]
          %v3453 = vld [vmem:[%s377 + $0x50] sm:$0xf]
          %v3454 = vld [vmem:[%s377 + $0x54] sm:$0xf]
          %v3455 = vld [vmem:[%s377 + $0x58] sm:$0xf]
          %v3456 = vld [vmem:[%s377 + $0x5c] sm:$0xf]
          %v3457 = vld [vmem:[%s377 + $0x60] sm:$0xf]
          %v3458 = vld [vmem:[%s377 + $0x64] sm:$0xf]
          %v3459 = vld [vmem:[%s377 + $0x68] sm:$0xf]
          %v3460 = vld [vmem:[%s377 + $0x6c] sm:$0xf]
          %v3461 = vld [vmem:[%s377 + $0x70] sm:$0xf]
          %v3462 = vld [vmem:[%s377 + $0x74] sm:$0xf]
          %v3463 = vld [vmem:[%s377 + $0x78] sm:$0xf]
          %v3464 = vld [vmem:[%s377 + $0x7c] sm:$0xf]
          %v3465 = vunpack.c.l.bf16 %v3433
          %v3466 = vunpack.c.l.bf16 %v3434
          %v3467 = vunpack.c.l.bf16 %v3435
          %v3468 = vunpack.c.l.bf16 %v3436
          %v3469 = vunpack.c.l.bf16 %v3437
          %v3470 = vunpack.c.l.bf16 %v3438
          %v3471 = vunpack.c.l.bf16 %v3439
          %v3472 = vunpack.c.l.bf16 %v3440
          %v3473 = vunpack.c.l.bf16 %v3441
          %v3474 = vunpack.c.l.bf16 %v3442
          %v3475 = vunpack.c.l.bf16 %v3443
          %v3476 = vunpack.c.l.bf16 %v3444
          %v3477 = vunpack.c.l.bf16 %v3445
          %v3478 = vunpack.c.l.bf16 %v3446
          %v3479 = vunpack.c.l.bf16 %v3447
          %v3480 = vunpack.c.l.bf16 %v3448
          %v3481 = vunpack.c.l.bf16 %v3449
          %v3482 = vunpack.c.l.bf16 %v3450
          %v3483 = vunpack.c.l.bf16 %v3451
          %v3484 = vunpack.c.l.bf16 %v3452
          %v3485 = vunpack.c.l.bf16 %v3453
          %v3486 = vunpack.c.l.bf16 %v3454
          %v3487 = vunpack.c.l.bf16 %v3455
          %v3488 = vunpack.c.l.bf16 %v3456
          %v3489 = vunpack.c.l.bf16 %v3457
          %v3490 = vunpack.c.l.bf16 %v3458
          %v3491 = vunpack.c.l.bf16 %v3459
          %v3492 = vunpack.c.l.bf16 %v3460
          %v3493 = vunpack.c.l.bf16 %v3461
          %v3494 = vunpack.c.l.bf16 %v3462
          %v3495 = vunpack.c.l.bf16 %v3463
          %v3496 = vunpack.c.l.bf16 %v3464
          %v3497 = vmul.f32 %v3401, %v3465
          %v3498 = vmul.f32 %v3402, %v3466
          %v3499 = vmul.f32 %v3403, %v3467
          %v3500 = vmul.f32 %v3404, %v3468
          %v3501 = vmul.f32 %v3405, %v3469
          %v3502 = vmul.f32 %v3406, %v3470
          %v3503 = vmul.f32 %v3407, %v3471
          %v3504 = vmul.f32 %v3408, %v3472
          %v3505 = vmul.f32 %v3409, %v3473
          %v3506 = vmul.f32 %v3410, %v3474
          %v3507 = vmul.f32 %v3411, %v3475
          %v3508 = vmul.f32 %v3412, %v3476
          %v3509 = vmul.f32 %v3413, %v3477
          %v3510 = vmul.f32 %v3414, %v3478
          %v3511 = vmul.f32 %v3415, %v3479
          %v3512 = vmul.f32 %v3416, %v3480
          %v3513 = vmul.f32 %v3417, %v3481
          %v3514 = vmul.f32 %v3418, %v3482
          %v3515 = vmul.f32 %v3419, %v3483
          %v3516 = vmul.f32 %v3420, %v3484
          %v3517 = vmul.f32 %v3421, %v3485
          %v3518 = vmul.f32 %v3422, %v3486
          %v3519 = vmul.f32 %v3423, %v3487
          %v3520 = vmul.f32 %v3424, %v3488
          %v3521 = vmul.f32 %v3425, %v3489
          %v3522 = vmul.f32 %v3426, %v3490
          %v3523 = vmul.f32 %v3427, %v3491
          %v3524 = vmul.f32 %v3428, %v3492
          %v3525 = vmul.f32 %v3429, %v3493
          %v3526 = vmul.f32 %v3430, %v3494
          %v3527 = vmul.f32 %v3431, %v3495
          %v3528 = vmul.f32 %v3432, %v3496
          %v3529 = vpack.c.bf16 %v3498, %v3497
          %v3530 = vpack.c.bf16 %v3500, %v3499
          %v3531 = vpack.c.bf16 %v3502, %v3501
          %v3532 = vpack.c.bf16 %v3504, %v3503
          %v3533 = vpack.c.bf16 %v3506, %v3505
          %v3534 = vpack.c.bf16 %v3508, %v3507
          %v3535 = vpack.c.bf16 %v3510, %v3509
          %v3536 = vpack.c.bf16 %v3512, %v3511
          %v3537 = vpack.c.bf16 %v3514, %v3513
          %v3538 = vpack.c.bf16 %v3516, %v3515
          %v3539 = vpack.c.bf16 %v3518, %v3517
          %v3540 = vpack.c.bf16 %v3520, %v3519
          %v3541 = vpack.c.bf16 %v3522, %v3521
          %v3542 = vpack.c.bf16 %v3524, %v3523
          %v3543 = vpack.c.bf16 %v3526, %v3525
          %v3544 = vpack.c.bf16 %v3528, %v3527
          %s3545 = smul.addr %s2909, 8
          %s3546 = scalar_lea.vmem [#allocation3], %s3545
          %3547 = vst [vmem:[%s3546] sm:$0xff] %v3529
          %3548 = vst [vmem:[%s3546 + $0x8] sm:$0xff] %v3530
          %3549 = vst [vmem:[%s3546 + $0x10] sm:$0xff] %v3531
          %3550 = vst [vmem:[%s3546 + $0x18] sm:$0xff] %v3532
          %3551 = vst [vmem:[%s3546 + $0x20] sm:$0xff] %v3533
          %3552 = vst [vmem:[%s3546 + $0x28] sm:$0xff] %v3534
          %3553 = vst [vmem:[%s3546 + $0x30] sm:$0xff] %v3535
          %3554 = vst [vmem:[%s3546 + $0x38] sm:$0xff] %v3536
          %3555 = vst [vmem:[%s3546 + $0x40] sm:$0xff] %v3537
          %3556 = vst [vmem:[%s3546 + $0x48] sm:$0xff] %v3538
          %3557 = vst [vmem:[%s3546 + $0x50] sm:$0xff] %v3539
          %3558 = vst [vmem:[%s3546 + $0x58] sm:$0xff] %v3540
          %3559 = vst [vmem:[%s3546 + $0x60] sm:$0xff] %v3541
          %3560 = vst [vmem:[%s3546 + $0x68] sm:$0xff] %v3542
          %3561 = vst [vmem:[%s3546 + $0x70] sm:$0xff] %v3543
          %3562 = vst [vmem:[%s3546 + $0x78] sm:$0xff] %v3544
          %3563 = vst [vmem:[%s423] sm:$0xff] %v3497
          %3564 = vst [vmem:[%s423 + $0x8] sm:$0xff] %v3498
          %3565 = vst [vmem:[%s423 + $0x10] sm:$0xff] %v3499
          %3566 = vst [vmem:[%s423 + $0x18] sm:$0xff] %v3500
          %3567 = vst [vmem:[%s423 + $0x20] sm:$0xff] %v3501
          %3568 = vst [vmem:[%s423 + $0x28] sm:$0xff] %v3502
          %3569 = vst [vmem:[%s423 + $0x30] sm:$0xff] %v3503
          %3570 = vst [vmem:[%s423 + $0x38] sm:$0xff] %v3504
          %3571 = vst [vmem:[%s423 + $0x40] sm:$0xff] %v3505
          %3572 = vst [vmem:[%s423 + $0x48] sm:$0xff] %v3506
          %3573 = vst [vmem:[%s423 + $0x50] sm:$0xff] %v3507
          %3574 = vst [vmem:[%s423 + $0x58] sm:$0xff] %v3508
          %3575 = vst [vmem:[%s423 + $0x60] sm:$0xff] %v3509
          %3576 = vst [vmem:[%s423 + $0x68] sm:$0xff] %v3510
          %3577 = vst [vmem:[%s423 + $0x70] sm:$0xff] %v3511
          %3578 = vst [vmem:[%s423 + $0x78] sm:$0xff] %v3512
          %3579 = vst [vmem:[%s423 + $0x80] sm:$0xff] %v3513
          %3580 = vst [vmem:[%s423 + $0x88] sm:$0xff] %v3514
          %3581 = vst [vmem:[%s423 + $0x90] sm:$0xff] %v3515
          %3582 = vst [vmem:[%s423 + $0x98] sm:$0xff] %v3516
          %3583 = vst [vmem:[%s423 + $0xa0] sm:$0xff] %v3517
          %3584 = vst [vmem:[%s423 + $0xa8] sm:$0xff] %v3518
          %3585 = vst [vmem:[%s423 + $0xb0] sm:$0xff] %v3519
          %3586 = vst [vmem:[%s423 + $0xb8] sm:$0xff] %v3520
          %3587 = vst [vmem:[%s423 + $0xc0] sm:$0xff] %v3521
          %3588 = vst [vmem:[%s423 + $0xc8] sm:$0xff] %v3522
          %3589 = vst [vmem:[%s423 + $0xd0] sm:$0xff] %v3523
          %3590 = vst [vmem:[%s423 + $0xd8] sm:$0xff] %v3524
          %3591 = vst [vmem:[%s423 + $0xe0] sm:$0xff] %v3525
          %3592 = vst [vmem:[%s423 + $0xe8] sm:$0xff] %v3526
          %3593 = vst [vmem:[%s423 + $0xf0] sm:$0xff] %v3527
          %3594 = vst [vmem:[%s423 + $0xf8] sm:$0xff] %v3528
        $region72: #{tpu_custom_call.1} parent=43 // pred_fallthru
          _
        %p3595 = scmp.eq.s32.totalorder %s28, 2
        // Predicated region
        $region73: #{tpu_custom_call.1} parent=43 // pred_check
          %p3596 = pneg %p3595
        $region74: #{tpu_custom_call.1} parent=43 // pred_check_branch
          %3598 = sbr.rel (%p3596) target = $region76
        $region75: #{tpu_custom_call.1} parent=43 // pred_region
          %v3599 = vld [vmem:[#allocation3] sm:$0xff]
          %v3600 = vld [vmem:[#allocation3 + $0x8] sm:$0xff]
          %v3601 = vld [vmem:[#allocation3 + $0x10] sm:$0xff]
          %v3602 = vld [vmem:[#allocation3 + $0x18] sm:$0xff]
          %v3603 = vld [vmem:[#allocation3 + $0x20] sm:$0xff]
          %v3604 = vld [vmem:[#allocation3 + $0x28] sm:$0xff]
          %v3605 = vld [vmem:[#allocation3 + $0x30] sm:$0xff]
          %v3606 = vld [vmem:[#allocation3 + $0x38] sm:$0xff]
          %v3607 = vld [vmem:[#allocation3 + $0x40] sm:$0xff]
          %v3608 = vld [vmem:[#allocation3 + $0x48] sm:$0xff]
          %v3609 = vld [vmem:[#allocation3 + $0x50] sm:$0xff]
          %v3610 = vld [vmem:[#allocation3 + $0x58] sm:$0xff]
          %v3611 = vld [vmem:[#allocation3 + $0x60] sm:$0xff]
          %v3612 = vld [vmem:[#allocation3 + $0x68] sm:$0xff]
          %v3613 = vld [vmem:[#allocation3 + $0x70] sm:$0xff]
          %v3614 = vld [vmem:[#allocation3 + $0x78] sm:$0xff]
          %v3615 = vld [vmem:[#allocation3 + $0x80] sm:$0xff]
          %v3616 = vld [vmem:[#allocation3 + $0x88] sm:$0xff]
          %v3617 = vld [vmem:[#allocation3 + $0x90] sm:$0xff]
          %v3618 = vld [vmem:[#allocation3 + $0x98] sm:$0xff]
          %v3619 = vld [vmem:[#allocation3 + $0xa0] sm:$0xff]
          %v3620 = vld [vmem:[#allocation3 + $0xa8] sm:$0xff]
          %v3621 = vld [vmem:[#allocation3 + $0xb0] sm:$0xff]
          %v3622 = vld [vmem:[#allocation3 + $0xb8] sm:$0xff]
          %v3623 = vld [vmem:[#allocation3 + $0xc0] sm:$0xff]
          %v3624 = vld [vmem:[#allocation3 + $0xc8] sm:$0xff]
          %v3625 = vld [vmem:[#allocation3 + $0xd0] sm:$0xff]
          %v3626 = vld [vmem:[#allocation3 + $0xd8] sm:$0xff]
          %v3627 = vld [vmem:[#allocation3 + $0xe0] sm:$0xff]
          %v3628 = vld [vmem:[#allocation3 + $0xe8] sm:$0xff]
          %v3629 = vld [vmem:[#allocation3 + $0xf0] sm:$0xff]
          %v3630 = vld [vmem:[#allocation3 + $0xf8] sm:$0xff]
          %v3695 = vunpack.c.l.b16 %v432
          %v3696 = vunpack.c.h.b16 %v432
          %v3697 = vunpack.c.l.b16 %v433
          %v3698 = vunpack.c.h.b16 %v433
          %v3699 = vunpack.c.l.b16 %v434
          %v3700 = vunpack.c.h.b16 %v434
          %v3701 = vunpack.c.l.b16 %v435
          %v3702 = vunpack.c.h.b16 %v435
          %v3703 = vunpack.c.l.b16 %v436
          %v3704 = vunpack.c.h.b16 %v436
          %v3705 = vunpack.c.l.b16 %v437
          %v3706 = vunpack.c.h.b16 %v437
          %v3707 = vunpack.c.l.b16 %v438
          %v3708 = vunpack.c.h.b16 %v438
          %v3709 = vunpack.c.l.b16 %v439
          %v3710 = vunpack.c.h.b16 %v439
          %v3711 = vunpack.c.l.b16 %v440
          %v3712 = vunpack.c.h.b16 %v440
          %v3713 = vunpack.c.l.b16 %v441
          %v3714 = vunpack.c.h.b16 %v441
          %v3715 = vunpack.c.l.b16 %v442
          %v3716 = vunpack.c.h.b16 %v442
          %v3717 = vunpack.c.l.b16 %v443
          %v3718 = vunpack.c.h.b16 %v443
          %v3719 = vunpack.c.l.b16 %v444
          %v3720 = vunpack.c.h.b16 %v444
          %v3721 = vunpack.c.l.b16 %v445
          %v3722 = vunpack.c.h.b16 %v445
          %v3723 = vunpack.c.l.b16 %v446
          %v3724 = vunpack.c.h.b16 %v446
          %v3725 = vunpack.c.l.b16 %v447
          %v3726 = vunpack.c.h.b16 %v447
          %v3727 = vunpack.c.l.b16 %v448
          %v3728 = vunpack.c.h.b16 %v448
          %v3729 = vunpack.c.l.b16 %v449
          %v3730 = vunpack.c.h.b16 %v449
          %v3731 = vunpack.c.l.b16 %v450
          %v3732 = vunpack.c.h.b16 %v450
          %v3733 = vunpack.c.l.b16 %v451
          %v3734 = vunpack.c.h.b16 %v451
          %v3735 = vunpack.c.l.b16 %v452
          %v3736 = vunpack.c.h.b16 %v452
          %v3737 = vunpack.c.l.b16 %v453
          %v3738 = vunpack.c.h.b16 %v453
          %v3739 = vunpack.c.l.b16 %v454
          %v3740 = vunpack.c.h.b16 %v454
          %v3741 = vunpack.c.l.b16 %v455
          %v3742 = vunpack.c.h.b16 %v455
          %v3743 = vunpack.c.l.b16 %v456
          %v3744 = vunpack.c.h.b16 %v456
          %v3745 = vunpack.c.l.b16 %v457
          %v3746 = vunpack.c.h.b16 %v457
          %v3747 = vunpack.c.l.b16 %v458
          %v3748 = vunpack.c.h.b16 %v458
          %v3749 = vunpack.c.l.b16 %v459
          %v3750 = vunpack.c.h.b16 %v459
          %v3751 = vunpack.c.l.b16 %v460
          %v3752 = vunpack.c.h.b16 %v460
          %v3753 = vunpack.c.l.b16 %v461
          %v3754 = vunpack.c.h.b16 %v461
          %v3755 = vunpack.c.l.b16 %v462
          %v3756 = vunpack.c.h.b16 %v462
          %v3757 = vunpack.c.l.b16 %v463
          %v3758 = vunpack.c.h.b16 %v463
          %v3759 = vunpack.c.l.b16 %v464
          %v3760 = vunpack.c.h.b16 %v464
          %v3761 = vunpack.c.l.b16 %v465
          %v3762 = vunpack.c.h.b16 %v465
          %v3763 = vunpack.c.l.b16 %v466
          %v3764 = vunpack.c.h.b16 %v466
          %v3765 = vunpack.c.l.b16 %v467
          %v3766 = vunpack.c.h.b16 %v467
          %v3767 = vunpack.c.l.b16 %v468
          %v3768 = vunpack.c.h.b16 %v468
          %v3769 = vunpack.c.l.b16 %v469
          %v3770 = vunpack.c.h.b16 %v469
          %v3771 = vunpack.c.l.b16 %v470
          %v3772 = vunpack.c.h.b16 %v470
          %v3773 = vunpack.c.l.b16 %v471
          %v3774 = vunpack.c.h.b16 %v471
          %v3775 = vunpack.c.l.b16 %v472
          %v3776 = vunpack.c.h.b16 %v472
          %v3777 = vunpack.c.l.b16 %v473
          %v3778 = vunpack.c.h.b16 %v473
          %v3779 = vunpack.c.l.b16 %v474
          %v3780 = vunpack.c.h.b16 %v474
          %v3781 = vunpack.c.l.b16 %v475
          %v3782 = vunpack.c.h.b16 %v475
          %v3783 = vunpack.c.l.b16 %v476
          %v3784 = vunpack.c.h.b16 %v476
          %v3785 = vunpack.c.l.b16 %v477
          %v3786 = vunpack.c.h.b16 %v477
          %v3787 = vunpack.c.l.b16 %v478
          %v3788 = vunpack.c.h.b16 %v478
          %v3789 = vunpack.c.l.b16 %v479
          %v3790 = vunpack.c.h.b16 %v479
          %v3791 = vunpack.c.l.b16 %v480
          %v3792 = vunpack.c.h.b16 %v480
          %v3793 = vunpack.c.l.b16 %v481
          %v3794 = vunpack.c.h.b16 %v481
          %v3795 = vunpack.c.l.b16 %v482
          %v3796 = vunpack.c.h.b16 %v482
          %v3797 = vunpack.c.l.b16 %v483
          %v3798 = vunpack.c.h.b16 %v483
          %v3799 = vunpack.c.l.b16 %v484
          %v3800 = vunpack.c.h.b16 %v484
          %v3801 = vunpack.c.l.b16 %v485
          %v3802 = vunpack.c.h.b16 %v485
          %v3803 = vunpack.c.l.b16 %v486
          %v3804 = vunpack.c.h.b16 %v486
          %v3805 = vunpack.c.l.b16 %v487
          %v3806 = vunpack.c.h.b16 %v487
          %v3807 = vunpack.c.l.b16 %v488
          %v3808 = vunpack.c.h.b16 %v488
          %v3809 = vunpack.c.l.b16 %v489
          %v3810 = vunpack.c.h.b16 %v489
          %v3811 = vunpack.c.l.b16 %v490
          %v3812 = vunpack.c.h.b16 %v490
          %v3813 = vunpack.c.l.b16 %v491
          %v3814 = vunpack.c.h.b16 %v491
          %v3815 = vunpack.c.l.b16 %v492
          %v3816 = vunpack.c.h.b16 %v492
          %v3817 = vunpack.c.l.b16 %v493
          %v3818 = vunpack.c.h.b16 %v493
          %v3819 = vunpack.c.l.b16 %v494
          %v3820 = vunpack.c.h.b16 %v494
          %v3821 = vunpack.c.l.b16 %v495
          %v3822 = vunpack.c.h.b16 %v495
          %v3823 = vpack.c.b16 %v3699, %v3695
          %v3824 = vpack.c.b16 %v3700, %v3696
          %v3825 = vpack.c.b16 %v3701, %v3697
          %v3826 = vpack.c.b16 %v3702, %v3698
          %v3827 = vpack.c.b16 %v3707, %v3703
          %v3828 = vpack.c.b16 %v3708, %v3704
          %v3829 = vpack.c.b16 %v3709, %v3705
          %v3830 = vpack.c.b16 %v3710, %v3706
          %v3831 = vpack.c.b16 %v3715, %v3711
          %v3832 = vpack.c.b16 %v3716, %v3712
          %v3833 = vpack.c.b16 %v3717, %v3713
          %v3834 = vpack.c.b16 %v3718, %v3714
          %v3835 = vpack.c.b16 %v3723, %v3719
          %v3836 = vpack.c.b16 %v3724, %v3720
          %v3837 = vpack.c.b16 %v3725, %v3721
          %v3838 = vpack.c.b16 %v3726, %v3722
          %v3839 = vpack.c.b16 %v3731, %v3727
          %v3840 = vpack.c.b16 %v3732, %v3728
          %v3841 = vpack.c.b16 %v3733, %v3729
          %v3842 = vpack.c.b16 %v3734, %v3730
          %v3843 = vpack.c.b16 %v3739, %v3735
          %v3844 = vpack.c.b16 %v3740, %v3736
          %v3845 = vpack.c.b16 %v3741, %v3737
          %v3846 = vpack.c.b16 %v3742, %v3738
          %v3847 = vpack.c.b16 %v3747, %v3743
          %v3848 = vpack.c.b16 %v3748, %v3744
          %v3849 = vpack.c.b16 %v3749, %v3745
          %v3850 = vpack.c.b16 %v3750, %v3746
          %v3851 = vpack.c.b16 %v3755, %v3751
          %v3852 = vpack.c.b16 %v3756, %v3752
          %v3853 = vpack.c.b16 %v3757, %v3753
          %v3854 = vpack.c.b16 %v3758, %v3754
          %v3855 = vpack.c.b16 %v3763, %v3759
          %v3856 = vpack.c.b16 %v3764, %v3760
          %v3857 = vpack.c.b16 %v3765, %v3761
          %v3858 = vpack.c.b16 %v3766, %v3762
          %v3859 = vpack.c.b16 %v3771, %v3767
          %v3860 = vpack.c.b16 %v3772, %v3768
          %v3861 = vpack.c.b16 %v3773, %v3769
          %v3862 = vpack.c.b16 %v3774, %v3770
          %v3863 = vpack.c.b16 %v3779, %v3775
          %v3864 = vpack.c.b16 %v3780, %v3776
          %v3865 = vpack.c.b16 %v3781, %v3777
          %v3866 = vpack.c.b16 %v3782, %v3778
          %v3867 = vpack.c.b16 %v3787, %v3783
          %v3868 = vpack.c.b16 %v3788, %v3784
          %v3869 = vpack.c.b16 %v3789, %v3785
          %v3870 = vpack.c.b16 %v3790, %v3786
          %v3871 = vpack.c.b16 %v3795, %v3791
          %v3872 = vpack.c.b16 %v3796, %v3792
          %v3873 = vpack.c.b16 %v3797, %v3793
          %v3874 = vpack.c.b16 %v3798, %v3794
          %v3875 = vpack.c.b16 %v3803, %v3799
          %v3876 = vpack.c.b16 %v3804, %v3800
          %v3877 = vpack.c.b16 %v3805, %v3801
          %v3878 = vpack.c.b16 %v3806, %v3802
          %v3879 = vpack.c.b16 %v3811, %v3807
          %v3880 = vpack.c.b16 %v3812, %v3808
          %v3881 = vpack.c.b16 %v3813, %v3809
          %v3882 = vpack.c.b16 %v3814, %v3810
          %v3883 = vpack.c.b16 %v3819, %v3815
          %v3884 = vpack.c.b16 %v3820, %v3816
          %v3885 = vpack.c.b16 %v3821, %v3817
          %v3886 = vpack.c.b16 %v3822, %v3818
          %3951 = vmatprep.subr.bf16.mxu0 0
          %3952 = vmatpush1.bf16.msra.mxu0 %v3599
          %3953 = vmatprep.subr.bf16.mxu0 0
          %3954 = vmatpush1.bf16.msra.mxu0 %v3600
          %3955 = vmatprep.subr.bf16.mxu0 0
          %3956 = vmatpush1.bf16.msra.mxu0 %v3601
          %3957 = vmatprep.subr.bf16.mxu0 0
          %3958 = vmatpush1.bf16.msra.mxu0 %v3602
          %3959 = vmatprep.subr.bf16.mxu0 0
          %3960 = vmatpush1.bf16.msra.mxu0 %v3603
          %3961 = vmatprep.subr.bf16.mxu0 0
          %3962 = vmatpush1.bf16.msra.mxu0 %v3604
          %3963 = vmatprep.subr.bf16.mxu0 0
          %3964 = vmatpush1.bf16.msra.mxu0 %v3605
          %3965 = vmatprep.subr.bf16.mxu0 0
          %3966 = vmatpush1.bf16.msra.mxu0 %v3606
          %3967 = vmatprep.subr.bf16.mxu0 0
          %3968 = vmatpush1.bf16.msra.mxu0 %v3607
          %3969 = vmatprep.subr.bf16.mxu0 0
          %3970 = vmatpush1.bf16.msra.mxu0 %v3608
          %3971 = vmatprep.subr.bf16.mxu0 0
          %3972 = vmatpush1.bf16.msra.mxu0 %v3609
          %3973 = vmatprep.subr.bf16.mxu0 0
          %3974 = vmatpush1.bf16.msra.mxu0 %v3610
          %3975 = vmatprep.subr.bf16.mxu0 0
          %3976 = vmatpush1.bf16.msra.mxu0 %v3611
          %3977 = vmatprep.subr.bf16.mxu0 0
          %3978 = vmatpush1.bf16.msra.mxu0 %v3612
          %3979 = vmatprep.subr.bf16.mxu0 0
          %3980 = vmatpush1.bf16.msra.mxu0 %v3613
          %3981 = vmatprep.subr.bf16.mxu0 0
          %3982 = vmatpush1.bf16.msra.mxu0 %v3614
          %3983 = vmatprep.mubr.bf16.mxu0 %v3824
          %3984 = vmatmul.mubr.bf16.gmra.mrb[0].mxu0 %v3823
          %v3985 = vpop.f32.mrb[0].mxu0
          %v3986 = vadd.f32 0.0, %v3985
          %v3987 = vpop.f32.mrb[0].mxu0
          %v3988 = vpop.f32.mrb[0].mxu0
          %v3989 = vadd.f32 0.0, %v3988
          %v3990 = vpop.f32.mrb[0].mxu0
          %3991 = vmatprep.mubr.bf16.mxu0 %v3828
          %3992 = vmatmul.mubr.bf16.gmra.mrb[0].mxu0 %v3827
          %v3993 = vpop.f32.mrb[0].mxu0
          %v3994 = vadd.f32 0.0, %v3993
          %v3995 = vpop.f32.mrb[0].mxu0
          %v3996 = vpop.f32.mrb[0].mxu0
          %v3997 = vadd.f32 0.0, %v3996
          %v3998 = vpop.f32.mrb[0].mxu0
          %3999 = vmatprep.mubr.bf16.mxu0 %v3832
          %4000 = vmatmul.mubr.bf16.gmra.mrb[0].mxu0 %v3831
          %v4001 = vpop.f32.mrb[0].mxu0
          %v4002 = vadd.f32 0.0, %v4001
          %v4003 = vpop.f32.mrb[0].mxu0
          %v4004 = vpop.f32.mrb[0].mxu0
          %v4005 = vadd.f32 0.0, %v4004
          %v4006 = vpop.f32.mrb[0].mxu0
          %4007 = vmatprep.mubr.bf16.mxu0 %v3836
          %4008 = vmatmul.mubr.bf16.gmra.mrb[0].mxu0 %v3835
          %v4009 = vpop.f32.mrb[0].mxu0
          %v4010 = vadd.f32 0.0, %v4009
          %v4011 = vpop.f32.mrb[0].mxu0
          %v4012 = vpop.f32.mrb[0].mxu0
          %v4013 = vadd.f32 0.0, %v4012
          %v4014 = vpop.f32.mrb[0].mxu0
          %4015 = vmatprep.mubr.bf16.mxu0 %v3840
          %4016 = vmatmul.mubr.bf16.gmra.mrb[0].mxu0 %v3839
          %v4017 = vpop.f32.mrb[0].mxu0
          %v4018 = vadd.f32 0.0, %v4017
          %v4019 = vpop.f32.mrb[0].mxu0
          %v4020 = vpop.f32.mrb[0].mxu0
          %v4021 = vadd.f32 0.0, %v4020
          %v4022 = vpop.f32.mrb[0].mxu0
          %4023 = vmatprep.mubr.bf16.mxu0 %v3844
          %4024 = vmatmul.mubr.bf16.gmra.mrb[0].mxu0 %v3843
          %v4025 = vpop.f32.mrb[0].mxu0
          %v4026 = vadd.f32 0.0, %v4025
          %v4027 = vpop.f32.mrb[0].mxu0
          %v4028 = vpop.f32.mrb[0].mxu0
          %v4029 = vadd.f32 0.0, %v4028
          %v4030 = vpop.f32.mrb[0].mxu0
          %4031 = vmatprep.mubr.bf16.mxu0 %v3848
          %4032 = vmatmul.mubr.bf16.gmra.mrb[0].mxu0 %v3847
          %v4033 = vpop.f32.mrb[0].mxu0
          %v4034 = vadd.f32 0.0, %v4033
          %v4035 = vpop.f32.mrb[0].mxu0
          %v4036 = vpop.f32.mrb[0].mxu0
          %v4037 = vadd.f32 0.0, %v4036
          %v4038 = vpop.f32.mrb[0].mxu0
          %4039 = vmatprep.mubr.bf16.mxu0 %v3852
          %4040 = vmatmul.mubr.bf16.gmra.mrb[0].mxu0 %v3851
          %v4041 = vpop.f32.mrb[0].mxu0
          %v4042 = vadd.f32 0.0, %v4041
          %v4043 = vpop.f32.mrb[0].mxu0
          %v4044 = vpop.f32.mrb[0].mxu0
          %v4045 = vadd.f32 0.0, %v4044
          %v4046 = vpop.f32.mrb[0].mxu0
          %4047 = vmatprep.mubr.bf16.mxu0 %v3856
          %4048 = vmatmul.mubr.bf16.gmra.mrb[0].mxu0 %v3855
          %v4049 = vpop.f32.mrb[0].mxu0
          %v4050 = vadd.f32 0.0, %v4049
          %v4051 = vpop.f32.mrb[0].mxu0
          %v4052 = vpop.f32.mrb[0].mxu0
          %v4053 = vadd.f32 0.0, %v4052
          %v4054 = vpop.f32.mrb[0].mxu0
          %4055 = vmatprep.mubr.bf16.mxu0 %v3860
          %4056 = vmatmul.mubr.bf16.gmra.mrb[0].mxu0 %v3859
          %v4057 = vpop.f32.mrb[0].mxu0
          %v4058 = vadd.f32 0.0, %v4057
          %v4059 = vpop.f32.mrb[0].mxu0
          %v4060 = vpop.f32.mrb[0].mxu0
          %v4061 = vadd.f32 0.0, %v4060
          %v4062 = vpop.f32.mrb[0].mxu0
          %4063 = vmatprep.mubr.bf16.mxu0 %v3864
          %4064 = vmatmul.mubr.bf16.gmra.mrb[0].mxu0 %v3863
          %v4065 = vpop.f32.mrb[0].mxu0
          %v4066 = vadd.f32 0.0, %v4065
          %v4067 = vpop.f32.mrb[0].mxu0
          %v4068 = vpop.f32.mrb[0].mxu0
          %v4069 = vadd.f32 0.0, %v4068
          %v4070 = vpop.f32.mrb[0].mxu0
          %4071 = vmatprep.mubr.bf16.mxu0 %v3868
          %4072 = vmatmul.mubr.bf16.gmra.mrb[0].mxu0 %v3867
          %v4073 = vpop.f32.mrb[0].mxu0
          %v4074 = vadd.f32 0.0, %v4073
          %v4075 = vpop.f32.mrb[0].mxu0
          %v4076 = vpop.f32.mrb[0].mxu0
          %v4077 = vadd.f32 0.0, %v4076
          %v4078 = vpop.f32.mrb[0].mxu0
          %4079 = vmatprep.mubr.bf16.mxu0 %v3872
          %4080 = vmatmul.mubr.bf16.gmra.mrb[0].mxu0 %v3871
          %v4081 = vpop.f32.mrb[0].mxu0
          %v4082 = vadd.f32 0.0, %v4081
          %v4083 = vpop.f32.mrb[0].mxu0
          %v4084 = vpop.f32.mrb[0].mxu0
          %v4085 = vadd.f32 0.0, %v4084
          %v4086 = vpop.f32.mrb[0].mxu0
          %4087 = vmatprep.mubr.bf16.mxu0 %v3876
          %4088 = vmatmul.mubr.bf16.gmra.mrb[0].mxu0 %v3875
          %v4089 = vpop.f32.mrb[0].mxu0
          %v4090 = vadd.f32 0.0, %v4089
          %v4091 = vpop.f32.mrb[0].mxu0
          %v4092 = vpop.f32.mrb[0].mxu0
          %v4093 = vadd.f32 0.0, %v4092
          %v4094 = vpop.f32.mrb[0].mxu0
          %4095 = vmatprep.mubr.bf16.mxu0 %v3880
          %4096 = vmatmul.mubr.bf16.gmra.mrb[0].mxu0 %v3879
          %v4097 = vpop.f32.mrb[0].mxu0
          %v4098 = vadd.f32 0.0, %v4097
          %v4099 = vpop.f32.mrb[0].mxu0
          %v4100 = vpop.f32.mrb[0].mxu0
          %v4101 = vadd.f32 0.0, %v4100
          %v4102 = vpop.f32.mrb[0].mxu0
          %4103 = vmatprep.mubr.bf16.mxu0 %v3884
          %4104 = vmatmul.mubr.bf16.gmra.mrb[0].mxu0 %v3883
          %v4105 = vpop.f32.mrb[0].mxu0
          %v4106 = vadd.f32 0.0, %v4105
          %v4107 = vpop.f32.mrb[0].mxu0
          %v4108 = vpop.f32.mrb[0].mxu0
          %v4109 = vadd.f32 0.0, %v4108
          %v4110 = vpop.f32.mrb[0].mxu0
          %4111 = vdwg.mxu0
          %4112 = vmatprep.subr.bf16.mxu0 0
          %4113 = vmatpush1.bf16.msra.mxu0 %v3615
          %4114 = vmatprep.subr.bf16.mxu0 0
          %4115 = vmatpush1.bf16.msra.mxu0 %v3616
          %4116 = vmatprep.subr.bf16.mxu0 0
          %4117 = vmatpush1.bf16.msra.mxu0 %v3617
          %4118 = vmatprep.subr.bf16.mxu0 0
          %4119 = vmatpush1.bf16.msra.mxu0 %v3618
          %4120 = vmatprep.subr.bf16.mxu0 0
          %4121 = vmatpush1.bf16.msra.mxu0 %v3619
          %4122 = vmatprep.subr.bf16.mxu0 0
          %4123 = vmatpush1.bf16.msra.mxu0 %v3620
          %4124 = vmatprep.subr.bf16.mxu0 0
          %4125 = vmatpush1.bf16.msra.mxu0 %v3621
          %4126 = vmatprep.subr.bf16.mxu0 0
          %4127 = vmatpush1.bf16.msra.mxu0 %v3622
          %4128 = vmatprep.subr.bf16.mxu0 0
          %4129 = vmatpush1.bf16.msra.mxu0 %v3623
          %4130 = vmatprep.subr.bf16.mxu0 0
          %4131 = vmatpush1.bf16.msra.mxu0 %v3624
          %4132 = vmatprep.subr.bf16.mxu0 0
          %4133 = vmatpush1.bf16.msra.mxu0 %v3625
          %4134 = vmatprep.subr.bf16.mxu0 0
          %4135 = vmatpush1.bf16.msra.mxu0 %v3626
          %4136 = vmatprep.subr.bf16.mxu0 0
          %4137 = vmatpush1.bf16.msra.mxu0 %v3627
          %4138 = vmatprep.subr.bf16.mxu0 0
          %4139 = vmatpush1.bf16.msra.mxu0 %v3628
          %4140 = vmatprep.subr.bf16.mxu0 0
          %4141 = vmatpush1.bf16.msra.mxu0 %v3629
          %4142 = vmatprep.subr.bf16.mxu0 0
          %4143 = vmatpush1.bf16.msra.mxu0 %v3630
          %4144 = vmatprep.mubr.bf16.mxu0 %v3826
          %4145 = vmatmul.mubr.bf16.gmra.mrb[0].mxu0 %v3825
          %v4146 = vpop.f32.mrb[0].mxu0
          %v4147 = vadd.f32 %v3986, %v4146
          %v4148 = vpop.f32.mrb[0].mxu0
          %v4149 = vpop.f32.mrb[0].mxu0
          %v4150 = vadd.f32 %v3989, %v4149
          %v4151 = vpop.f32.mrb[0].mxu0
          %4152 = vmatprep.mubr.bf16.mxu0 %v3830
          %4153 = vmatmul.mubr.bf16.gmra.mrb[0].mxu0 %v3829
          %v4154 = vpop.f32.mrb[0].mxu0
          %v4155 = vadd.f32 %v3994, %v4154
          %v4156 = vpop.f32.mrb[0].mxu0
          %v4157 = vpop.f32.mrb[0].mxu0
          %v4158 = vadd.f32 %v3997, %v4157
          %v4159 = vpop.f32.mrb[0].mxu0
          %4160 = vmatprep.mubr.bf16.mxu0 %v3834
          %4161 = vmatmul.mubr.bf16.gmra.mrb[0].mxu0 %v3833
          %v4162 = vpop.f32.mrb[0].mxu0
          %v4163 = vadd.f32 %v4002, %v4162
          %v4164 = vpop.f32.mrb[0].mxu0
          %v4165 = vpop.f32.mrb[0].mxu0
          %v4166 = vadd.f32 %v4005, %v4165
          %v4167 = vpop.f32.mrb[0].mxu0
          %4168 = vmatprep.mubr.bf16.mxu0 %v3838
          %4169 = vmatmul.mubr.bf16.gmra.mrb[0].mxu0 %v3837
          %v4170 = vpop.f32.mrb[0].mxu0
          %v4171 = vadd.f32 %v4010, %v4170
          %v4172 = vpop.f32.mrb[0].mxu0
          %v4173 = vpop.f32.mrb[0].mxu0
          %v4174 = vadd.f32 %v4013, %v4173
          %v4175 = vpop.f32.mrb[0].mxu0
          %4176 = vmatprep.mubr.bf16.mxu0 %v3842
          %4177 = vmatmul.mubr.bf16.gmra.mrb[0].mxu0 %v3841
          %v4178 = vpop.f32.mrb[0].mxu0
          %v4179 = vadd.f32 %v4018, %v4178
          %v4180 = vpop.f32.mrb[0].mxu0
          %v4181 = vpop.f32.mrb[0].mxu0
          %v4182 = vadd.f32 %v4021, %v4181
          %v4183 = vpop.f32.mrb[0].mxu0
          %4184 = vmatprep.mubr.bf16.mxu0 %v3846
          %4185 = vmatmul.mubr.bf16.gmra.mrb[0].mxu0 %v3845
          %v4186 = vpop.f32.mrb[0].mxu0
          %v4187 = vadd.f32 %v4026, %v4186
          %v4188 = vpop.f32.mrb[0].mxu0
          %v4189 = vpop.f32.mrb[0].mxu0
          %v4190 = vadd.f32 %v4029, %v4189
          %v4191 = vpop.f32.mrb[0].mxu0
          %4192 = vmatprep.mubr.bf16.mxu0 %v3850
          %4193 = vmatmul.mubr.bf16.gmra.mrb[0].mxu0 %v3849
          %v4194 = vpop.f32.mrb[0].mxu0
          %v4195 = vadd.f32 %v4034, %v4194
          %v4196 = vpop.f32.mrb[0].mxu0
          %v4197 = vpop.f32.mrb[0].mxu0
          %v4198 = vadd.f32 %v4037, %v4197
          %v4199 = vpop.f32.mrb[0].mxu0
          %4200 = vmatprep.mubr.bf16.mxu0 %v3854
          %4201 = vmatmul.mubr.bf16.gmra.mrb[0].mxu0 %v3853
          %v4202 = vpop.f32.mrb[0].mxu0
          %v4203 = vadd.f32 %v4042, %v4202
          %v4204 = vpop.f32.mrb[0].mxu0
          %v4205 = vpop.f32.mrb[0].mxu0
          %v4206 = vadd.f32 %v4045, %v4205
          %v4207 = vpop.f32.mrb[0].mxu0
          %4208 = vmatprep.mubr.bf16.mxu0 %v3858
          %4209 = vmatmul.mubr.bf16.gmra.mrb[0].mxu0 %v3857
          %v4210 = vpop.f32.mrb[0].mxu0
          %v4211 = vadd.f32 %v4050, %v4210
          %v4212 = vpop.f32.mrb[0].mxu0
          %v4213 = vpop.f32.mrb[0].mxu0
          %v4214 = vadd.f32 %v4053, %v4213
          %v4215 = vpop.f32.mrb[0].mxu0
          %4216 = vmatprep.mubr.bf16.mxu0 %v3862
          %4217 = vmatmul.mubr.bf16.gmra.mrb[0].mxu0 %v3861
          %v4218 = vpop.f32.mrb[0].mxu0
          %v4219 = vadd.f32 %v4058, %v4218
          %v4220 = vpop.f32.mrb[0].mxu0
          %v4221 = vpop.f32.mrb[0].mxu0
          %v4222 = vadd.f32 %v4061, %v4221
          %v4223 = vpop.f32.mrb[0].mxu0
          %4224 = vmatprep.mubr.bf16.mxu0 %v3866
          %4225 = vmatmul.mubr.bf16.gmra.mrb[0].mxu0 %v3865
          %v4226 = vpop.f32.mrb[0].mxu0
          %v4227 = vadd.f32 %v4066, %v4226
          %v4228 = vpop.f32.mrb[0].mxu0
          %v4229 = vpop.f32.mrb[0].mxu0
          %v4230 = vadd.f32 %v4069, %v4229
          %v4231 = vpop.f32.mrb[0].mxu0
          %4232 = vmatprep.mubr.bf16.mxu0 %v3870
          %4233 = vmatmul.mubr.bf16.gmra.mrb[0].mxu0 %v3869
          %v4234 = vpop.f32.mrb[0].mxu0
          %v4235 = vadd.f32 %v4074, %v4234
          %v4236 = vpop.f32.mrb[0].mxu0
          %v4237 = vpop.f32.mrb[0].mxu0
          %v4238 = vadd.f32 %v4077, %v4237
          %v4239 = vpop.f32.mrb[0].mxu0
          %4240 = vmatprep.mubr.bf16.mxu0 %v3874
          %4241 = vmatmul.mubr.bf16.gmra.mrb[0].mxu0 %v3873
          %v4242 = vpop.f32.mrb[0].mxu0
          %v4243 = vadd.f32 %v4082, %v4242
          %v4244 = vpop.f32.mrb[0].mxu0
          %v4245 = vpop.f32.mrb[0].mxu0
          %v4246 = vadd.f32 %v4085, %v4245
          %v4247 = vpop.f32.mrb[0].mxu0
          %4248 = vmatprep.mubr.bf16.mxu0 %v3878
          %4249 = vmatmul.mubr.bf16.gmra.mrb[0].mxu0 %v3877
          %v4250 = vpop.f32.mrb[0].mxu0
          %v4251 = vadd.f32 %v4090, %v4250
          %v4252 = vpop.f32.mrb[0].mxu0
          %v4253 = vpop.f32.mrb[0].mxu0
          %v4254 = vadd.f32 %v4093, %v4253
          %v4255 = vpop.f32.mrb[0].mxu0
          %4256 = vmatprep.mubr.bf16.mxu0 %v3882
          %4257 = vmatmul.mubr.bf16.gmra.mrb[0].mxu0 %v3881
          %v4258 = vpop.f32.mrb[0].mxu0
          %v4259 = vadd.f32 %v4098, %v4258
          %v4260 = vpop.f32.mrb[0].mxu0
          %v4261 = vpop.f32.mrb[0].mxu0
          %v4262 = vadd.f32 %v4101, %v4261
          %v4263 = vpop.f32.mrb[0].mxu0
          %4264 = vmatprep.mubr.bf16.mxu0 %v3886
          %4265 = vmatmul.mubr.bf16.gmra.mrb[0].mxu0 %v3885
          %v4266 = vpop.f32.mrb[0].mxu0
          %v4267 = vadd.f32 %v4106, %v4266
          %v4268 = vpop.f32.mrb[0].mxu0
          %v4269 = vpop.f32.mrb[0].mxu0
          %v4270 = vadd.f32 %v4109, %v4269
          %v4271 = vpop.f32.mrb[0].mxu0
          %4272 = vdwg.mxu0
          %s4273 = sshra.s32 %s431, 4
          %s4274 = sand.u32 %s431, 15
          %s4275 = smul.addr %s4273, 8
          %s4276 = scalar_lea.vmem [#allocation3], %s4275
          %v4277 = vld [vmem:[%s4276] sm:$0xff]
          %v4278 = vld [vmem:[%s4276 + $0x8] sm:$0xff]
          %v4279 = vld [vmem:[%s4276 + $0x10] sm:$0xff]
          %v4280 = vld [vmem:[%s4276 + $0x18] sm:$0xff]
          %v4281 = vld [vmem:[%s4276 + $0x20] sm:$0xff]
          %v4282 = vld [vmem:[%s4276 + $0x28] sm:$0xff]
          %v4283 = vld [vmem:[%s4276 + $0x30] sm:$0xff]
          %v4284 = vld [vmem:[%s4276 + $0x38] sm:$0xff]
          %v4285 = vld [vmem:[%s4276 + $0x40] sm:$0xff]
          %v4286 = vld [vmem:[%s4276 + $0x48] sm:$0xff]
          %v4287 = vld [vmem:[%s4276 + $0x50] sm:$0xff]
          %v4288 = vld [vmem:[%s4276 + $0x58] sm:$0xff]
          %v4289 = vld [vmem:[%s4276 + $0x60] sm:$0xff]
          %v4290 = vld [vmem:[%s4276 + $0x68] sm:$0xff]
          %v4291 = vld [vmem:[%s4276 + $0x70] sm:$0xff]
          %v4292 = vld [vmem:[%s4276 + $0x78] sm:$0xff]
          %v4293 = vpack.c.bf16 %v4150, %v4147
          %v4294 = vpack.c.bf16 %v4158, %v4155
          %v4295 = vpack.c.bf16 %v4166, %v4163
          %v4296 = vpack.c.bf16 %v4174, %v4171
          %v4297 = vpack.c.bf16 %v4182, %v4179
          %v4298 = vpack.c.bf16 %v4190, %v4187
          %v4299 = vpack.c.bf16 %v4198, %v4195
          %v4300 = vpack.c.bf16 %v4206, %v4203
          %v4301 = vpack.c.bf16 %v4214, %v4211
          %v4302 = vpack.c.bf16 %v4222, %v4219
          %v4303 = vpack.c.bf16 %v4230, %v4227
          %v4304 = vpack.c.bf16 %v4238, %v4235
          %v4305 = vpack.c.bf16 %v4246, %v4243
          %v4306 = vpack.c.bf16 %v4254, %v4251
          %v4307 = vpack.c.bf16 %v4262, %v4259
          %v4308 = vpack.c.bf16 %v4270, %v4267
          %v4325 = vunpack.c.l.b16 %v512
          %v4326 = vunpack.c.l.b16 %v513
          %v4327 = vunpack.c.l.b16 %v514
          %v4328 = vunpack.c.l.b16 %v515
          %v4329 = vunpack.c.l.b16 %v516
          %v4330 = vunpack.c.l.b16 %v517
          %v4331 = vunpack.c.l.b16 %v518
          %v4332 = vunpack.c.l.b16 %v519
          %v4333 = vunpack.c.l.b16 %v520
          %v4334 = vunpack.c.l.b16 %v521
          %v4335 = vunpack.c.l.b16 %v522
          %v4336 = vunpack.c.l.b16 %v523
          %v4337 = vunpack.c.l.b16 %v524
          %v4338 = vunpack.c.l.b16 %v525
          %v4339 = vunpack.c.l.b16 %v526
          %v4340 = vunpack.c.l.b16 %v527
          %v4341 = vpack.c.b16 %v4326, %v4325
          %v4342 = vpack.c.b16 %v4328, %v4327
          %v4343 = vpack.c.b16 %v4330, %v4329
          %v4344 = vpack.c.b16 %v4332, %v4331
          %v4345 = vpack.c.b16 %v4334, %v4333
          %v4346 = vpack.c.b16 %v4336, %v4335
          %v4347 = vpack.c.b16 %v4338, %v4337
          %v4348 = vpack.c.b16 %v4340, %v4339
          %4357 = vmatprep.subr.bf16.mxu0 0
          %4358 = vmatpush1.bf16.msra.mxu0 %v4341
          %4359 = vmatprep.subr.bf16.mxu0 0
          %4360 = vmatpush1.bf16.msra.mxu0 %v4342
          %4361 = vmatprep.subr.bf16.mxu0 0
          %4362 = vmatpush1.bf16.msra.mxu0 %v4343
          %4363 = vmatprep.subr.bf16.mxu0 0
          %4364 = vmatpush1.bf16.msra.mxu0 %v4344
          %4365 = vmatprep.subr.bf16.mxu0 0
          %4366 = vmatpush1.bf16.msra.mxu0 %v4345
          %4367 = vmatprep.subr.bf16.mxu0 0
          %4368 = vmatpush1.bf16.msra.mxu0 %v4346
          %4369 = vmatprep.subr.bf16.mxu0 0
          %4370 = vmatpush1.bf16.msra.mxu0 %v4347
          %4371 = vmatprep.subr.bf16.mxu0 0
          %4372 = vmatpush1.bf16.msra.mxu0 %v4348
          %4373 = vmatprep.subr.bf16.mxu0 0
          %4374 = vmatpush1.bf16.msra.mxu0 0
          %4375 = vmatprep.subr.bf16.mxu0 0
          %4376 = vmatpush1.bf16.msra.mxu0 0
          %4377 = vmatprep.subr.bf16.mxu0 0
          %4378 = vmatpush1.bf16.msra.mxu0 0
          %4379 = vmatprep.subr.bf16.mxu0 0
          %4380 = vmatpush1.bf16.msra.mxu0 0
          %4381 = vmatprep.subr.bf16.mxu0 0
          %4382 = vmatpush1.bf16.msra.mxu0 0
          %4383 = vmatprep.subr.bf16.mxu0 0
          %4384 = vmatpush1.bf16.msra.mxu0 0
          %4385 = vmatprep.subr.bf16.mxu0 0
          %4386 = vmatpush1.bf16.msra.mxu0 0
          %4387 = vmatprep.subr.bf16.mxu0 0
          %4388 = vmatpush1.bf16.msra.mxu0 0
          %4389 = vmatprep.mubr.bf16.mxu0 0
          %4390 = vmatmul.mubr.bf16.gmra.mrb[0].mxu0 %v4293
          %v4391 = vpop.f32.mrb[0].mxu0
          %v4392 = vadd.f32 0.0, %v4391
          %v4393 = vpop.f32.mrb[0].mxu0
          %v4394 = vpop.f32.mrb[0].mxu0
          %v4395 = vadd.f32 0.0, %v4394
          %v4396 = vpop.f32.mrb[0].mxu0
          %4397 = vmatprep.mubr.bf16.mxu0 0
          %4398 = vmatmul.mubr.bf16.gmra.mrb[0].mxu0 %v4294
          %v4399 = vpop.f32.mrb[0].mxu0
          %v4400 = vadd.f32 0.0, %v4399
          %v4401 = vpop.f32.mrb[0].mxu0
          %v4402 = vpop.f32.mrb[0].mxu0
          %v4403 = vadd.f32 0.0, %v4402
          %v4404 = vpop.f32.mrb[0].mxu0
          %4405 = vmatprep.mubr.bf16.mxu0 0
          %4406 = vmatmul.mubr.bf16.gmra.mrb[0].mxu0 %v4295
          %v4407 = vpop.f32.mrb[0].mxu0
          %v4408 = vadd.f32 0.0, %v4407
          %v4409 = vpop.f32.mrb[0].mxu0
          %v4410 = vpop.f32.mrb[0].mxu0
          %v4411 = vadd.f32 0.0, %v4410
          %v4412 = vpop.f32.mrb[0].mxu0
          %4413 = vmatprep.mubr.bf16.mxu0 0
          %4414 = vmatmul.mubr.bf16.gmra.mrb[0].mxu0 %v4296
          %v4415 = vpop.f32.mrb[0].mxu0
          %v4416 = vadd.f32 0.0, %v4415
          %v4417 = vpop.f32.mrb[0].mxu0
          %v4418 = vpop.f32.mrb[0].mxu0
          %v4419 = vadd.f32 0.0, %v4418
          %v4420 = vpop.f32.mrb[0].mxu0
          %4421 = vmatprep.mubr.bf16.mxu0 0
          %4422 = vmatmul.mubr.bf16.gmra.mrb[0].mxu0 %v4297
          %v4423 = vpop.f32.mrb[0].mxu0
          %v4424 = vadd.f32 0.0, %v4423
          %v4425 = vpop.f32.mrb[0].mxu0
          %v4426 = vpop.f32.mrb[0].mxu0
          %v4427 = vadd.f32 0.0, %v4426
          %v4428 = vpop.f32.mrb[0].mxu0
          %4429 = vmatprep.mubr.bf16.mxu0 0
          %4430 = vmatmul.mubr.bf16.gmra.mrb[0].mxu0 %v4298
          %v4431 = vpop.f32.mrb[0].mxu0
          %v4432 = vadd.f32 0.0, %v4431
          %v4433 = vpop.f32.mrb[0].mxu0
          %v4434 = vpop.f32.mrb[0].mxu0
          %v4435 = vadd.f32 0.0, %v4434
          %v4436 = vpop.f32.mrb[0].mxu0
          %4437 = vmatprep.mubr.bf16.mxu0 0
          %4438 = vmatmul.mubr.bf16.gmra.mrb[0].mxu0 %v4299
          %v4439 = vpop.f32.mrb[0].mxu0
          %v4440 = vadd.f32 0.0, %v4439
          %v4441 = vpop.f32.mrb[0].mxu0
          %v4442 = vpop.f32.mrb[0].mxu0
          %v4443 = vadd.f32 0.0, %v4442
          %v4444 = vpop.f32.mrb[0].mxu0
          %4445 = vmatprep.mubr.bf16.mxu0 0
          %4446 = vmatmul.mubr.bf16.gmra.mrb[0].mxu0 %v4300
          %v4447 = vpop.f32.mrb[0].mxu0
          %v4448 = vadd.f32 0.0, %v4447
          %v4449 = vpop.f32.mrb[0].mxu0
          %v4450 = vpop.f32.mrb[0].mxu0
          %v4451 = vadd.f32 0.0, %v4450
          %v4452 = vpop.f32.mrb[0].mxu0
          %4453 = vmatprep.mubr.bf16.mxu0 0
          %4454 = vmatmul.mubr.bf16.gmra.mrb[0].mxu0 %v4301
          %v4455 = vpop.f32.mrb[0].mxu0
          %v4456 = vadd.f32 0.0, %v4455
          %v4457 = vpop.f32.mrb[0].mxu0
          %v4458 = vpop.f32.mrb[0].mxu0
          %v4459 = vadd.f32 0.0, %v4458
          %v4460 = vpop.f32.mrb[0].mxu0
          %4461 = vmatprep.mubr.bf16.mxu0 0
          %4462 = vmatmul.mubr.bf16.gmra.mrb[0].mxu0 %v4302
          %v4463 = vpop.f32.mrb[0].mxu0
          %v4464 = vadd.f32 0.0, %v4463
          %v4465 = vpop.f32.mrb[0].mxu0
          %v4466 = vpop.f32.mrb[0].mxu0
          %v4467 = vadd.f32 0.0, %v4466
          %v4468 = vpop.f32.mrb[0].mxu0
          %4469 = vmatprep.mubr.bf16.mxu0 0
          %4470 = vmatmul.mubr.bf16.gmra.mrb[0].mxu0 %v4303
          %v4471 = vpop.f32.mrb[0].mxu0
          %v4472 = vadd.f32 0.0, %v4471
          %v4473 = vpop.f32.mrb[0].mxu0
          %v4474 = vpop.f32.mrb[0].mxu0
          %v4475 = vadd.f32 0.0, %v4474
          %v4476 = vpop.f32.mrb[0].mxu0
          %4477 = vmatprep.mubr.bf16.mxu0 0
          %4478 = vmatmul.mubr.bf16.gmra.mrb[0].mxu0 %v4304
          %v4479 = vpop.f32.mrb[0].mxu0
          %v4480 = vadd.f32 0.0, %v4479
          %v4481 = vpop.f32.mrb[0].mxu0
          %v4482 = vpop.f32.mrb[0].mxu0
          %v4483 = vadd.f32 0.0, %v4482
          %v4484 = vpop.f32.mrb[0].mxu0
          %4485 = vmatprep.mubr.bf16.mxu0 0
          %4486 = vmatmul.mubr.bf16.gmra.mrb[0].mxu0 %v4305
          %v4487 = vpop.f32.mrb[0].mxu0
          %v4488 = vadd.f32 0.0, %v4487
          %v4489 = vpop.f32.mrb[0].mxu0
          %v4490 = vpop.f32.mrb[0].mxu0
          %v4491 = vadd.f32 0.0, %v4490
          %v4492 = vpop.f32.mrb[0].mxu0
          %4493 = vmatprep.mubr.bf16.mxu0 0
          %4494 = vmatmul.mubr.bf16.gmra.mrb[0].mxu0 %v4306
          %v4495 = vpop.f32.mrb[0].mxu0
          %v4496 = vadd.f32 0.0, %v4495
          %v4497 = vpop.f32.mrb[0].mxu0
          %v4498 = vpop.f32.mrb[0].mxu0
          %v4499 = vadd.f32 0.0, %v4498
          %v4500 = vpop.f32.mrb[0].mxu0
          %4501 = vmatprep.mubr.bf16.mxu0 0
          %4502 = vmatmul.mubr.bf16.gmra.mrb[0].mxu0 %v4307
          %v4503 = vpop.f32.mrb[0].mxu0
          %v4504 = vadd.f32 0.0, %v4503
          %v4505 = vpop.f32.mrb[0].mxu0
          %v4506 = vpop.f32.mrb[0].mxu0
          %v4507 = vadd.f32 0.0, %v4506
          %v4508 = vpop.f32.mrb[0].mxu0
          %4509 = vmatprep.mubr.bf16.mxu0 0
          %4510 = vmatmul.mubr.bf16.gmra.mrb[0].mxu0 %v4308
          %v4511 = vpop.f32.mrb[0].mxu0
          %v4512 = vadd.f32 0.0, %v4511
          %v4513 = vpop.f32.mrb[0].mxu0
          %v4514 = vpop.f32.mrb[0].mxu0
          %v4515 = vadd.f32 0.0, %v4514
          %v4516 = vpop.f32.mrb[0].mxu0
          %4517 = vdwg.mxu0
          %v4534 = vunpack.c.l.b16 %v496
          %v4535 = vunpack.c.l.b16 %v497
          %v4536 = vunpack.c.l.b16 %v498
          %v4537 = vunpack.c.l.b16 %v499
          %v4538 = vunpack.c.l.b16 %v500
          %v4539 = vunpack.c.l.b16 %v501
          %v4540 = vunpack.c.l.b16 %v502
          %v4541 = vunpack.c.l.b16 %v503
          %v4542 = vunpack.c.l.b16 %v504
          %v4543 = vunpack.c.l.b16 %v505
          %v4544 = vunpack.c.l.b16 %v506
          %v4545 = vunpack.c.l.b16 %v507
          %v4546 = vunpack.c.l.b16 %v508
          %v4547 = vunpack.c.l.b16 %v509
          %v4548 = vunpack.c.l.b16 %v510
          %v4549 = vunpack.c.l.b16 %v511
          %v4550 = vpack.c.b16 %v4535, %v4534
          %v4551 = vpack.c.b16 %v4537, %v4536
          %v4552 = vpack.c.b16 %v4539, %v4538
          %v4553 = vpack.c.b16 %v4541, %v4540
          %v4554 = vpack.c.b16 %v4543, %v4542
          %v4555 = vpack.c.b16 %v4545, %v4544
          %v4556 = vpack.c.b16 %v4547, %v4546
          %v4557 = vpack.c.b16 %v4549, %v4548
          %4566 = vmatprep.subr.bf16.mxu0 0
          %4567 = vmatpush1.bf16.msra.mxu0 %v4550
          %4568 = vmatprep.subr.bf16.mxu0 0
          %4569 = vmatpush1.bf16.msra.mxu0 %v4551
          %4570 = vmatprep.subr.bf16.mxu0 0
          %4571 = vmatpush1.bf16.msra.mxu0 %v4552
          %4572 = vmatprep.subr.bf16.mxu0 0
          %4573 = vmatpush1.bf16.msra.mxu0 %v4553
          %4574 = vmatprep.subr.bf16.mxu0 0
          %4575 = vmatpush1.bf16.msra.mxu0 %v4554
          %4576 = vmatprep.subr.bf16.mxu0 0
          %4577 = vmatpush1.bf16.msra.mxu0 %v4555
          %4578 = vmatprep.subr.bf16.mxu0 0
          %4579 = vmatpush1.bf16.msra.mxu0 %v4556
          %4580 = vmatprep.subr.bf16.mxu0 0
          %4581 = vmatpush1.bf16.msra.mxu0 %v4557
          %4582 = vmatprep.subr.bf16.mxu0 0
          %4583 = vmatpush1.bf16.msra.mxu0 0
          %4584 = vmatprep.subr.bf16.mxu0 0
          %4585 = vmatpush1.bf16.msra.mxu0 0
          %4586 = vmatprep.subr.bf16.mxu0 0
          %4587 = vmatpush1.bf16.msra.mxu0 0
          %4588 = vmatprep.subr.bf16.mxu0 0
          %4589 = vmatpush1.bf16.msra.mxu0 0
          %4590 = vmatprep.subr.bf16.mxu0 0
          %4591 = vmatpush1.bf16.msra.mxu0 0
          %4592 = vmatprep.subr.bf16.mxu0 0
          %4593 = vmatpush1.bf16.msra.mxu0 0
          %4594 = vmatprep.subr.bf16.mxu0 0
          %4595 = vmatpush1.bf16.msra.mxu0 0
          %4596 = vmatprep.subr.bf16.mxu0 0
          %4597 = vmatpush1.bf16.msra.mxu0 0
          %4598 = vmatprep.mubr.bf16.mxu0 0
          %4599 = vmatmul.mubr.bf16.gmra.mrb[0].mxu0 %v4277
          %v4600 = vpop.f32.mrb[0].mxu0
          %v4601 = vadd.f32 %v4392, %v4600
          %v4602 = vpop.f32.mrb[0].mxu0
          %v4603 = vpop.f32.mrb[0].mxu0
          %v4604 = vadd.f32 %v4395, %v4603
          %v4605 = vpop.f32.mrb[0].mxu0
          %4606 = vmatprep.mubr.bf16.mxu0 0
          %4607 = vmatmul.mubr.bf16.gmra.mrb[0].mxu0 %v4278
          %v4608 = vpop.f32.mrb[0].mxu0
          %v4609 = vadd.f32 %v4400, %v4608
          %v4610 = vpop.f32.mrb[0].mxu0
          %v4611 = vpop.f32.mrb[0].mxu0
          %v4612 = vadd.f32 %v4403, %v4611
          %v4613 = vpop.f32.mrb[0].mxu0
          %4614 = vmatprep.mubr.bf16.mxu0 0
          %4615 = vmatmul.mubr.bf16.gmra.mrb[0].mxu0 %v4279
          %v4616 = vpop.f32.mrb[0].mxu0
          %v4617 = vadd.f32 %v4408, %v4616
          %v4618 = vpop.f32.mrb[0].mxu0
          %v4619 = vpop.f32.mrb[0].mxu0
          %v4620 = vadd.f32 %v4411, %v4619
          %v4621 = vpop.f32.mrb[0].mxu0
          %4622 = vmatprep.mubr.bf16.mxu0 0
          %4623 = vmatmul.mubr.bf16.gmra.mrb[0].mxu0 %v4280
          %v4624 = vpop.f32.mrb[0].mxu0
          %v4625 = vadd.f32 %v4416, %v4624
          %v4626 = vpop.f32.mrb[0].mxu0
          %v4627 = vpop.f32.mrb[0].mxu0
          %v4628 = vadd.f32 %v4419, %v4627
          %v4629 = vpop.f32.mrb[0].mxu0
          %4630 = vmatprep.mubr.bf16.mxu0 0
          %4631 = vmatmul.mubr.bf16.gmra.mrb[0].mxu0 %v4281
          %v4632 = vpop.f32.mrb[0].mxu0
          %v4633 = vadd.f32 %v4424, %v4632
          %v4634 = vpop.f32.mrb[0].mxu0
          %v4635 = vpop.f32.mrb[0].mxu0
          %v4636 = vadd.f32 %v4427, %v4635
          %v4637 = vpop.f32.mrb[0].mxu0
          %4638 = vmatprep.mubr.bf16.mxu0 0
          %4639 = vmatmul.mubr.bf16.gmra.mrb[0].mxu0 %v4282
          %v4640 = vpop.f32.mrb[0].mxu0
          %v4641 = vadd.f32 %v4432, %v4640
          %v4642 = vpop.f32.mrb[0].mxu0
          %v4643 = vpop.f32.mrb[0].mxu0
          %v4644 = vadd.f32 %v4435, %v4643
          %v4645 = vpop.f32.mrb[0].mxu0
          %4646 = vmatprep.mubr.bf16.mxu0 0
          %4647 = vmatmul.mubr.bf16.gmra.mrb[0].mxu0 %v4283
          %v4648 = vpop.f32.mrb[0].mxu0
          %v4649 = vadd.f32 %v4440, %v4648
          %v4650 = vpop.f32.mrb[0].mxu0
          %v4651 = vpop.f32.mrb[0].mxu0
          %v4652 = vadd.f32 %v4443, %v4651
          %v4653 = vpop.f32.mrb[0].mxu0
          %4654 = vmatprep.mubr.bf16.mxu0 0
          %4655 = vmatmul.mubr.bf16.gmra.mrb[0].mxu0 %v4284
          %v4656 = vpop.f32.mrb[0].mxu0
          %v4657 = vadd.f32 %v4448, %v4656
          %v4658 = vpop.f32.mrb[0].mxu0
          %v4659 = vpop.f32.mrb[0].mxu0
          %v4660 = vadd.f32 %v4451, %v4659
          %v4661 = vpop.f32.mrb[0].mxu0
          %4662 = vmatprep.mubr.bf16.mxu0 0
          %4663 = vmatmul.mubr.bf16.gmra.mrb[0].mxu0 %v4285
          %v4664 = vpop.f32.mrb[0].mxu0
          %v4665 = vadd.f32 %v4456, %v4664
          %v4666 = vpop.f32.mrb[0].mxu0
          %v4667 = vpop.f32.mrb[0].mxu0
          %v4668 = vadd.f32 %v4459, %v4667
          %v4669 = vpop.f32.mrb[0].mxu0
          %4670 = vmatprep.mubr.bf16.mxu0 0
          %4671 = vmatmul.mubr.bf16.gmra.mrb[0].mxu0 %v4286
          %v4672 = vpop.f32.mrb[0].mxu0
          %v4673 = vadd.f32 %v4464, %v4672
          %v4674 = vpop.f32.mrb[0].mxu0
          %v4675 = vpop.f32.mrb[0].mxu0
          %v4676 = vadd.f32 %v4467, %v4675
          %v4677 = vpop.f32.mrb[0].mxu0
          %4678 = vmatprep.mubr.bf16.mxu0 0
          %4679 = vmatmul.mubr.bf16.gmra.mrb[0].mxu0 %v4287
          %v4680 = vpop.f32.mrb[0].mxu0
          %v4681 = vadd.f32 %v4472, %v4680
          %v4682 = vpop.f32.mrb[0].mxu0
          %v4683 = vpop.f32.mrb[0].mxu0
          %v4684 = vadd.f32 %v4475, %v4683
          %v4685 = vpop.f32.mrb[0].mxu0
          %4686 = vmatprep.mubr.bf16.mxu0 0
          %4687 = vmatmul.mubr.bf16.gmra.mrb[0].mxu0 %v4288
          %v4688 = vpop.f32.mrb[0].mxu0
          %v4689 = vadd.f32 %v4480, %v4688
          %v4690 = vpop.f32.mrb[0].mxu0
          %v4691 = vpop.f32.mrb[0].mxu0
          %v4692 = vadd.f32 %v4483, %v4691
          %v4693 = vpop.f32.mrb[0].mxu0
          %4694 = vmatprep.mubr.bf16.mxu0 0
          %4695 = vmatmul.mubr.bf16.gmra.mrb[0].mxu0 %v4289
          %v4696 = vpop.f32.mrb[0].mxu0
          %v4697 = vadd.f32 %v4488, %v4696
          %v4698 = vpop.f32.mrb[0].mxu0
          %v4699 = vpop.f32.mrb[0].mxu0
          %v4700 = vadd.f32 %v4491, %v4699
          %v4701 = vpop.f32.mrb[0].mxu0
          %4702 = vmatprep.mubr.bf16.mxu0 0
          %4703 = vmatmul.mubr.bf16.gmra.mrb[0].mxu0 %v4290
          %v4704 = vpop.f32.mrb[0].mxu0
          %v4705 = vadd.f32 %v4496, %v4704
          %v4706 = vpop.f32.mrb[0].mxu0
          %v4707 = vpop.f32.mrb[0].mxu0
          %v4708 = vadd.f32 %v4499, %v4707
          %v4709 = vpop.f32.mrb[0].mxu0
          %4710 = vmatprep.mubr.bf16.mxu0 0
          %4711 = vmatmul.mubr.bf16.gmra.mrb[0].mxu0 %v4291
          %v4712 = vpop.f32.mrb[0].mxu0
          %v4713 = vadd.f32 %v4504, %v4712
          %v4714 = vpop.f32.mrb[0].mxu0
          %v4715 = vpop.f32.mrb[0].mxu0
          %v4716 = vadd.f32 %v4507, %v4715
          %v4717 = vpop.f32.mrb[0].mxu0
          %4718 = vmatprep.mubr.bf16.mxu0 0
          %4719 = vmatmul.mubr.bf16.gmra.mrb[0].mxu0 %v4292
          %v4720 = vpop.f32.mrb[0].mxu0
          %v4721 = vadd.f32 %v4512, %v4720
          %v4722 = vpop.f32.mrb[0].mxu0
          %v4723 = vpop.f32.mrb[0].mxu0
          %v4724 = vadd.f32 %v4515, %v4723
          %v4725 = vpop.f32.mrb[0].mxu0
          %4726 = vdwg.mxu0
          %v4728 = vlaneseq
          %v4729 = vshrl.u32 %v4728, 7
          %v4730 = vsub.s32 0, %v4729
          %v4731 = vrot.slane %v528, %v4730
          %v4733 = vadd.f32 %v4601, %v4731
          %v4734 = vadd.f32 %v4604, %v4731
          %v4735 = vadd.f32 %v4609, %v4731
          %v4736 = vadd.f32 %v4612, %v4731
          %v4737 = vadd.f32 %v4617, %v4731
          %v4738 = vadd.f32 %v4620, %v4731
          %v4739 = vadd.f32 %v4625, %v4731
          %v4740 = vadd.f32 %v4628, %v4731
          %v4741 = vadd.f32 %v4633, %v4731
          %v4742 = vadd.f32 %v4636, %v4731
          %v4743 = vadd.f32 %v4641, %v4731
          %v4744 = vadd.f32 %v4644, %v4731
          %v4745 = vadd.f32 %v4649, %v4731
          %v4746 = vadd.f32 %v4652, %v4731
          %v4747 = vadd.f32 %v4657, %v4731
          %v4748 = vadd.f32 %v4660, %v4731
          %v4749 = vadd.f32 %v4665, %v4731
          %v4750 = vadd.f32 %v4668, %v4731
          %v4751 = vadd.f32 %v4673, %v4731
          %v4752 = vadd.f32 %v4676, %v4731
          %v4753 = vadd.f32 %v4681, %v4731
          %v4754 = vadd.f32 %v4684, %v4731
          %v4755 = vadd.f32 %v4689, %v4731
          %v4756 = vadd.f32 %v4692, %v4731
          %v4757 = vadd.f32 %v4697, %v4731
          %v4758 = vadd.f32 %v4700, %v4731
          %v4759 = vadd.f32 %v4705, %v4731
          %v4760 = vadd.f32 %v4708, %v4731
          %v4761 = vadd.f32 %v4713, %v4731
          %v4762 = vadd.f32 %v4716, %v4731
          %v4763 = vadd.f32 %v4721, %v4731
          %v4764 = vadd.f32 %v4724, %v4731
          %4765 = vst [vmem:[%s423] sm:$0xff] %v4733
          %4766 = vst [vmem:[%s423 + $0x8] sm:$0xff] %v4734
          %4767 = vst [vmem:[%s423 + $0x10] sm:$0xff] %v4735
          %4768 = vst [vmem:[%s423 + $0x18] sm:$0xff] %v4736
          %4769 = vst [vmem:[%s423 + $0x20] sm:$0xff] %v4737
          %4770 = vst [vmem:[%s423 + $0x28] sm:$0xff] %v4738
          %4771 = vst [vmem:[%s423 + $0x30] sm:$0xff] %v4739
          %4772 = vst [vmem:[%s423 + $0x38] sm:$0xff] %v4740
          %4773 = vst [vmem:[%s423 + $0x40] sm:$0xff] %v4741
          %4774 = vst [vmem:[%s423 + $0x48] sm:$0xff] %v4742
          %4775 = vst [vmem:[%s423 + $0x50] sm:$0xff] %v4743
          %4776 = vst [vmem:[%s423 + $0x58] sm:$0xff] %v4744
          %4777 = vst [vmem:[%s423 + $0x60] sm:$0xff] %v4745
          %4778 = vst [vmem:[%s423 + $0x68] sm:$0xff] %v4746
          %4779 = vst [vmem:[%s423 + $0x70] sm:$0xff] %v4747
          %4780 = vst [vmem:[%s423 + $0x78] sm:$0xff] %v4748
          %4781 = vst [vmem:[%s423 + $0x80] sm:$0xff] %v4749
          %4782 = vst [vmem:[%s423 + $0x88] sm:$0xff] %v4750
          %4783 = vst [vmem:[%s423 + $0x90] sm:$0xff] %v4751
          %4784 = vst [vmem:[%s423 + $0x98] sm:$0xff] %v4752
          %4785 = vst [vmem:[%s423 + $0xa0] sm:$0xff] %v4753
          %4786 = vst [vmem:[%s423 + $0xa8] sm:$0xff] %v4754
          %4787 = vst [vmem:[%s423 + $0xb0] sm:$0xff] %v4755
          %4788 = vst [vmem:[%s423 + $0xb8] sm:$0xff] %v4756
          %4789 = vst [vmem:[%s423 + $0xc0] sm:$0xff] %v4757
          %4790 = vst [vmem:[%s423 + $0xc8] sm:$0xff] %v4758
          %4791 = vst [vmem:[%s423 + $0xd0] sm:$0xff] %v4759
          %4792 = vst [vmem:[%s423 + $0xd8] sm:$0xff] %v4760
          %4793 = vst [vmem:[%s423 + $0xe0] sm:$0xff] %v4761
          %4794 = vst [vmem:[%s423 + $0xe8] sm:$0xff] %v4762
          %4795 = vst [vmem:[%s423 + $0xf0] sm:$0xff] %v4763
          %4796 = vst [vmem:[%s423 + $0xf8] sm:$0xff] %v4764
        $region76: #{tpu_custom_call.1} parent=43 // pred_fallthru
          _
        %s4797 = sand.u32 %s197, 1
        %s4798 = scalar_lea.sflag [#allocation6], %s4797
        %s4799 = sand.u32 %s197, 1
        %s4800 = smul.addr %s4799, 256
        %s4801 = scalar_lea.vmem [#allocation12], %s4800
        // Predicated region
        $region77: #{tpu_custom_call.1} parent=43 // pred_check
          %p4802 = pneg %p207
        $region78: #{tpu_custom_call.1} parent=43 // pred_check_branch
          %4804 = sbr.rel (%p4802) target = $region80
        $region79: #{tpu_custom_call.1} parent=43 // pred_region
          %s4805 = smul.u32 32, %s29
          %s4807 = ssub.s32 4096, 4096
          %4808 = vsyncadd %s4798, %s4807
          %s4809 = smul.addr %s4805, 128
          %s4810 = scalar_lea.hbm %s6, %s4809
          %s4811 = sshll.u32 %s4801, 4
          %s4812 = int_to_ptr.vmem [resolvable:$true] %s4811
          %4817 = dma.vmem_to_hbm [thread:$0]  %s4812, 4096, %s4810, %s4798, 128, 128, 8
        $region80: #{tpu_custom_call.1} parent=43 // pred_fallthru
          _
      $region44: #{tpu_custom_call.1} parent=5 // pred_fallthru
        _
      %p4818 = scmp.le.s32.totalorder 2, %s19
      // Predicated region
      $region81: #{tpu_custom_call.1} parent=5 // pred_check
        %p4819 = pneg %p4818
      $region82: #{tpu_custom_call.1} parent=5 // pred_check_branch
        %4821 = sbr.rel (%p4819) target = $region84
      $region83: #{tpu_custom_call.1} parent=5 // pred_region
        %s4822 = ssub.s32 %s19, 2
        // Predicated region
        $region85: #{tpu_custom_call.1} parent=83 // pred_check
          %p4823 = pneg %p213
        $region86: #{tpu_custom_call.1} parent=83 // pred_check_branch
          %4825 = sbr.rel (%p4823) target = $region88
        $region87: #{tpu_custom_call.1} parent=83 // pred_region
          %s4826 = sand.u32 %s198, 1
          %s4827 = scalar_lea.sflag [#allocation6], %s4826
          %s4828 = sand.u32 %s198, 1
          %s4829 = smul.addr %s4828, 256
          %s4830 = scalar_lea.vmem [#allocation12], %s4829
          %4831 = dma.done %s4827, 4096
        $region88: #{tpu_custom_call.1} parent=83 // pred_fallthru
          _
      $region84: #{tpu_custom_call.1} parent=5 // pred_fallthru
        _
    $region6: #{tpu_custom_call.1} parent=1 // loop_footer
      %s23 = sadd.s32 1, %s19
    $region7: #{tpu_custom_call.1} parent=1 // loop_footer_branch
      %18 = sbr.rel target = $region3
    $region8: #{tpu_custom_call.1} parent=1 // loop_exit
      _
    %4832 = vsyncpa [#allocation5], 1
    %s4833 = scalar_lea.sflag [#allocation5], 1
    %4834 = vsyncpa %s4833, 1
    %4835 = vsyncpa [#allocation8], 1
    %4836 = vsyncpa [#allocation6], 1
    %s4837 = scalar_lea.sflag [#allocation6], 1
    %4838 = vsyncpa %s4837, 1

</llo_original>
